<compile_context>
chip_gen: v7x
topology: tpu7x:2x2x1
jax: 0.10.0
libtpu: 0.0.40
codegen_flags: <defaults>
</compile_context>

<pallas_src>
from functools import partial

import jax
import jax.numpy as jnp
from jax.experimental import pallas as pl
from jax.experimental.pallas import tpu as pltpu

HIDDEN = 256
INTER = HIDDEN // 2            # 128
CAT = INTER * 4                # 512
MAX_BLOCK_B = 256

TRUE_WIDTHS = (167, 441, 881, 300)     # macc, erg, pub, mol2vec
PAD_WIDTHS = (256, 512, 896, 384)      # 128-aligned padded fan-ins
PAD_OFFSETS = (0, 256, 768, 1664)      # column offsets into the packed input
TOTAL_IN = sum(PAD_WIDTHS)             # 2048


# ---------------------------------------------------------------------------
# Mish: y * tanh(softplus(y)) = y * (t^2 + 2t) / (t^2 + 2t + 2),  t = e^y.
# The min-clamp makes the ratio saturate to ~1 for large y, so no select is
# needed.  f32 path: approx EUP reciprocal (v5e-friendly).  bf16 path
# (v6e/v7x): native bf16 VPU/EUP elementwise.
# ---------------------------------------------------------------------------
def _mish(y_f32, dtype):
    if jnp.dtype(dtype) == jnp.dtype(jnp.float32):
        y = y_f32
        t = jnp.exp(jnp.minimum(y, 20.0))
        num = t * (t + 2.0)
        return y * num * pl.reciprocal(num + 2.0, approx=True)
    y = y_f32.astype(dtype)
    t = jnp.exp(jnp.minimum(y, 20.0))
    num = t * (t + 2.0)
    return y * (num / (num + 2.0))


# ---------------------------------------------------------------------------
# Fused kernel body.
#   x_ref  : (block_b, 2048) bf16  -- [macc|erg|pub|mol2vec], zero padded
#   w1_ref : (2048, 256)     bf16  -- four l1 weights concatenated along K
#   b1_ref : (1, 1024)       f32   -- four l1 biases, lane-packed
#   w2_ref : (4, 256, 128)   bf16  -- four l2 weights, stacked by branch
#   b2_ref : (1, 512)        f32
#   w3_ref : (4, 128, 256)   bf16  -- final 512x256 weight, per-branch K slices
#   b3_ref : (1, 256)        f32
#   o_ref  : (block_b, 256)  f32
# ---------------------------------------------------------------------------
def _fused_finger_encoder_kernel(x_ref, w1_ref, b1_ref, w2_ref, b2_ref,
                                 w3_ref, b3_ref, o_ref, *, mish_dtype):
    blk = x_ref.shape[0]
    acc = jnp.zeros((blk, HIDDEN), jnp.float32)

    for br in range(4):                      # unrolled; all slices are static
        off, width = PAD_OFFSETS[br], PAD_WIDTHS[br]
        x = x_ref[:, off:off + width]                         # bf16, 128-aligned
        y1 = jnp.dot(x, w1_ref[off:off + width, :],
                     preferred_element_type=jnp.float32)
        y1 = y1 + b1_ref[:, br * HIDDEN:(br + 1) * HIDDEN]
        h1 = _mish(y1, mish_dtype).astype(jnp.bfloat16)

        y2 = jnp.dot(h1, w2_ref[br], preferred_element_type=jnp.float32)
        y2 = y2 + b2_ref[:, br * INTER:(br + 1) * INTER]
        h2 = _mish(y2, mish_dtype).astype(jnp.bfloat16)

        # Fold concat + final 512x256 linear: accumulate this branch's K=128
        # slice of the output GEMM directly (no [B,512] scratch round-trip).
        acc = acc + jnp.dot(h2, w3_ref[br], preferred_element_type=jnp.float32)

    # TODO(synk): attention.MultiAttention([3, 5]) source was not provided;
    # treated as identity pass-through rather than faking its math.
    out = _mish(acc + b3_ref[...], mish_dtype)
    o_ref[...] = out.astype(o_ref.dtype)


# ---------------------------------------------------------------------------
# Parameters: xavier-normal weights over the TRUE fan-in, zero bias; weight
# rows zero-padded to the aligned fan-in, stored bf16, packed as above.
# ---------------------------------------------------------------------------
def make_finger_encoder_params(key):
    ks = jax.random.split(key, 9)

    def xavier(k, fan_in, fan_out, pad_in=None):
        std = (2.0 / (fan_in + fan_out)) ** 0.5          # xavier_normal_, gain=1
        w = std * jax.random.normal(k, (fan_in, fan_out), jnp.float32)
        if pad_in is not None:
            w = jnp.pad(w, ((0, pad_in - fan_in), (0, 0)))
        return w.astype(jnp.bfloat16)

    w1 = jnp.concatenate(
        [xavier(ks[i], TRUE_WIDTHS[i], HIDDEN, PAD_WIDTHS[i]) for i in range(4)],
        axis=0)                                                    # (2048, 256)
    b1 = jnp.zeros((1, 4 * HIDDEN), jnp.float32)
    w2 = jnp.stack([xavier(ks[4 + i], HIDDEN, INTER) for i in range(4)])  # (4,256,128)
    b2 = jnp.zeros((1, 4 * INTER), jnp.float32)
    w3 = xavier(ks[8], CAT, HIDDEN).reshape(4, INTER, HIDDEN)             # (4,128,256)
    b3 = jnp.zeros((1, HIDDEN), jnp.float32)
    return {"w1": w1, "b1": b1, "w2": w2, "b2": b2, "w3": w3, "b3": b3}


# ---------------------------------------------------------------------------
# Batch tiling + chip-dependent Mish dtype.
# ---------------------------------------------------------------------------
def _round_up(x, m):
    return ((x + m - 1) // m) * m


def _pick_batch_tiling(batch):
    # bf16 activations -> minimum 16-row sublane tile (never 8-row blocks).
    padded = _round_up(max(batch, 16), 16)
    if padded >= 2 * MAX_BLOCK_B:
        block = MAX_BLOCK_B                    # fills the 256-wide v6e/v7x MXU
    elif padded >= 32:
        block = _round_up(padded // 2, 16)     # keep >=2 grid steps (v7x 2 TCs)
    else:
        block = padded
    return block, _round_up(padded, block)


def _mish_compute_dtype():
    try:
        kind = jax.devices()[0].device_kind.lower()
    except Exception:
        return jnp.float32
    if "v6" in kind or "v7" in kind:
        return jnp.bfloat16        # bf16 VPU/EUP available
    return jnp.float32             # v5e & older: no bf16 VPU/EUP


# ---------------------------------------------------------------------------
# Forward: bf16-pad + pack inputs once, launch the single fused kernel,
# slice the batch back.
# ---------------------------------------------------------------------------
@jax.jit
def finger_encoder_forward(params, macc_x, erg_x, pub_x, mol2vec_x):
    batch = macc_x.shape[0]
    block_b, padded_b = _pick_batch_tiling(batch)

    def pad(x, width):
        x = x.astype(jnp.bfloat16)             # bf16 before padding: half the HBM bytes
        return jnp.pad(x, ((0, padded_b - x.shape[0]), (0, width - x.shape[1])))

    x_cat = jnp.concatenate(
        [pad(x, w) for x, w in zip((macc_x, erg_x, pub_x, mol2vec_x), PAD_WIDTHS)],
        axis=-1)                                              # (padded_b, 2048) bf16

    kernel = partial(_fused_finger_encoder_kernel,
                     mish_dtype=_mish_compute_dtype())

    def const_spec(shape):
        # Whole-array block, constant index_map -> stays resident across tiles.
        return pl.BlockSpec(shape, lambda i, _n=len(shape): (0,) * _n)

    out = pl.pallas_call(
        kernel,
        out_shape=jax.ShapeDtypeStruct((padded_b, HIDDEN), jnp.float32),
        grid=(padded_b // block_b,),
        in_specs=[
            pl.BlockSpec((block_b, TOTAL_IN), lambda i: (i, 0)),
            const_spec(params["w1"].shape),
            const_spec(params["b1"].shape),
            const_spec(params["w2"].shape),
            const_spec(params["b2"].shape),
            const_spec(params["w3"].shape),
            const_spec(params["b3"].shape),
        ],
        out_specs=pl.BlockSpec((block_b, HIDDEN), lambda i: (i, 0)),
        compiler_params=pltpu.CompilerParams(
            dimension_semantics=("parallel",),
            vmem_limit_bytes=32 * 1024 * 1024,
        ),
    )(x_cat, params["w1"], params["b1"], params["w2"], params["b2"],
      params["w3"], params["b3"])

    return out[:batch]


if __name__ == "__main__":
    key = jax.random.PRNGKey(0)
    pkey, k1, k2, k3, k4 = jax.random.split(key, 5)

    params = make_finger_encoder_params(pkey)

    batch = 8
    macc_x = jax.random.normal(k1, (batch, 167), dtype=jnp.float32)
    erg_x = jax.random.normal(k2, (batch, 441), dtype=jnp.float32)
    pub_x = jax.random.normal(k3, (batch, 881), dtype=jnp.float32)
    mol2vec_x = jax.random.normal(k4, (batch, 300), dtype=jnp.float32)

    out = finger_encoder_forward(params, macc_x, erg_x, pub_x, mol2vec_x)
    out = jax.block_until_ready(out)
    assert out.shape == (batch, 256), out.shape
    assert bool(jnp.all(jnp.isfinite(out)))
    print("KERNEL_OK")
</pallas_src>

<mosaic_0001>
module attributes {stable_mosaic.version = 11 : i64} {
  func.func @_fused_finger_encoder_kernel(%arg0: i32, %arg1: memref<16x2048xbf16, #tpu.memory_space<vmem>>, %arg2: memref<2048x256xbf16, #tpu.memory_space<vmem>>, %arg3: memref<1x1024xf32, #tpu.memory_space<vmem>>, %arg4: memref<4x256x128xbf16, #tpu.memory_space<vmem>>, %arg5: memref<1x512xf32, #tpu.memory_space<vmem>>, %arg6: memref<4x128x256xbf16, #tpu.memory_space<vmem>>, %arg7: memref<1x256xf32, #tpu.memory_space<vmem>>, %arg8: memref<16x256xf32, #tpu.memory_space<vmem>>) attributes {dimension_semantics = [#tpu.dimension_semantics<parallel>], iteration_bounds = array<i64: 1>, scalar_prefetch = 0 : i64, scratch_operands = 0 : i64, tpu.core_type = #tpu.core_type<tc>, window_params = [{transform_indices = @transform_0, window_bounds = array<i64: 16, 2048>}, {pipeline_mode = #tpu.pipeline_mode<synchronous>, transform_indices = @transform_1, window_bounds = array<i64: 2048, 256>}, {pipeline_mode = #tpu.pipeline_mode<synchronous>, transform_indices = @transform_2, window_bounds = array<i64: 1, 1024>}, {pipeline_mode = #tpu.pipeline_mode<synchronous>, transform_indices = @transform_3, window_bounds = array<i64: 4, 256, 128>}, {pipeline_mode = #tpu.pipeline_mode<synchronous>, transform_indices = @transform_4, window_bounds = array<i64: 1, 512>}, {pipeline_mode = #tpu.pipeline_mode<synchronous>, transform_indices = @transform_5, window_bounds = array<i64: 4, 128, 256>}, {pipeline_mode = #tpu.pipeline_mode<synchronous>, transform_indices = @transform_6, window_bounds = array<i64: 1, 256>}, {transform_indices = @transform_7, window_bounds = array<i64: 16, 256>}]} {
    %cst = arith.constant 0.000000e+00 : f32
    %0 = vector.broadcast %cst : f32 to vector<16x256xf32>
    %c0 = arith.constant 0 : index
    %c0_0 = arith.constant 0 : index
    %1 = vector.load %arg1[%c0, %c0_0] : memref<16x2048xbf16, #tpu.memory_space<vmem>>, vector<16x256xbf16>
    %c0_1 = arith.constant 0 : index
    %c0_2 = arith.constant 0 : index
    %2 = vector.load %arg2[%c0_1, %c0_2] : memref<2048x256xbf16, #tpu.memory_space<vmem>>, vector<256x256xbf16>
    %cst_3 = arith.constant dense<0.000000e+00> : vector<16x256xf32>
    %3 = tpu.matmul %1, %2, %cst_3 {dimension_numbers = #tpu.dot_dimension_numbers<[1], [0], [0], [1], [0, 0, 1, 1], [], []>} : vector<16x256xbf16>, vector<256x256xbf16>, vector<16x256xf32> -> vector<16x256xf32>
    %c0_4 = arith.constant 0 : index
    %c0_5 = arith.constant 0 : index
    %4 = vector.load %arg3[%c0_4, %c0_5] : memref<1x1024xf32, #tpu.memory_space<vmem>>, vector<1x256xf32>
    %5 = vector.broadcast %4 : vector<1x256xf32> to vector<16x256xf32>
    %6 = arith.addf %3, %5 : vector<16x256xf32>
    %cst_6 = arith.constant 2.000000e+01 : f32
    %7 = vector.broadcast %cst_6 : f32 to vector<16x256xf32>
    %8 = arith.minimumf %6, %7 : vector<16x256xf32>
    %9 = math.exp %8 : vector<16x256xf32>
    %cst_7 = arith.constant 2.000000e+00 : f32
    %10 = vector.broadcast %cst_7 : f32 to vector<16x256xf32>
    %11 = arith.addf %9, %10 : vector<16x256xf32>
    %12 = arith.mulf %9, %11 : vector<16x256xf32>
    %13 = arith.mulf %6, %12 : vector<16x256xf32>
    %cst_8 = arith.constant 2.000000e+00 : f32
    %14 = vector.broadcast %cst_8 : f32 to vector<16x256xf32>
    %15 = arith.addf %12, %14 : vector<16x256xf32>
    %16 = tpu.reciprocal %15 {approx = true} : vector<16x256xf32> -> vector<16x256xf32>
    %17 = arith.mulf %13, %16 : vector<16x256xf32>
    %18 = arith.truncf %17 : vector<16x256xf32> to vector<16x256xbf16>
    %c0_9 = arith.constant 0 : index
    %c0_10 = arith.constant 0 : index
    %c0_11 = arith.constant 0 : index
    %19 = vector.load %arg4[%c0_9, %c0_10, %c0_11] : memref<4x256x128xbf16, #tpu.memory_space<vmem>>, vector<1x256x128xbf16>
    %20 = vector.shape_cast %19 : vector<1x256x128xbf16> to vector<256x128xbf16>
    %cst_12 = arith.constant dense<0.000000e+00> : vector<16x128xf32>
    %21 = tpu.matmul %18, %20, %cst_12 {dimension_numbers = #tpu.dot_dimension_numbers<[1], [0], [0], [1], [0, 0, 1, 1], [], []>} : vector<16x256xbf16>, vector<256x128xbf16>, vector<16x128xf32> -> vector<16x128xf32>
    %c0_13 = arith.constant 0 : index
    %c0_14 = arith.constant 0 : index
    %22 = vector.load %arg5[%c0_13, %c0_14] : memref<1x512xf32, #tpu.memory_space<vmem>>, vector<1x128xf32>
    %23 = vector.broadcast %22 : vector<1x128xf32> to vector<16x128xf32>
    %24 = arith.addf %21, %23 : vector<16x128xf32>
    %cst_15 = arith.constant 2.000000e+01 : f32
    %25 = vector.broadcast %cst_15 : f32 to vector<16x128xf32>
    %26 = arith.minimumf %24, %25 : vector<16x128xf32>
    %27 = math.exp %26 : vector<16x128xf32>
    %cst_16 = arith.constant 2.000000e+00 : f32
    %28 = vector.broadcast %cst_16 : f32 to vector<16x128xf32>
    %29 = arith.addf %27, %28 : vector<16x128xf32>
    %30 = arith.mulf %27, %29 : vector<16x128xf32>
    %31 = arith.mulf %24, %30 : vector<16x128xf32>
    %cst_17 = arith.constant 2.000000e+00 : f32
    %32 = vector.broadcast %cst_17 : f32 to vector<16x128xf32>
    %33 = arith.addf %30, %32 : vector<16x128xf32>
    %34 = tpu.reciprocal %33 {approx = true} : vector<16x128xf32> -> vector<16x128xf32>
    %35 = arith.mulf %31, %34 : vector<16x128xf32>
    %36 = arith.truncf %35 : vector<16x128xf32> to vector<16x128xbf16>
    %c0_18 = arith.constant 0 : index
    %c0_19 = arith.constant 0 : index
    %c0_20 = arith.constant 0 : index
    %37 = vector.load %arg6[%c0_18, %c0_19, %c0_20] : memref<4x128x256xbf16, #tpu.memory_space<vmem>>, vector<1x128x256xbf16>
    %38 = vector.shape_cast %37 : vector<1x128x256xbf16> to vector<128x256xbf16>
    %cst_21 = arith.constant dense<0.000000e+00> : vector<16x256xf32>
    %39 = tpu.matmul %36, %38, %cst_21 {dimension_numbers = #tpu.dot_dimension_numbers<[1], [0], [0], [1], [0, 0, 1, 1], [], []>} : vector<16x128xbf16>, vector<128x256xbf16>, vector<16x256xf32> -> vector<16x256xf32>
    %40 = arith.addf %0, %39 : vector<16x256xf32>
    %c0_22 = arith.constant 0 : index
    %c256 = arith.constant 256 : index
    %41 = vector.load %arg1[%c0_22, %c256] : memref<16x2048xbf16, #tpu.memory_space<vmem>>, vector<16x512xbf16>
    %c256_23 = arith.constant 256 : index
    %c0_24 = arith.constant 0 : index
    %42 = vector.load %arg2[%c256_23, %c0_24] : memref<2048x256xbf16, #tpu.memory_space<vmem>>, vector<512x256xbf16>
    %cst_25 = arith.constant dense<0.000000e+00> : vector<16x256xf32>
    %43 = tpu.matmul %41, %42, %cst_25 {dimension_numbers = #tpu.dot_dimension_numbers<[1], [0], [0], [1], [0, 0, 1, 1], [], []>} : vector<16x512xbf16>, vector<512x256xbf16>, vector<16x256xf32> -> vector<16x256xf32>
    %c0_26 = arith.constant 0 : index
    %c256_27 = arith.constant 256 : index
    %44 = vector.load %arg3[%c0_26, %c256_27] : memref<1x1024xf32, #tpu.memory_space<vmem>>, vector<1x256xf32>
    %45 = vector.broadcast %44 : vector<1x256xf32> to vector<16x256xf32>
    %46 = arith.addf %43, %45 : vector<16x256xf32>
    %cst_28 = arith.constant 2.000000e+01 : f32
    %47 = vector.broadcast %cst_28 : f32 to vector<16x256xf32>
    %48 = arith.minimumf %46, %47 : vector<16x256xf32>
    %49 = math.exp %48 : vector<16x256xf32>
    %cst_29 = arith.constant 2.000000e+00 : f32
    %50 = vector.broadcast %cst_29 : f32 to vector<16x256xf32>
    %51 = arith.addf %49, %50 : vector<16x256xf32>
    %52 = arith.mulf %49, %51 : vector<16x256xf32>
    %53 = arith.mulf %46, %52 : vector<16x256xf32>
    %cst_30 = arith.constant 2.000000e+00 : f32
    %54 = vector.broadcast %cst_30 : f32 to vector<16x256xf32>
    %55 = arith.addf %52, %54 : vector<16x256xf32>
    %56 = tpu.reciprocal %55 {approx = true} : vector<16x256xf32> -> vector<16x256xf32>
    %57 = arith.mulf %53, %56 : vector<16x256xf32>
    %58 = arith.truncf %57 : vector<16x256xf32> to vector<16x256xbf16>
    %c1 = arith.constant 1 : index
    %c0_31 = arith.constant 0 : index
    %c0_32 = arith.constant 0 : index
    %59 = vector.load %arg4[%c1, %c0_31, %c0_32] : memref<4x256x128xbf16, #tpu.memory_space<vmem>>, vector<1x256x128xbf16>
    %60 = vector.shape_cast %59 : vector<1x256x128xbf16> to vector<256x128xbf16>
    %cst_33 = arith.constant dense<0.000000e+00> : vector<16x128xf32>
    %61 = tpu.matmul %58, %60, %cst_33 {dimension_numbers = #tpu.dot_dimension_numbers<[1], [0], [0], [1], [0, 0, 1, 1], [], []>} : vector<16x256xbf16>, vector<256x128xbf16>, vector<16x128xf32> -> vector<16x128xf32>
    %c0_34 = arith.constant 0 : index
    %c128 = arith.constant 128 : index
    %62 = vector.load %arg5[%c0_34, %c128] : memref<1x512xf32, #tpu.memory_space<vmem>>, vector<1x128xf32>
    %63 = vector.broadcast %62 : vector<1x128xf32> to vector<16x128xf32>
    %64 = arith.addf %61, %63 : vector<16x128xf32>
    %cst_35 = arith.constant 2.000000e+01 : f32
    %65 = vector.broadcast %cst_35 : f32 to vector<16x128xf32>
    %66 = arith.minimumf %64, %65 : vector<16x128xf32>
    %67 = math.exp %66 : vector<16x128xf32>
    %cst_36 = arith.constant 2.000000e+00 : f32
    %68 = vector.broadcast %cst_36 : f32 to vector<16x128xf32>
    %69 = arith.addf %67, %68 : vector<16x128xf32>
    %70 = arith.mulf %67, %69 : vector<16x128xf32>
    %71 = arith.mulf %64, %70 : vector<16x128xf32>
    %cst_37 = arith.constant 2.000000e+00 : f32
    %72 = vector.broadcast %cst_37 : f32 to vector<16x128xf32>
    %73 = arith.addf %70, %72 : vector<16x128xf32>
    %74 = tpu.reciprocal %73 {approx = true} : vector<16x128xf32> -> vector<16x128xf32>
    %75 = arith.mulf %71, %74 : vector<16x128xf32>
    %76 = arith.truncf %75 : vector<16x128xf32> to vector<16x128xbf16>
    %c1_38 = arith.constant 1 : index
    %c0_39 = arith.constant 0 : index
    %c0_40 = arith.constant 0 : index
    %77 = vector.load %arg6[%c1_38, %c0_39, %c0_40] : memref<4x128x256xbf16, #tpu.memory_space<vmem>>, vector<1x128x256xbf16>
    %78 = vector.shape_cast %77 : vector<1x128x256xbf16> to vector<128x256xbf16>
    %cst_41 = arith.constant dense<0.000000e+00> : vector<16x256xf32>
    %79 = tpu.matmul %76, %78, %cst_41 {dimension_numbers = #tpu.dot_dimension_numbers<[1], [0], [0], [1], [0, 0, 1, 1], [], []>} : vector<16x128xbf16>, vector<128x256xbf16>, vector<16x256xf32> -> vector<16x256xf32>
    %80 = arith.addf %40, %79 : vector<16x256xf32>
    %c0_42 = arith.constant 0 : index
    %c768 = arith.constant 768 : index
    %81 = vector.load %arg1[%c0_42, %c768] : memref<16x2048xbf16, #tpu.memory_space<vmem>>, vector<16x896xbf16>
    %c768_43 = arith.constant 768 : index
    %c0_44 = arith.constant 0 : index
    %82 = vector.load %arg2[%c768_43, %c0_44] : memref<2048x256xbf16, #tpu.memory_space<vmem>>, vector<896x256xbf16>
    %cst_45 = arith.constant dense<0.000000e+00> : vector<16x256xf32>
    %83 = tpu.matmul %81, %82, %cst_45 {dimension_numbers = #tpu.dot_dimension_numbers<[1], [0], [0], [1], [0, 0, 1, 1], [], []>} : vector<16x896xbf16>, vector<896x256xbf16>, vector<16x256xf32> -> vector<16x256xf32>
    %c0_46 = arith.constant 0 : index
    %c512 = arith.constant 512 : index
    %84 = vector.load %arg3[%c0_46, %c512] : memref<1x1024xf32, #tpu.memory_space<vmem>>, vector<1x256xf32>
    %85 = vector.broadcast %84 : vector<1x256xf32> to vector<16x256xf32>
    %86 = arith.addf %83, %85 : vector<16x256xf32>
    %cst_47 = arith.constant 2.000000e+01 : f32
    %87 = vector.broadcast %cst_47 : f32 to vector<16x256xf32>
    %88 = arith.minimumf %86, %87 : vector<16x256xf32>
    %89 = math.exp %88 : vector<16x256xf32>
    %cst_48 = arith.constant 2.000000e+00 : f32
    %90 = vector.broadcast %cst_48 : f32 to vector<16x256xf32>
    %91 = arith.addf %89, %90 : vector<16x256xf32>
    %92 = arith.mulf %89, %91 : vector<16x256xf32>
    %93 = arith.mulf %86, %92 : vector<16x256xf32>
    %cst_49 = arith.constant 2.000000e+00 : f32
    %94 = vector.broadcast %cst_49 : f32 to vector<16x256xf32>
    %95 = arith.addf %92, %94 : vector<16x256xf32>
    %96 = tpu.reciprocal %95 {approx = true} : vector<16x256xf32> -> vector<16x256xf32>
    %97 = arith.mulf %93, %96 : vector<16x256xf32>
    %98 = arith.truncf %97 : vector<16x256xf32> to vector<16x256xbf16>
    %c2 = arith.constant 2 : index
    %c0_50 = arith.constant 0 : index
    %c0_51 = arith.constant 0 : index
    %99 = vector.load %arg4[%c2, %c0_50, %c0_51] : memref<4x256x128xbf16, #tpu.memory_space<vmem>>, vector<1x256x128xbf16>
    %100 = vector.shape_cast %99 : vector<1x256x128xbf16> to vector<256x128xbf16>
    %cst_52 = arith.constant dense<0.000000e+00> : vector<16x128xf32>
    %101 = tpu.matmul %98, %100, %cst_52 {dimension_numbers = #tpu.dot_dimension_numbers<[1], [0], [0], [1], [0, 0, 1, 1], [], []>} : vector<16x256xbf16>, vector<256x128xbf16>, vector<16x128xf32> -> vector<16x128xf32>
    %c0_53 = arith.constant 0 : index
    %c256_54 = arith.constant 256 : index
    %102 = vector.load %arg5[%c0_53, %c256_54] : memref<1x512xf32, #tpu.memory_space<vmem>>, vector<1x128xf32>
    %103 = vector.broadcast %102 : vector<1x128xf32> to vector<16x128xf32>
    %104 = arith.addf %101, %103 : vector<16x128xf32>
    %cst_55 = arith.constant 2.000000e+01 : f32
    %105 = vector.broadcast %cst_55 : f32 to vector<16x128xf32>
    %106 = arith.minimumf %104, %105 : vector<16x128xf32>
    %107 = math.exp %106 : vector<16x128xf32>
    %cst_56 = arith.constant 2.000000e+00 : f32
    %108 = vector.broadcast %cst_56 : f32 to vector<16x128xf32>
    %109 = arith.addf %107, %108 : vector<16x128xf32>
    %110 = arith.mulf %107, %109 : vector<16x128xf32>
    %111 = arith.mulf %104, %110 : vector<16x128xf32>
    %cst_57 = arith.constant 2.000000e+00 : f32
    %112 = vector.broadcast %cst_57 : f32 to vector<16x128xf32>
    %113 = arith.addf %110, %112 : vector<16x128xf32>
    %114 = tpu.reciprocal %113 {approx = true} : vector<16x128xf32> -> vector<16x128xf32>
    %115 = arith.mulf %111, %114 : vector<16x128xf32>
    %116 = arith.truncf %115 : vector<16x128xf32> to vector<16x128xbf16>
    %c2_58 = arith.constant 2 : index
    %c0_59 = arith.constant 0 : index
    %c0_60 = arith.constant 0 : index
    %117 = vector.load %arg6[%c2_58, %c0_59, %c0_60] : memref<4x128x256xbf16, #tpu.memory_space<vmem>>, vector<1x128x256xbf16>
    %118 = vector.shape_cast %117 : vector<1x128x256xbf16> to vector<128x256xbf16>
    %cst_61 = arith.constant dense<0.000000e+00> : vector<16x256xf32>
    %119 = tpu.matmul %116, %118, %cst_61 {dimension_numbers = #tpu.dot_dimension_numbers<[1], [0], [0], [1], [0, 0, 1, 1], [], []>} : vector<16x128xbf16>, vector<128x256xbf16>, vector<16x256xf32> -> vector<16x256xf32>
    %120 = arith.addf %80, %119 : vector<16x256xf32>
    %c0_62 = arith.constant 0 : index
    %c1664 = arith.constant 1664 : index
    %121 = vector.load %arg1[%c0_62, %c1664] : memref<16x2048xbf16, #tpu.memory_space<vmem>>, vector<16x384xbf16>
    %c1664_63 = arith.constant 1664 : index
    %c0_64 = arith.constant 0 : index
    %122 = vector.load %arg2[%c1664_63, %c0_64] : memref<2048x256xbf16, #tpu.memory_space<vmem>>, vector<384x256xbf16>
    %cst_65 = arith.constant dense<0.000000e+00> : vector<16x256xf32>
    %123 = tpu.matmul %121, %122, %cst_65 {dimension_numbers = #tpu.dot_dimension_numbers<[1], [0], [0], [1], [0, 0, 1, 1], [], []>} : vector<16x384xbf16>, vector<384x256xbf16>, vector<16x256xf32> -> vector<16x256xf32>
    %c0_66 = arith.constant 0 : index
    %c768_67 = arith.constant 768 : index
    %124 = vector.load %arg3[%c0_66, %c768_67] : memref<1x1024xf32, #tpu.memory_space<vmem>>, vector<1x256xf32>
    %125 = vector.broadcast %124 : vector<1x256xf32> to vector<16x256xf32>
    %126 = arith.addf %123, %125 : vector<16x256xf32>
    %cst_68 = arith.constant 2.000000e+01 : f32
    %127 = vector.broadcast %cst_68 : f32 to vector<16x256xf32>
    %128 = arith.minimumf %126, %127 : vector<16x256xf32>
    %129 = math.exp %128 : vector<16x256xf32>
    %cst_69 = arith.constant 2.000000e+00 : f32
    %130 = vector.broadcast %cst_69 : f32 to vector<16x256xf32>
    %131 = arith.addf %129, %130 : vector<16x256xf32>
    %132 = arith.mulf %129, %131 : vector<16x256xf32>
    %133 = arith.mulf %126, %132 : vector<16x256xf32>
    %cst_70 = arith.constant 2.000000e+00 : f32
    %134 = vector.broadcast %cst_70 : f32 to vector<16x256xf32>
    %135 = arith.addf %132, %134 : vector<16x256xf32>
    %136 = tpu.reciprocal %135 {approx = true} : vector<16x256xf32> -> vector<16x256xf32>
    %137 = arith.mulf %133, %136 : vector<16x256xf32>
    %138 = arith.truncf %137 : vector<16x256xf32> to vector<16x256xbf16>
    %c3 = arith.constant 3 : index
    %c0_71 = arith.constant 0 : index
    %c0_72 = arith.constant 0 : index
    %139 = vector.load %arg4[%c3, %c0_71, %c0_72] : memref<4x256x128xbf16, #tpu.memory_space<vmem>>, vector<1x256x128xbf16>
    %140 = vector.shape_cast %139 : vector<1x256x128xbf16> to vector<256x128xbf16>
    %cst_73 = arith.constant dense<0.000000e+00> : vector<16x128xf32>
    %141 = tpu.matmul %138, %140, %cst_73 {dimension_numbers = #tpu.dot_dimension_numbers<[1], [0], [0], [1], [0, 0, 1, 1], [], []>} : vector<16x256xbf16>, vector<256x128xbf16>, vector<16x128xf32> -> vector<16x128xf32>
    %c0_74 = arith.constant 0 : index
    %c384 = arith.constant 384 : index
    %142 = vector.load %arg5[%c0_74, %c384] : memref<1x512xf32, #tpu.memory_space<vmem>>, vector<1x128xf32>
    %143 = vector.broadcast %142 : vector<1x128xf32> to vector<16x128xf32>
    %144 = arith.addf %141, %143 : vector<16x128xf32>
    %cst_75 = arith.constant 2.000000e+01 : f32
    %145 = vector.broadcast %cst_75 : f32 to vector<16x128xf32>
    %146 = arith.minimumf %144, %145 : vector<16x128xf32>
    %147 = math.exp %146 : vector<16x128xf32>
    %cst_76 = arith.constant 2.000000e+00 : f32
    %148 = vector.broadcast %cst_76 : f32 to vector<16x128xf32>
    %149 = arith.addf %147, %148 : vector<16x128xf32>
    %150 = arith.mulf %147, %149 : vector<16x128xf32>
    %151 = arith.mulf %144, %150 : vector<16x128xf32>
    %cst_77 = arith.constant 2.000000e+00 : f32
    %152 = vector.broadcast %cst_77 : f32 to vector<16x128xf32>
    %153 = arith.addf %150, %152 : vector<16x128xf32>
    %154 = tpu.reciprocal %153 {approx = true} : vector<16x128xf32> -> vector<16x128xf32>
    %155 = arith.mulf %151, %154 : vector<16x128xf32>
    %156 = arith.truncf %155 : vector<16x128xf32> to vector<16x128xbf16>
    %c3_78 = arith.constant 3 : index
    %c0_79 = arith.constant 0 : index
    %c0_80 = arith.constant 0 : index
    %157 = vector.load %arg6[%c3_78, %c0_79, %c0_80] : memref<4x128x256xbf16, #tpu.memory_space<vmem>>, vector<1x128x256xbf16>
    %158 = vector.shape_cast %157 : vector<1x128x256xbf16> to vector<128x256xbf16>
    %cst_81 = arith.constant dense<0.000000e+00> : vector<16x256xf32>
    %159 = tpu.matmul %156, %158, %cst_81 {dimension_numbers = #tpu.dot_dimension_numbers<[1], [0], [0], [1], [0, 0, 1, 1], [], []>} : vector<16x128xbf16>, vector<128x256xbf16>, vector<16x256xf32> -> vector<16x256xf32>
    %160 = arith.addf %120, %159 : vector<16x256xf32>
    %c0_82 = arith.constant 0 : index
    %c0_83 = arith.constant 0 : index
    %161 = vector.load %arg7[%c0_82, %c0_83] : memref<1x256xf32, #tpu.memory_space<vmem>>, vector<1x256xf32>
    %162 = vector.broadcast %161 : vector<1x256xf32> to vector<16x256xf32>
    %163 = arith.addf %160, %162 : vector<16x256xf32>
    %cst_84 = arith.constant 2.000000e+01 : f32
    %164 = vector.broadcast %cst_84 : f32 to vector<16x256xf32>
    %165 = arith.minimumf %163, %164 : vector<16x256xf32>
    %166 = math.exp %165 : vector<16x256xf32>
    %cst_85 = arith.constant 2.000000e+00 : f32
    %167 = vector.broadcast %cst_85 : f32 to vector<16x256xf32>
    %168 = arith.addf %166, %167 : vector<16x256xf32>
    %169 = arith.mulf %166, %168 : vector<16x256xf32>
    %170 = arith.mulf %163, %169 : vector<16x256xf32>
    %cst_86 = arith.constant 2.000000e+00 : f32
    %171 = vector.broadcast %cst_86 : f32 to vector<16x256xf32>
    %172 = arith.addf %169, %171 : vector<16x256xf32>
    %173 = tpu.reciprocal %172 {approx = true} : vector<16x256xf32> -> vector<16x256xf32>
    %174 = arith.mulf %170, %173 : vector<16x256xf32>
    %c0_87 = arith.constant 0 : index
    %c0_88 = arith.constant 0 : index
    %175 = vector.load %arg8[%c0_87, %c0_88] : memref<16x256xf32, #tpu.memory_space<vmem>>, vector<16x256xf32>
    tpu.vector_store %arg8[%c0_87, %c0_88], %174 {strides = array<i32>} : memref<16x256xf32, #tpu.memory_space<vmem>>, vector<16x256xf32>,
    return
  }
  func.func @transform_0(%arg0: i32) -> (i32, i32) {
    %c0_i32 = arith.constant 0 : i32
    %c0_i32_0 = arith.constant 0 : i32
    return %arg0, %c0_i32 : i32, i32
  }
  func.func @transform_1(%arg0: i32) -> (i32, i32) {
    %c0_i32 = arith.constant 0 : i32
    %c0_i32_0 = arith.constant 0 : i32
    %c0_i32_1 = arith.constant 0 : i32
    return %c0_i32, %c0_i32_0 : i32, i32
  }
  func.func @transform_2(%arg0: i32) -> (i32, i32) {
    %c0_i32 = arith.constant 0 : i32
    %c0_i32_0 = arith.constant 0 : i32
    %c0_i32_1 = arith.constant 0 : i32
    return %c0_i32, %c0_i32_0 : i32, i32
  }
  func.func @transform_3(%arg0: i32) -> (i32, i32, i32) {
    %c0_i32 = arith.constant 0 : i32
    %c0_i32_0 = arith.constant 0 : i32
    %c0_i32_1 = arith.constant 0 : i32
    %c0_i32_2 = arith.constant 0 : i32
    return %c0_i32, %c0_i32_0, %c0_i32_1 : i32, i32, i32
  }
  func.func @transform_4(%arg0: i32) -> (i32, i32) {
    %c0_i32 = arith.constant 0 : i32
    %c0_i32_0 = arith.constant 0 : i32
    %c0_i32_1 = arith.constant 0 : i32
    return %c0_i32, %c0_i32_0 : i32, i32
  }
  func.func @transform_5(%arg0: i32) -> (i32, i32, i32) {
    %c0_i32 = arith.constant 0 : i32
    %c0_i32_0 = arith.constant 0 : i32
    %c0_i32_1 = arith.constant 0 : i32
    %c0_i32_2 = arith.constant 0 : i32
    return %c0_i32, %c0_i32_0, %c0_i32_1 : i32, i32, i32
  }
  func.func @transform_6(%arg0: i32) -> (i32, i32) {
    %c0_i32 = arith.constant 0 : i32
    %c0_i32_0 = arith.constant 0 : i32
    %c0_i32_1 = arith.constant 0 : i32
    return %c0_i32, %c0_i32_0 : i32, i32
  }
  func.func @transform_7(%arg0: i32) -> (i32, i32) {
    %c0_i32 = arith.constant 0 : i32
    %c0_i32_0 = arith.constant 0 : i32
    return %arg0, %c0_i32 : i32, i32
  }
}

</mosaic_0001>

<llo_original>
// kernel: finger_encoder_forward.1
$region0: #{finger_encoder_forward.1}
  #allocation0 [shape = 'u32[]', space=smem, size = 0x4, offset = 0x4, fixed_abs, tag = 'smem constant byte address 0x4 - core index']
  #allocation1 [shape = 'u32[144,128]{1,0:T(1,128)}', space=vmem, size = 0x12000, scoped, tag = 'internal scratch']
  %s0 = inlined_call_operand.vmem [shape: bf16[16,2048], index: 0, kind: input, shape index: {}]
  %s1 = inlined_call_operand.hbm [shape: bf16[2048,256], index: 1, kind: input, shape index: {}]
  %s2 = inlined_call_operand.vmem [shape: f32[1,1024], index: 2, kind: input, shape index: {}]
  %s3 = inlined_call_operand.hbm [shape: bf16[4,256,128], index: 3, kind: input, shape index: {}]
  %s4 = inlined_call_operand.vmem [shape: f32[1,512], index: 4, kind: input, shape index: {}]
  %s5 = inlined_call_operand.hbm [shape: bf16[4,128,256], index: 5, kind: input, shape index: {}]
  %s6 = inlined_call_operand.vmem [shape: f32[1,256], index: 6, kind: input, shape index: {}]
  %s7 = inlined_call_operand.vmem [shape: f32[16,256], index: 7, kind: output, shape index: {}]
  %s8 = sld [smem:[#allocation0]]
  $region50: #{finger_encoder_forward.1} parent=0
    _
  %s10 = ssub.s32 1, %s8
  %s11 = scalar_select 0, %s10, %s8
  $region1: #{finger_encoder_forward.1} parent=0
    #allocation2 [shape = 'u8[1048576]{0}', space=vmem, size = 0x100000, scoped, tag = 'input window, operand 1, single buffered']
    #allocation3 [shape = 's32[1]{0}', space=sflag, size = 0x4, scoped, tag = 'scoped memory for finger_encoder_forward.1']
    #allocation4 [shape = 'u8[262144]{0}', space=vmem, size = 0x40000, scoped, tag = 'input window, operand 3, single buffered']
    #allocation5 [shape = 's32[1]{0}', space=sflag, size = 0x4, scoped, tag = 'scoped memory for finger_encoder_forward.1']
    #allocation6 [shape = 'u8[262144]{0}', space=vmem, size = 0x40000, scoped, tag = 'input window, operand 5, single buffered']
    %12 = vsyncpa [#allocation3], 0
    %13 = vsyncpa [#allocation5], 0
    // Predicated region
    $region2: #{finger_encoder_forward.1} parent=1 // pred_check
      _
    $region3: #{finger_encoder_forward.1} parent=1 // pred_check_branch
      %15 = sbr.rel (0) target = $region5
    $region4: #{finger_encoder_forward.1} parent=1 // pred_region
      _
    $region5: #{finger_encoder_forward.1} parent=1 // pred_fallthru
      _
    // Predicated region
    $region6: #{finger_encoder_forward.1} parent=1 // pred_check
      _
    $region7: #{finger_encoder_forward.1} parent=1 // pred_check_branch
      %17 = sbr.rel (0) target = $region9
    $region8: #{finger_encoder_forward.1} parent=1 // pred_region
      %s19 = ssub.s32 32768, 32768
      %20 = vsyncadd [#allocation3], %s19
      %s21 = sshll.u32 [#allocation2], 4
      %s22 = int_to_ptr.vmem [resolvable:$true] %s21
      %27 = dma.hbm_to_vmem [thread:$0]  %s1, 32768, %s22, [#allocation3], 128, 128, 8
    $region9: #{finger_encoder_forward.1} parent=1 // pred_fallthru
      _
    // Predicated region
    $region10: #{finger_encoder_forward.1} parent=1 // pred_check
      _
    $region11: #{finger_encoder_forward.1} parent=1 // pred_check_branch
      %29 = sbr.rel (0) target = $region13
    $region12: #{finger_encoder_forward.1} parent=1 // pred_region
      _
    $region13: #{finger_encoder_forward.1} parent=1 // pred_fallthru
      _
    // Predicated region
    $region14: #{finger_encoder_forward.1} parent=1 // pred_check
      _
    $region15: #{finger_encoder_forward.1} parent=1 // pred_check_branch
      %31 = sbr.rel (0) target = $region17
    $region16: #{finger_encoder_forward.1} parent=1 // pred_region
      %s33 = ssub.s32 8192, 8192
      %34 = vsyncadd [#allocation5], %s33
      %s35 = sshll.u32 [#allocation4], 4
      %s36 = int_to_ptr.vmem [resolvable:$true] %s35
      %41 = dma.hbm_to_vmem [thread:$0]  %s3, 8192, %s36, [#allocation5], 64, 64, 4
    $region17: #{finger_encoder_forward.1} parent=1 // pred_fallthru
      _
    // Predicated region
    $region18: #{finger_encoder_forward.1} parent=1 // pred_check
      _
    $region19: #{finger_encoder_forward.1} parent=1 // pred_check_branch
      %43 = sbr.rel (0) target = $region21
    $region20: #{finger_encoder_forward.1} parent=1 // pred_region
      _
    $region21: #{finger_encoder_forward.1} parent=1 // pred_fallthru
      _
    // Predicated region
    $region22: #{finger_encoder_forward.1} parent=1 // pred_check
      _
    $region23: #{finger_encoder_forward.1} parent=1 // pred_check_branch
      %45 = sbr.rel (0) target = $region25
    $region24: #{finger_encoder_forward.1} parent=1 // pred_region
      %s47 = ssub.s32 8192, 8192
      %48 = vsyncadd [#allocation5], %s47
      %s49 = sshll.u32 [#allocation6], 4
      %s50 = int_to_ptr.vmem [resolvable:$true] %s49
      %55 = dma.hbm_to_vmem [thread:$0]  %s5, 8192, %s50, [#allocation5], 128, 128, 8
    $region25: #{finger_encoder_forward.1} parent=1 // pred_fallthru
      _
    // Predicated region
    $region26: #{finger_encoder_forward.1} parent=1 // pred_check
      _
    $region27: #{finger_encoder_forward.1} parent=1 // pred_check_branch
      %57 = sbr.rel (0) target = $region29
    $region28: #{finger_encoder_forward.1} parent=1 // pred_region
      _
    $region29: #{finger_encoder_forward.1} parent=1 // pred_fallthru
      _
    // Predicated region
    $region30: #{finger_encoder_forward.1} parent=1 // pred_check
      _
    $region31: #{finger_encoder_forward.1} parent=1 // pred_check_branch
      %59 = sbr.rel (0) target = $region33
    $region32: #{finger_encoder_forward.1} parent=1 // pred_region
      %60 = dma.done [#allocation3], 32768
    $region33: #{finger_encoder_forward.1} parent=1 // pred_fallthru
      _
    // Predicated region
    $region34: #{finger_encoder_forward.1} parent=1 // pred_check
      _
    $region35: #{finger_encoder_forward.1} parent=1 // pred_check_branch
      %62 = sbr.rel (0) target = $region37
    $region36: #{finger_encoder_forward.1} parent=1 // pred_region
      %63 = dma.done [#allocation5], 8192
    $region37: #{finger_encoder_forward.1} parent=1 // pred_fallthru
      _
    // Predicated region
    $region38: #{finger_encoder_forward.1} parent=1 // pred_check
      _
    $region39: #{finger_encoder_forward.1} parent=1 // pred_check_branch
      %65 = sbr.rel (0) target = $region41
    $region40: #{finger_encoder_forward.1} parent=1 // pred_region
      %66 = dma.done [#allocation5], 8192
    $region41: #{finger_encoder_forward.1} parent=1 // pred_fallthru
      _
    %v68 = vld [vmem:[%s0] sm:$0xff]
    %v69 = vld [vmem:[%s0 + $0x40] sm:$0xff]
    %v70 = vld [vmem:[#allocation2] sm:$0xff]
    %v71 = vld [vmem:[#allocation2 + $0x8] sm:$0xff]
    %v72 = vld [vmem:[#allocation2 + $0x10] sm:$0xff]
    %v73 = vld [vmem:[#allocation2 + $0x18] sm:$0xff]
    %v74 = vld [vmem:[#allocation2 + $0x20] sm:$0xff]
    %v75 = vld [vmem:[#allocation2 + $0x28] sm:$0xff]
    %v76 = vld [vmem:[#allocation2 + $0x30] sm:$0xff]
    %v77 = vld [vmem:[#allocation2 + $0x38] sm:$0xff]
    %v78 = vld [vmem:[#allocation2 + $0x40] sm:$0xff]
    %v79 = vld [vmem:[#allocation2 + $0x48] sm:$0xff]
    %v80 = vld [vmem:[#allocation2 + $0x50] sm:$0xff]
    %v81 = vld [vmem:[#allocation2 + $0x58] sm:$0xff]
    %v82 = vld [vmem:[#allocation2 + $0x60] sm:$0xff]
    %v83 = vld [vmem:[#allocation2 + $0x68] sm:$0xff]
    %v84 = vld [vmem:[#allocation2 + $0x70] sm:$0xff]
    %v85 = vld [vmem:[#allocation2 + $0x78] sm:$0xff]
    %v86 = vld [vmem:[#allocation2 + $0x80] sm:$0xff]
    %v87 = vld [vmem:[#allocation2 + $0x88] sm:$0xff]
    %v88 = vld [vmem:[#allocation2 + $0x90] sm:$0xff]
    %v89 = vld [vmem:[#allocation2 + $0x98] sm:$0xff]
    %v90 = vld [vmem:[#allocation2 + $0xa0] sm:$0xff]
    %v91 = vld [vmem:[#allocation2 + $0xa8] sm:$0xff]
    %v92 = vld [vmem:[#allocation2 + $0xb0] sm:$0xff]
    %v93 = vld [vmem:[#allocation2 + $0xb8] sm:$0xff]
    %v94 = vld [vmem:[#allocation2 + $0xc0] sm:$0xff]
    %v95 = vld [vmem:[#allocation2 + $0xc8] sm:$0xff]
    %v96 = vld [vmem:[#allocation2 + $0xd0] sm:$0xff]
    %v97 = vld [vmem:[#allocation2 + $0xd8] sm:$0xff]
    %v98 = vld [vmem:[#allocation2 + $0xe0] sm:$0xff]
    %v99 = vld [vmem:[#allocation2 + $0xe8] sm:$0xff]
    %v100 = vld [vmem:[#allocation2 + $0xf0] sm:$0xff]
    %v101 = vld [vmem:[#allocation2 + $0xf8] sm:$0xff]
    %v102 = vld [vmem:[%s2] sm:$0x3]
    %v104 = vlaneseq
    %v105 = vshrl.u32 %v104, 7
    %v106 = vsub.s32 0, %v105
    %v107 = vrot.slane %v102, %v106
    %v108 = vlaneseq
    %v109 = vshrl.u32 %v108, 7
    %v110 = vsub.s32 1, %v109
    %v111 = vrot.slane %v102, %v110
    %v116 = vunpack.c.l.b16 %v68
    %v117 = vunpack.c.h.b16 %v68
    %v118 = vunpack.c.l.b16 %v69
    %v119 = vunpack.c.h.b16 %v69
    %v120 = vpack.c.b16 %v118, %v116
    %v121 = vpack.c.b16 %v119, %v117
    %v156 = vunpack.c.l.b16 %v70
    %v157 = vunpack.c.h.b16 %v70
    %v158 = vunpack.c.l.b16 %v71
    %v159 = vunpack.c.h.b16 %v71
    %v160 = vunpack.c.l.b16 %v72
    %v161 = vunpack.c.h.b16 %v72
    %v162 = vunpack.c.l.b16 %v73
    %v163 = vunpack.c.h.b16 %v73
    %v164 = vunpack.c.l.b16 %v74
    %v165 = vunpack.c.h.b16 %v74
    %v166 = vunpack.c.l.b16 %v75
    %v167 = vunpack.c.h.b16 %v75
    %v168 = vunpack.c.l.b16 %v76
    %v169 = vunpack.c.h.b16 %v76
    %v170 = vunpack.c.l.b16 %v77
    %v171 = vunpack.c.h.b16 %v77
    %v172 = vunpack.c.l.b16 %v78
    %v173 = vunpack.c.h.b16 %v78
    %v174 = vunpack.c.l.b16 %v79
    %v175 = vunpack.c.h.b16 %v79
    %v176 = vunpack.c.l.b16 %v80
    %v177 = vunpack.c.h.b16 %v80
    %v178 = vunpack.c.l.b16 %v81
    %v179 = vunpack.c.h.b16 %v81
    %v180 = vunpack.c.l.b16 %v82
    %v181 = vunpack.c.h.b16 %v82
    %v182 = vunpack.c.l.b16 %v83
    %v183 = vunpack.c.h.b16 %v83
    %v184 = vunpack.c.l.b16 %v84
    %v185 = vunpack.c.h.b16 %v84
    %v186 = vunpack.c.l.b16 %v85
    %v187 = vunpack.c.h.b16 %v85
    %v188 = vunpack.c.l.b16 %v86
    %v189 = vunpack.c.h.b16 %v86
    %v190 = vunpack.c.l.b16 %v87
    %v191 = vunpack.c.h.b16 %v87
    %v192 = vunpack.c.l.b16 %v88
    %v193 = vunpack.c.h.b16 %v88
    %v194 = vunpack.c.l.b16 %v89
    %v195 = vunpack.c.h.b16 %v89
    %v196 = vunpack.c.l.b16 %v90
    %v197 = vunpack.c.h.b16 %v90
    %v198 = vunpack.c.l.b16 %v91
    %v199 = vunpack.c.h.b16 %v91
    %v200 = vunpack.c.l.b16 %v92
    %v201 = vunpack.c.h.b16 %v92
    %v202 = vunpack.c.l.b16 %v93
    %v203 = vunpack.c.h.b16 %v93
    %v204 = vunpack.c.l.b16 %v94
    %v205 = vunpack.c.h.b16 %v94
    %v206 = vunpack.c.l.b16 %v95
    %v207 = vunpack.c.h.b16 %v95
    %v208 = vunpack.c.l.b16 %v96
    %v209 = vunpack.c.h.b16 %v96
    %v210 = vunpack.c.l.b16 %v97
    %v211 = vunpack.c.h.b16 %v97
    %v212 = vunpack.c.l.b16 %v98
    %v213 = vunpack.c.h.b16 %v98
    %v214 = vunpack.c.l.b16 %v99
    %v215 = vunpack.c.h.b16 %v99
    %v216 = vunpack.c.l.b16 %v100
    %v217 = vunpack.c.h.b16 %v100
    %v218 = vunpack.c.l.b16 %v101
    %v219 = vunpack.c.h.b16 %v101
    %v220 = vpack.c.b16 %v158, %v156
    %v221 = vpack.c.b16 %v159, %v157
    %v222 = vpack.c.b16 %v162, %v160
    %v223 = vpack.c.b16 %v163, %v161
    %v224 = vpack.c.b16 %v166, %v164
    %v225 = vpack.c.b16 %v167, %v165
    %v226 = vpack.c.b16 %v170, %v168
    %v227 = vpack.c.b16 %v171, %v169
    %v228 = vpack.c.b16 %v174, %v172
    %v229 = vpack.c.b16 %v175, %v173
    %v230 = vpack.c.b16 %v178, %v176
    %v231 = vpack.c.b16 %v179, %v177
    %v232 = vpack.c.b16 %v182, %v180
    %v233 = vpack.c.b16 %v183, %v181
    %v234 = vpack.c.b16 %v186, %v184
    %v235 = vpack.c.b16 %v187, %v185
    %v236 = vpack.c.b16 %v190, %v188
    %v237 = vpack.c.b16 %v191, %v189
    %v238 = vpack.c.b16 %v194, %v192
    %v239 = vpack.c.b16 %v195, %v193
    %v240 = vpack.c.b16 %v198, %v196
    %v241 = vpack.c.b16 %v199, %v197
    %v242 = vpack.c.b16 %v202, %v200
    %v243 = vpack.c.b16 %v203, %v201
    %v244 = vpack.c.b16 %v206, %v204
    %v245 = vpack.c.b16 %v207, %v205
    %v246 = vpack.c.b16 %v210, %v208
    %v247 = vpack.c.b16 %v211, %v209
    %v248 = vpack.c.b16 %v214, %v212
    %v249 = vpack.c.b16 %v215, %v213
    %v250 = vpack.c.b16 %v218, %v216
    %v251 = vpack.c.b16 %v219, %v217
    %284 = vmatprep.subr.bf16.mxu0 %v221
    %285 = vmatpush1.bf16.msra.mxu0 %v220
    %286 = vmatprep.subr.bf16.mxu0 %v223
    %287 = vmatpush1.bf16.msra.mxu0 %v222
    %288 = vmatprep.subr.bf16.mxu0 %v225
    %289 = vmatpush1.bf16.msra.mxu0 %v224
    %290 = vmatprep.subr.bf16.mxu0 %v227
    %291 = vmatpush1.bf16.msra.mxu0 %v226
    %292 = vmatprep.subr.bf16.mxu0 %v229
    %293 = vmatpush1.bf16.msra.mxu0 %v228
    %294 = vmatprep.subr.bf16.mxu0 %v231
    %295 = vmatpush1.bf16.msra.mxu0 %v230
    %296 = vmatprep.subr.bf16.mxu0 %v233
    %297 = vmatpush1.bf16.msra.mxu0 %v232
    %298 = vmatprep.subr.bf16.mxu0 %v235
    %299 = vmatpush1.bf16.msra.mxu0 %v234
    %300 = vmatprep.subr.bf16.mxu0 %v237
    %301 = vmatpush1.bf16.msra.mxu0 %v236
    %302 = vmatprep.subr.bf16.mxu0 %v239
    %303 = vmatpush1.bf16.msra.mxu0 %v238
    %304 = vmatprep.subr.bf16.mxu0 %v241
    %305 = vmatpush1.bf16.msra.mxu0 %v240
    %306 = vmatprep.subr.bf16.mxu0 %v243
    %307 = vmatpush1.bf16.msra.mxu0 %v242
    %308 = vmatprep.subr.bf16.mxu0 %v245
    %309 = vmatpush1.bf16.msra.mxu0 %v244
    %310 = vmatprep.subr.bf16.mxu0 %v247
    %311 = vmatpush1.bf16.msra.mxu0 %v246
    %312 = vmatprep.subr.bf16.mxu0 %v249
    %313 = vmatpush1.bf16.msra.mxu0 %v248
    %314 = vmatprep.subr.bf16.mxu0 %v251
    %315 = vmatpush1.bf16.msra.mxu0 %v250
    %316 = vmatprep.mubr.bf16.mxu0 %v121
    %317 = vmatmul.mubr.bf16.gmra.mrb[0].mxu0 %v120
    %v318 = vpop.f32.mrb[0].mxu0
    %v319 = vadd.f32 %v107, %v318
    %v320 = vpop.f32.mrb[0].mxu0
    %v321 = vadd.f32 %v111, %v320
    %v322 = vpop.f32.mrb[0].mxu0
    %v323 = vadd.f32 %v107, %v322
    %v324 = vpop.f32.mrb[0].mxu0
    %v325 = vadd.f32 %v111, %v324
    %326 = vdwg.mxu0
    %v327 = vmin.f32 %v319, 20.0
    %v328 = vmin.f32 %v321, 20.0
    %v329 = vmin.f32 %v323, 20.0
    %v330 = vmin.f32 %v325, 20.0
    %v331 = vmul.f32 %v327, 1.442695
    %v332 = vpow.pop %v331
    %v333 = vmul.f32 %v328, 1.442695
    %v334 = vpow.pop %v333
    %v335 = vmul.f32 %v329, 1.442695
    %v336 = vpow.pop %v335
    %v337 = vmul.f32 %v330, 1.442695
    %v338 = vpow.pop %v337
    %v339 = vadd.f32 %v332, 2.0
    %v340 = vadd.f32 %v334, 2.0
    %v341 = vadd.f32 %v336, 2.0
    %v342 = vadd.f32 %v338, 2.0
    %v343 = vmul.f32 %v332, %v339
    %v344 = vmul.f32 %v334, %v340
    %v345 = vmul.f32 %v336, %v341
    %v346 = vmul.f32 %v338, %v342
    %v347 = vmul.f32 %v319, %v343
    %v348 = vmul.f32 %v321, %v344
    %v349 = vmul.f32 %v323, %v345
    %v350 = vmul.f32 %v325, %v346
    %v351 = vadd.f32 %v343, 2.0
    %v352 = vadd.f32 %v344, 2.0
    %v353 = vadd.f32 %v345, 2.0
    %v354 = vadd.f32 %v346, 2.0
    %v355 = vrcp.pop %v351
    %v356 = vrcp.pop %v352
    %v357 = vrcp.pop %v353
    %v358 = vrcp.pop %v354
    %v359 = vmul.f32 %v347, %v355
    %v360 = vmul.f32 %v348, %v356
    %v361 = vmul.f32 %v349, %v357
    %v362 = vmul.f32 %v350, %v358
    %v363 = vpack.c.bf16 %v361, %v359
    %v364 = vpack.c.bf16 %v362, %v360
    %v365 = vld [vmem:[#allocation4] sm:$0xf]
    %v366 = vld [vmem:[#allocation4 + $0x4] sm:$0xf]
    %v367 = vld [vmem:[#allocation4 + $0x8] sm:$0xf]
    %v368 = vld [vmem:[#allocation4 + $0xc] sm:$0xf]
    %v369 = vld [vmem:[#allocation4 + $0x10] sm:$0xf]
    %v370 = vld [vmem:[#allocation4 + $0x14] sm:$0xf]
    %v371 = vld [vmem:[#allocation4 + $0x18] sm:$0xf]
    %v372 = vld [vmem:[#allocation4 + $0x1c] sm:$0xf]
    %v373 = vld [vmem:[#allocation4 + $0x20] sm:$0xf]
    %v374 = vld [vmem:[#allocation4 + $0x24] sm:$0xf]
    %v375 = vld [vmem:[#allocation4 + $0x28] sm:$0xf]
    %v376 = vld [vmem:[#allocation4 + $0x2c] sm:$0xf]
    %v377 = vld [vmem:[#allocation4 + $0x30] sm:$0xf]
    %v378 = vld [vmem:[#allocation4 + $0x34] sm:$0xf]
    %v379 = vld [vmem:[#allocation4 + $0x38] sm:$0xf]
    %v380 = vld [vmem:[#allocation4 + $0x3c] sm:$0xf]
    %v381 = vld [vmem:[#allocation4 + $0x40] sm:$0xf]
    %v382 = vld [vmem:[#allocation4 + $0x44] sm:$0xf]
    %v383 = vld [vmem:[#allocation4 + $0x48] sm:$0xf]
    %v384 = vld [vmem:[#allocation4 + $0x4c] sm:$0xf]
    %v385 = vld [vmem:[#allocation4 + $0x50] sm:$0xf]
    %v386 = vld [vmem:[#allocation4 + $0x54] sm:$0xf]
    %v387 = vld [vmem:[#allocation4 + $0x58] sm:$0xf]
    %v388 = vld [vmem:[#allocation4 + $0x5c] sm:$0xf]
    %v389 = vld [vmem:[#allocation4 + $0x60] sm:$0xf]
    %v390 = vld [vmem:[#allocation4 + $0x64] sm:$0xf]
    %v391 = vld [vmem:[#allocation4 + $0x68] sm:$0xf]
    %v392 = vld [vmem:[#allocation4 + $0x6c] sm:$0xf]
    %v393 = vld [vmem:[#allocation4 + $0x70] sm:$0xf]
    %v394 = vld [vmem:[#allocation4 + $0x74] sm:$0xf]
    %v395 = vld [vmem:[#allocation4 + $0x78] sm:$0xf]
    %v396 = vld [vmem:[#allocation4 + $0x7c] sm:$0xf]
    %v397 = vld [vmem:[%s4] sm:$0x1]
    %v399 = vlaneseq
    %v400 = vshrl.u32 %v399, 7
    %v401 = vsub.s32 0, %v400
    %v402 = vrot.slane %v397, %v401
    %v436 = vunpack.c.l.b16 %v365
    %v437 = vunpack.c.l.b16 %v366
    %v438 = vunpack.c.l.b16 %v367
    %v439 = vunpack.c.l.b16 %v368
    %v440 = vunpack.c.l.b16 %v369
    %v441 = vunpack.c.l.b16 %v370
    %v442 = vunpack.c.l.b16 %v371
    %v443 = vunpack.c.l.b16 %v372
    %v444 = vunpack.c.l.b16 %v373
    %v445 = vunpack.c.l.b16 %v374
    %v446 = vunpack.c.l.b16 %v375
    %v447 = vunpack.c.l.b16 %v376
    %v448 = vunpack.c.l.b16 %v377
    %v449 = vunpack.c.l.b16 %v378
    %v450 = vunpack.c.l.b16 %v379
    %v451 = vunpack.c.l.b16 %v380
    %v452 = vunpack.c.l.b16 %v381
    %v453 = vunpack.c.l.b16 %v382
    %v454 = vunpack.c.l.b16 %v383
    %v455 = vunpack.c.l.b16 %v384
    %v456 = vunpack.c.l.b16 %v385
    %v457 = vunpack.c.l.b16 %v386
    %v458 = vunpack.c.l.b16 %v387
    %v459 = vunpack.c.l.b16 %v388
    %v460 = vunpack.c.l.b16 %v389
    %v461 = vunpack.c.l.b16 %v390
    %v462 = vunpack.c.l.b16 %v391
    %v463 = vunpack.c.l.b16 %v392
    %v464 = vunpack.c.l.b16 %v393
    %v465 = vunpack.c.l.b16 %v394
    %v466 = vunpack.c.l.b16 %v395
    %v467 = vunpack.c.l.b16 %v396
    %v468 = vpack.c.b16 %v437, %v436
    %v469 = vpack.c.b16 %v439, %v438
    %v470 = vpack.c.b16 %v441, %v440
    %v471 = vpack.c.b16 %v443, %v442
    %v472 = vpack.c.b16 %v445, %v444
    %v473 = vpack.c.b16 %v447, %v446
    %v474 = vpack.c.b16 %v449, %v448
    %v475 = vpack.c.b16 %v451, %v450
    %v476 = vpack.c.b16 %v453, %v452
    %v477 = vpack.c.b16 %v455, %v454
    %v478 = vpack.c.b16 %v457, %v456
    %v479 = vpack.c.b16 %v459, %v458
    %v480 = vpack.c.b16 %v461, %v460
    %v481 = vpack.c.b16 %v463, %v462
    %v482 = vpack.c.b16 %v465, %v464
    %v483 = vpack.c.b16 %v467, %v466
    %500 = vmatprep.subr.bf16.mxu0 0
    %501 = vmatpush1.bf16.msra.mxu0 %v468
    %502 = vmatprep.subr.bf16.mxu0 0
    %503 = vmatpush1.bf16.msra.mxu0 %v469
    %504 = vmatprep.subr.bf16.mxu0 0
    %505 = vmatpush1.bf16.msra.mxu0 %v470
    %506 = vmatprep.subr.bf16.mxu0 0
    %507 = vmatpush1.bf16.msra.mxu0 %v471
    %508 = vmatprep.subr.bf16.mxu0 0
    %509 = vmatpush1.bf16.msra.mxu0 %v472
    %510 = vmatprep.subr.bf16.mxu0 0
    %511 = vmatpush1.bf16.msra.mxu0 %v473
    %512 = vmatprep.subr.bf16.mxu0 0
    %513 = vmatpush1.bf16.msra.mxu0 %v474
    %514 = vmatprep.subr.bf16.mxu0 0
    %515 = vmatpush1.bf16.msra.mxu0 %v475
    %516 = vmatprep.subr.bf16.mxu0 0
    %517 = vmatpush1.bf16.msra.mxu0 %v476
    %518 = vmatprep.subr.bf16.mxu0 0
    %519 = vmatpush1.bf16.msra.mxu0 %v477
    %520 = vmatprep.subr.bf16.mxu0 0
    %521 = vmatpush1.bf16.msra.mxu0 %v478
    %522 = vmatprep.subr.bf16.mxu0 0
    %523 = vmatpush1.bf16.msra.mxu0 %v479
    %524 = vmatprep.subr.bf16.mxu0 0
    %525 = vmatpush1.bf16.msra.mxu0 %v480
    %526 = vmatprep.subr.bf16.mxu0 0
    %527 = vmatpush1.bf16.msra.mxu0 %v481
    %528 = vmatprep.subr.bf16.mxu0 0
    %529 = vmatpush1.bf16.msra.mxu0 %v482
    %530 = vmatprep.subr.bf16.mxu0 0
    %531 = vmatpush1.bf16.msra.mxu0 %v483
    %532 = vmatprep.mubr.bf16.mxu0 %v364
    %533 = vmatmul.mubr.bf16.gmra.mrb[0].mxu0 %v363
    %v534 = vpop.f32.mrb[0].mxu0
    %v535 = vadd.f32 %v402, %v534
    %v536 = vpop.f32.mrb[0].mxu0
    %v537 = vpop.f32.mrb[0].mxu0
    %v538 = vadd.f32 %v402, %v537
    %v539 = vpop.f32.mrb[0].mxu0
    %540 = vdwg.mxu0
    %v541 = vmin.f32 %v535, 20.0
    %v542 = vmin.f32 %v538, 20.0
    %v543 = vmul.f32 %v541, 1.442695
    %v544 = vpow.pop %v543
    %v545 = vmul.f32 %v542, 1.442695
    %v546 = vpow.pop %v545
    %v547 = vadd.f32 %v544, 2.0
    %v548 = vadd.f32 %v546, 2.0
    %v549 = vmul.f32 %v544, %v547
    %v550 = vmul.f32 %v546, %v548
    %v551 = vmul.f32 %v535, %v549
    %v552 = vmul.f32 %v538, %v550
    %v553 = vadd.f32 %v549, 2.0
    %v554 = vadd.f32 %v550, 2.0
    %v555 = vrcp.pop %v553
    %v556 = vrcp.pop %v554
    %v557 = vmul.f32 %v551, %v555
    %v558 = vmul.f32 %v552, %v556
    %v559 = vpack.c.bf16 %v558, %v557
    %v560 = vld [vmem:[#allocation6] sm:$0xff]
    %v561 = vld [vmem:[#allocation6 + $0x8] sm:$0xff]
    %v562 = vld [vmem:[#allocation6 + $0x10] sm:$0xff]
    %v563 = vld [vmem:[#allocation6 + $0x18] sm:$0xff]
    %v564 = vld [vmem:[#allocation6 + $0x20] sm:$0xff]
    %v565 = vld [vmem:[#allocation6 + $0x28] sm:$0xff]
    %v566 = vld [vmem:[#allocation6 + $0x30] sm:$0xff]
    %v567 = vld [vmem:[#allocation6 + $0x38] sm:$0xff]
    %v568 = vld [vmem:[#allocation6 + $0x40] sm:$0xff]
    %v569 = vld [vmem:[#allocation6 + $0x48] sm:$0xff]
    %v570 = vld [vmem:[#allocation6 + $0x50] sm:$0xff]
    %v571 = vld [vmem:[#allocation6 + $0x58] sm:$0xff]
    %v572 = vld [vmem:[#allocation6 + $0x60] sm:$0xff]
    %v573 = vld [vmem:[#allocation6 + $0x68] sm:$0xff]
    %v574 = vld [vmem:[#allocation6 + $0x70] sm:$0xff]
    %v575 = vld [vmem:[#allocation6 + $0x78] sm:$0xff]
    %v576 = vld [vmem:[%s0 + $0x8] sm:$0xff]
    %v577 = vld [vmem:[%s0 + $0x10] sm:$0xff]
    %v578 = vld [vmem:[%s0 + $0x48] sm:$0xff]
    %v579 = vld [vmem:[%s0 + $0x50] sm:$0xff]
    %v580 = vld [vmem:[#allocation2 + $0x100] sm:$0xff]
    %v581 = vld [vmem:[#allocation2 + $0x108] sm:$0xff]
    %v582 = vld [vmem:[#allocation2 + $0x110] sm:$0xff]
    %v583 = vld [vmem:[#allocation2 + $0x118] sm:$0xff]
    %v584 = vld [vmem:[#allocation2 + $0x120] sm:$0xff]
    %v585 = vld [vmem:[#allocation2 + $0x128] sm:$0xff]
    %v586 = vld [vmem:[#allocation2 + $0x130] sm:$0xff]
    %v587 = vld [vmem:[#allocation2 + $0x138] sm:$0xff]
    %v588 = vld [vmem:[#allocation2 + $0x140] sm:$0xff]
    %v589 = vld [vmem:[#allocation2 + $0x148] sm:$0xff]
    %v590 = vld [vmem:[#allocation2 + $0x150] sm:$0xff]
    %v591 = vld [vmem:[#allocation2 + $0x158] sm:$0xff]
    %v592 = vld [vmem:[#allocation2 + $0x160] sm:$0xff]
    %v593 = vld [vmem:[#allocation2 + $0x168] sm:$0xff]
    %v594 = vld [vmem:[#allocation2 + $0x170] sm:$0xff]
    %v595 = vld [vmem:[#allocation2 + $0x178] sm:$0xff]
    %v596 = vld [vmem:[#allocation2 + $0x180] sm:$0xff]
    %v597 = vld [vmem:[#allocation2 + $0x188] sm:$0xff]
    %v598 = vld [vmem:[#allocation2 + $0x190] sm:$0xff]
    %v599 = vld [vmem:[#allocation2 + $0x198] sm:$0xff]
    %v600 = vld [vmem:[#allocation2 + $0x1a0] sm:$0xff]
    %v601 = vld [vmem:[#allocation2 + $0x1a8] sm:$0xff]
    %v602 = vld [vmem:[#allocation2 + $0x1b0] sm:$0xff]
    %v603 = vld [vmem:[#allocation2 + $0x1b8] sm:$0xff]
    %v604 = vld [vmem:[#allocation2 + $0x1c0] sm:$0xff]
    %v605 = vld [vmem:[#allocation2 + $0x1c8] sm:$0xff]
    %v606 = vld [vmem:[#allocation2 + $0x1d0] sm:$0xff]
    %v607 = vld [vmem:[#allocation2 + $0x1d8] sm:$0xff]
    %v608 = vld [vmem:[#allocation2 + $0x1e0] sm:$0xff]
    %v609 = vld [vmem:[#allocation2 + $0x1e8] sm:$0xff]
    %v610 = vld [vmem:[#allocation2 + $0x1f0] sm:$0xff]
    %v611 = vld [vmem:[#allocation2 + $0x1f8] sm:$0xff]
    %v612 = vld [vmem:[#allocation2 + $0x200] sm:$0xff]
    %v613 = vld [vmem:[#allocation2 + $0x208] sm:$0xff]
    %v614 = vld [vmem:[#allocation2 + $0x210] sm:$0xff]
    %v615 = vld [vmem:[#allocation2 + $0x218] sm:$0xff]
    %v616 = vld [vmem:[#allocation2 + $0x220] sm:$0xff]
    %v617 = vld [vmem:[#allocation2 + $0x228] sm:$0xff]
    %v618 = vld [vmem:[#allocation2 + $0x230] sm:$0xff]
    %v619 = vld [vmem:[#allocation2 + $0x238] sm:$0xff]
    %v620 = vld [vmem:[#allocation2 + $0x240] sm:$0xff]
    %v621 = vld [vmem:[#allocation2 + $0x248] sm:$0xff]
    %v622 = vld [vmem:[#allocation2 + $0x250] sm:$0xff]
    %v623 = vld [vmem:[#allocation2 + $0x258] sm:$0xff]
    %v624 = vld [vmem:[#allocation2 + $0x260] sm:$0xff]
    %v625 = vld [vmem:[#allocation2 + $0x268] sm:$0xff]
    %v626 = vld [vmem:[#allocation2 + $0x270] sm:$0xff]
    %v627 = vld [vmem:[#allocation2 + $0x278] sm:$0xff]
    %v628 = vld [vmem:[#allocation2 + $0x280] sm:$0xff]
    %v629 = vld [vmem:[#allocation2 + $0x288] sm:$0xff]
    %v630 = vld [vmem:[#allocation2 + $0x290] sm:$0xff]
    %v631 = vld [vmem:[#allocation2 + $0x298] sm:$0xff]
    %v632 = vld [vmem:[#allocation2 + $0x2a0] sm:$0xff]
    %v633 = vld [vmem:[#allocation2 + $0x2a8] sm:$0xff]
    %v634 = vld [vmem:[#allocation2 + $0x2b0] sm:$0xff]
    %v635 = vld [vmem:[#allocation2 + $0x2b8] sm:$0xff]
    %v636 = vld [vmem:[#allocation2 + $0x2c0] sm:$0xff]
    %v637 = vld [vmem:[#allocation2 + $0x2c8] sm:$0xff]
    %v638 = vld [vmem:[#allocation2 + $0x2d0] sm:$0xff]
    %v639 = vld [vmem:[#allocation2 + $0x2d8] sm:$0xff]
    %v640 = vld [vmem:[#allocation2 + $0x2e0] sm:$0xff]
    %v641 = vld [vmem:[#allocation2 + $0x2e8] sm:$0xff]
    %v642 = vld [vmem:[#allocation2 + $0x2f0] sm:$0xff]
    %v643 = vld [vmem:[#allocation2 + $0x2f8] sm:$0xff]
    %v644 = vld [vmem:[%s2 + $0x2] sm:$0x3]
    %v646 = vlaneseq
    %v647 = vshrl.u32 %v646, 7
    %v648 = vsub.s32 0, %v647
    %v649 = vrot.slane %v644, %v648
    %v650 = vlaneseq
    %v651 = vshrl.u32 %v650, 7
    %v652 = vsub.s32 1, %v651
    %v653 = vrot.slane %v644, %v652
    %v660 = vunpack.c.l.b16 %v576
    %v661 = vunpack.c.h.b16 %v576
    %v662 = vunpack.c.l.b16 %v577
    %v663 = vunpack.c.h.b16 %v577
    %v664 = vunpack.c.l.b16 %v578
    %v665 = vunpack.c.h.b16 %v578
    %v666 = vunpack.c.l.b16 %v579
    %v667 = vunpack.c.h.b16 %v579
    %v668 = vpack.c.b16 %v664, %v660
    %v669 = vpack.c.b16 %v665, %v661
    %v670 = vpack.c.b16 %v666, %v662
    %v671 = vpack.c.b16 %v667, %v663
    %v740 = vunpack.c.l.b16 %v580
    %v741 = vunpack.c.h.b16 %v580
    %v742 = vunpack.c.l.b16 %v581
    %v743 = vunpack.c.h.b16 %v581
    %v744 = vunpack.c.l.b16 %v582
    %v745 = vunpack.c.h.b16 %v582
    %v746 = vunpack.c.l.b16 %v583
    %v747 = vunpack.c.h.b16 %v583
    %v748 = vunpack.c.l.b16 %v584
    %v749 = vunpack.c.h.b16 %v584
    %v750 = vunpack.c.l.b16 %v585
    %v751 = vunpack.c.h.b16 %v585
    %v752 = vunpack.c.l.b16 %v586
    %v753 = vunpack.c.h.b16 %v586
    %v754 = vunpack.c.l.b16 %v587
    %v755 = vunpack.c.h.b16 %v587
    %v756 = vunpack.c.l.b16 %v588
    %v757 = vunpack.c.h.b16 %v588
    %v758 = vunpack.c.l.b16 %v589
    %v759 = vunpack.c.h.b16 %v589
    %v760 = vunpack.c.l.b16 %v590
    %v761 = vunpack.c.h.b16 %v590
    %v762 = vunpack.c.l.b16 %v591
    %v763 = vunpack.c.h.b16 %v591
    %v764 = vunpack.c.l.b16 %v592
    %v765 = vunpack.c.h.b16 %v592
    %v766 = vunpack.c.l.b16 %v593
    %v767 = vunpack.c.h.b16 %v593
    %v768 = vunpack.c.l.b16 %v594
    %v769 = vunpack.c.h.b16 %v594
    %v770 = vunpack.c.l.b16 %v595
    %v771 = vunpack.c.h.b16 %v595
    %v772 = vunpack.c.l.b16 %v596
    %v773 = vunpack.c.h.b16 %v596
    %v774 = vunpack.c.l.b16 %v597
    %v775 = vunpack.c.h.b16 %v597
    %v776 = vunpack.c.l.b16 %v598
    %v777 = vunpack.c.h.b16 %v598
    %v778 = vunpack.c.l.b16 %v599
    %v779 = vunpack.c.h.b16 %v599
    %v780 = vunpack.c.l.b16 %v600
    %v781 = vunpack.c.h.b16 %v600
    %v782 = vunpack.c.l.b16 %v601
    %v783 = vunpack.c.h.b16 %v601
    %v784 = vunpack.c.l.b16 %v602
    %v785 = vunpack.c.h.b16 %v602
    %v786 = vunpack.c.l.b16 %v603
    %v787 = vunpack.c.h.b16 %v603
    %v788 = vunpack.c.l.b16 %v604
    %v789 = vunpack.c.h.b16 %v604
    %v790 = vunpack.c.l.b16 %v605
    %v791 = vunpack.c.h.b16 %v605
    %v792 = vunpack.c.l.b16 %v606
    %v793 = vunpack.c.h.b16 %v606
    %v794 = vunpack.c.l.b16 %v607
    %v795 = vunpack.c.h.b16 %v607
    %v796 = vunpack.c.l.b16 %v608
    %v797 = vunpack.c.h.b16 %v608
    %v798 = vunpack.c.l.b16 %v609
    %v799 = vunpack.c.h.b16 %v609
    %v800 = vunpack.c.l.b16 %v610
    %v801 = vunpack.c.h.b16 %v610
    %v802 = vunpack.c.l.b16 %v611
    %v803 = vunpack.c.h.b16 %v611
    %v804 = vunpack.c.l.b16 %v612
    %v805 = vunpack.c.h.b16 %v612
    %v806 = vunpack.c.l.b16 %v613
    %v807 = vunpack.c.h.b16 %v613
    %v808 = vunpack.c.l.b16 %v614
    %v809 = vunpack.c.h.b16 %v614
    %v810 = vunpack.c.l.b16 %v615
    %v811 = vunpack.c.h.b16 %v615
    %v812 = vunpack.c.l.b16 %v616
    %v813 = vunpack.c.h.b16 %v616
    %v814 = vunpack.c.l.b16 %v617
    %v815 = vunpack.c.h.b16 %v617
    %v816 = vunpack.c.l.b16 %v618
    %v817 = vunpack.c.h.b16 %v618
    %v818 = vunpack.c.l.b16 %v619
    %v819 = vunpack.c.h.b16 %v619
    %v820 = vunpack.c.l.b16 %v620
    %v821 = vunpack.c.h.b16 %v620
    %v822 = vunpack.c.l.b16 %v621
    %v823 = vunpack.c.h.b16 %v621
    %v824 = vunpack.c.l.b16 %v622
    %v825 = vunpack.c.h.b16 %v622
    %v826 = vunpack.c.l.b16 %v623
    %v827 = vunpack.c.h.b16 %v623
    %v828 = vunpack.c.l.b16 %v624
    %v829 = vunpack.c.h.b16 %v624
    %v830 = vunpack.c.l.b16 %v625
    %v831 = vunpack.c.h.b16 %v625
    %v832 = vunpack.c.l.b16 %v626
    %v833 = vunpack.c.h.b16 %v626
    %v834 = vunpack.c.l.b16 %v627
    %v835 = vunpack.c.h.b16 %v627
    %v836 = vunpack.c.l.b16 %v628
    %v837 = vunpack.c.h.b16 %v628
    %v838 = vunpack.c.l.b16 %v629
    %v839 = vunpack.c.h.b16 %v629
    %v840 = vunpack.c.l.b16 %v630
    %v841 = vunpack.c.h.b16 %v630
    %v842 = vunpack.c.l.b16 %v631
    %v843 = vunpack.c.h.b16 %v631
    %v844 = vunpack.c.l.b16 %v632
    %v845 = vunpack.c.h.b16 %v632
    %v846 = vunpack.c.l.b16 %v633
    %v847 = vunpack.c.h.b16 %v633
    %v848 = vunpack.c.l.b16 %v634
    %v849 = vunpack.c.h.b16 %v634
    %v850 = vunpack.c.l.b16 %v635
    %v851 = vunpack.c.h.b16 %v635
    %v852 = vunpack.c.l.b16 %v636
    %v853 = vunpack.c.h.b16 %v636
    %v854 = vunpack.c.l.b16 %v637
    %v855 = vunpack.c.h.b16 %v637
    %v856 = vunpack.c.l.b16 %v638
    %v857 = vunpack.c.h.b16 %v638
    %v858 = vunpack.c.l.b16 %v639
    %v859 = vunpack.c.h.b16 %v639
    %v860 = vunpack.c.l.b16 %v640
    %v861 = vunpack.c.h.b16 %v640
    %v862 = vunpack.c.l.b16 %v641
    %v863 = vunpack.c.h.b16 %v641
    %v864 = vunpack.c.l.b16 %v642
    %v865 = vunpack.c.h.b16 %v642
    %v866 = vunpack.c.l.b16 %v643
    %v867 = vunpack.c.h.b16 %v643
    %v868 = vpack.c.b16 %v742, %v740
    %v869 = vpack.c.b16 %v743, %v741
    %v870 = vpack.c.b16 %v746, %v744
    %v871 = vpack.c.b16 %v747, %v745
    %v872 = vpack.c.b16 %v750, %v748
    %v873 = vpack.c.b16 %v751, %v749
    %v874 = vpack.c.b16 %v754, %v752
    %v875 = vpack.c.b16 %v755, %v753
    %v876 = vpack.c.b16 %v758, %v756
    %v877 = vpack.c.b16 %v759, %v757
    %v878 = vpack.c.b16 %v762, %v760
    %v879 = vpack.c.b16 %v763, %v761
    %v880 = vpack.c.b16 %v766, %v764
    %v881 = vpack.c.b16 %v767, %v765
    %v882 = vpack.c.b16 %v770, %v768
    %v883 = vpack.c.b16 %v771, %v769
    %v884 = vpack.c.b16 %v774, %v772
    %v885 = vpack.c.b16 %v775, %v773
    %v886 = vpack.c.b16 %v778, %v776
    %v887 = vpack.c.b16 %v779, %v777
    %v888 = vpack.c.b16 %v782, %v780
    %v889 = vpack.c.b16 %v783, %v781
    %v890 = vpack.c.b16 %v786, %v784
    %v891 = vpack.c.b16 %v787, %v785
    %v892 = vpack.c.b16 %v790, %v788
    %v893 = vpack.c.b16 %v791, %v789
    %v894 = vpack.c.b16 %v794, %v792
    %v895 = vpack.c.b16 %v795, %v793
    %v896 = vpack.c.b16 %v798, %v796
    %v897 = vpack.c.b16 %v799, %v797
    %v898 = vpack.c.b16 %v802, %v800
    %v899 = vpack.c.b16 %v803, %v801
    %v900 = vpack.c.b16 %v806, %v804
    %v901 = vpack.c.b16 %v807, %v805
    %v902 = vpack.c.b16 %v810, %v808
    %v903 = vpack.c.b16 %v811, %v809
    %v904 = vpack.c.b16 %v814, %v812
    %v905 = vpack.c.b16 %v815, %v813
    %v906 = vpack.c.b16 %v818, %v816
    %v907 = vpack.c.b16 %v819, %v817
    %v908 = vpack.c.b16 %v822, %v820
    %v909 = vpack.c.b16 %v823, %v821
    %v910 = vpack.c.b16 %v826, %v824
    %v911 = vpack.c.b16 %v827, %v825
    %v912 = vpack.c.b16 %v830, %v828
    %v913 = vpack.c.b16 %v831, %v829
    %v914 = vpack.c.b16 %v834, %v832
    %v915 = vpack.c.b16 %v835, %v833
    %v916 = vpack.c.b16 %v838, %v836
    %v917 = vpack.c.b16 %v839, %v837
    %v918 = vpack.c.b16 %v842, %v840
    %v919 = vpack.c.b16 %v843, %v841
    %v920 = vpack.c.b16 %v846, %v844
    %v921 = vpack.c.b16 %v847, %v845
    %v922 = vpack.c.b16 %v850, %v848
    %v923 = vpack.c.b16 %v851, %v849
    %v924 = vpack.c.b16 %v854, %v852
    %v925 = vpack.c.b16 %v855, %v853
    %v926 = vpack.c.b16 %v858, %v856
    %v927 = vpack.c.b16 %v859, %v857
    %v928 = vpack.c.b16 %v862, %v860
    %v929 = vpack.c.b16 %v863, %v861
    %v930 = vpack.c.b16 %v866, %v864
    %v931 = vpack.c.b16 %v867, %v865
    %996 = vmatprep.subr.bf16.mxu0 %v869
    %997 = vmatpush1.bf16.msra.mxu0 %v868
    %998 = vmatprep.subr.bf16.mxu0 %v871
    %999 = vmatpush1.bf16.msra.mxu0 %v870
    %1000 = vmatprep.subr.bf16.mxu0 %v873
    %1001 = vmatpush1.bf16.msra.mxu0 %v872
    %1002 = vmatprep.subr.bf16.mxu0 %v875
    %1003 = vmatpush1.bf16.msra.mxu0 %v874
    %1004 = vmatprep.subr.bf16.mxu0 %v877
    %1005 = vmatpush1.bf16.msra.mxu0 %v876
    %1006 = vmatprep.subr.bf16.mxu0 %v879
    %1007 = vmatpush1.bf16.msra.mxu0 %v878
    %1008 = vmatprep.subr.bf16.mxu0 %v881
    %1009 = vmatpush1.bf16.msra.mxu0 %v880
    %1010 = vmatprep.subr.bf16.mxu0 %v883
    %1011 = vmatpush1.bf16.msra.mxu0 %v882
    %1012 = vmatprep.subr.bf16.mxu0 %v885
    %1013 = vmatpush1.bf16.msra.mxu0 %v884
    %1014 = vmatprep.subr.bf16.mxu0 %v887
    %1015 = vmatpush1.bf16.msra.mxu0 %v886
    %1016 = vmatprep.subr.bf16.mxu0 %v889
    %1017 = vmatpush1.bf16.msra.mxu0 %v888
    %1018 = vmatprep.subr.bf16.mxu0 %v891
    %1019 = vmatpush1.bf16.msra.mxu0 %v890
    %1020 = vmatprep.subr.bf16.mxu0 %v893
    %1021 = vmatpush1.bf16.msra.mxu0 %v892
    %1022 = vmatprep.subr.bf16.mxu0 %v895
    %1023 = vmatpush1.bf16.msra.mxu0 %v894
    %1024 = vmatprep.subr.bf16.mxu0 %v897
    %1025 = vmatpush1.bf16.msra.mxu0 %v896
    %1026 = vmatprep.subr.bf16.mxu0 %v899
    %1027 = vmatpush1.bf16.msra.mxu0 %v898
    %1028 = vmatprep.mubr.bf16.mxu0 %v669
    %1029 = vmatmul.mubr.bf16.gmra.mrb[0].mxu0 %v668
    %v1030 = vpop.f32.mrb[0].mxu0
    %v1031 = vadd.f32 %v649, %v1030
    %v1032 = vpop.f32.mrb[0].mxu0
    %v1033 = vadd.f32 %v653, %v1032
    %v1034 = vpop.f32.mrb[0].mxu0
    %v1035 = vadd.f32 %v649, %v1034
    %v1036 = vpop.f32.mrb[0].mxu0
    %v1037 = vadd.f32 %v653, %v1036
    %1038 = vdwg.mxu0
    %1039 = vmatprep.subr.bf16.mxu0 %v901
    %1040 = vmatpush1.bf16.msra.mxu0 %v900
    %1041 = vmatprep.subr.bf16.mxu0 %v903
    %1042 = vmatpush1.bf16.msra.mxu0 %v902
    %1043 = vmatprep.subr.bf16.mxu0 %v905
    %1044 = vmatpush1.bf16.msra.mxu0 %v904
    %1045 = vmatprep.subr.bf16.mxu0 %v907
    %1046 = vmatpush1.bf16.msra.mxu0 %v906
    %1047 = vmatprep.subr.bf16.mxu0 %v909
    %1048 = vmatpush1.bf16.msra.mxu0 %v908
    %1049 = vmatprep.subr.bf16.mxu0 %v911
    %1050 = vmatpush1.bf16.msra.mxu0 %v910
    %1051 = vmatprep.subr.bf16.mxu0 %v913
    %1052 = vmatpush1.bf16.msra.mxu0 %v912
    %1053 = vmatprep.subr.bf16.mxu0 %v915
    %1054 = vmatpush1.bf16.msra.mxu0 %v914
    %1055 = vmatprep.subr.bf16.mxu0 %v917
    %1056 = vmatpush1.bf16.msra.mxu0 %v916
    %1057 = vmatprep.subr.bf16.mxu0 %v919
    %1058 = vmatpush1.bf16.msra.mxu0 %v918
    %1059 = vmatprep.subr.bf16.mxu0 %v921
    %1060 = vmatpush1.bf16.msra.mxu0 %v920
    %1061 = vmatprep.subr.bf16.mxu0 %v923
    %1062 = vmatpush1.bf16.msra.mxu0 %v922
    %1063 = vmatprep.subr.bf16.mxu0 %v925
    %1064 = vmatpush1.bf16.msra.mxu0 %v924
    %1065 = vmatprep.subr.bf16.mxu0 %v927
    %1066 = vmatpush1.bf16.msra.mxu0 %v926
    %1067 = vmatprep.subr.bf16.mxu0 %v929
    %1068 = vmatpush1.bf16.msra.mxu0 %v928
    %1069 = vmatprep.subr.bf16.mxu0 %v931
    %1070 = vmatpush1.bf16.msra.mxu0 %v930
    %1071 = vmatprep.mubr.bf16.mxu0 %v671
    %1072 = vmatmul.mubr.bf16.gmra.mrb[0].mxu0 %v670
    %v1073 = vpop.f32.mrb[0].mxu0
    %v1074 = vadd.f32 %v1031, %v1073
    %v1075 = vpop.f32.mrb[0].mxu0
    %v1076 = vadd.f32 %v1033, %v1075
    %v1077 = vpop.f32.mrb[0].mxu0
    %v1078 = vadd.f32 %v1035, %v1077
    %v1079 = vpop.f32.mrb[0].mxu0
    %v1080 = vadd.f32 %v1037, %v1079
    %1081 = vdwg.mxu0
    %v1082 = vmin.f32 %v1074, 20.0
    %v1083 = vmin.f32 %v1076, 20.0
    %v1084 = vmin.f32 %v1078, 20.0
    %v1085 = vmin.f32 %v1080, 20.0
    %v1086 = vmul.f32 %v1082, 1.442695
    %v1087 = vpow.pop %v1086
    %v1088 = vmul.f32 %v1083, 1.442695
    %v1089 = vpow.pop %v1088
    %v1090 = vmul.f32 %v1084, 1.442695
    %v1091 = vpow.pop %v1090
    %v1092 = vmul.f32 %v1085, 1.442695
    %v1093 = vpow.pop %v1092
    %v1094 = vadd.f32 %v1087, 2.0
    %v1095 = vadd.f32 %v1089, 2.0
    %v1096 = vadd.f32 %v1091, 2.0
    %v1097 = vadd.f32 %v1093, 2.0
    %v1098 = vmul.f32 %v1087, %v1094
    %v1099 = vmul.f32 %v1089, %v1095
    %v1100 = vmul.f32 %v1091, %v1096
    %v1101 = vmul.f32 %v1093, %v1097
    %v1102 = vmul.f32 %v1074, %v1098
    %v1103 = vmul.f32 %v1076, %v1099
    %v1104 = vmul.f32 %v1078, %v1100
    %v1105 = vmul.f32 %v1080, %v1101
    %v1106 = vadd.f32 %v1098, 2.0
    %v1107 = vadd.f32 %v1099, 2.0
    %v1108 = vadd.f32 %v1100, 2.0
    %v1109 = vadd.f32 %v1101, 2.0
    %v1110 = vrcp.pop %v1106
    %v1111 = vrcp.pop %v1107
    %v1112 = vrcp.pop %v1108
    %v1113 = vrcp.pop %v1109
    %v1114 = vmul.f32 %v1102, %v1110
    %v1115 = vmul.f32 %v1103, %v1111
    %v1116 = vmul.f32 %v1104, %v1112
    %v1117 = vmul.f32 %v1105, %v1113
    %v1118 = vpack.c.bf16 %v1116, %v1114
    %v1119 = vpack.c.bf16 %v1117, %v1115
    %s1120 = scalar_lea.vmem [#allocation4], 128
    %v1121 = vld [vmem:[%s1120] sm:$0xf]
    %v1122 = vld [vmem:[%s1120 + $0x4] sm:$0xf]
    %v1123 = vld [vmem:[%s1120 + $0x8] sm:$0xf]
    %v1124 = vld [vmem:[%s1120 + $0xc] sm:$0xf]
    %v1125 = vld [vmem:[%s1120 + $0x10] sm:$0xf]
    %v1126 = vld [vmem:[%s1120 + $0x14] sm:$0xf]
    %v1127 = vld [vmem:[%s1120 + $0x18] sm:$0xf]
    %v1128 = vld [vmem:[%s1120 + $0x1c] sm:$0xf]
    %v1129 = vld [vmem:[%s1120 + $0x20] sm:$0xf]
    %v1130 = vld [vmem:[%s1120 + $0x24] sm:$0xf]
    %v1131 = vld [vmem:[%s1120 + $0x28] sm:$0xf]
    %v1132 = vld [vmem:[%s1120 + $0x2c] sm:$0xf]
    %v1133 = vld [vmem:[%s1120 + $0x30] sm:$0xf]
    %v1134 = vld [vmem:[%s1120 + $0x34] sm:$0xf]
    %v1135 = vld [vmem:[%s1120 + $0x38] sm:$0xf]
    %v1136 = vld [vmem:[%s1120 + $0x3c] sm:$0xf]
    %v1137 = vld [vmem:[%s1120 + $0x40] sm:$0xf]
    %v1138 = vld [vmem:[%s1120 + $0x44] sm:$0xf]
    %v1139 = vld [vmem:[%s1120 + $0x48] sm:$0xf]
    %v1140 = vld [vmem:[%s1120 + $0x4c] sm:$0xf]
    %v1141 = vld [vmem:[%s1120 + $0x50] sm:$0xf]
    %v1142 = vld [vmem:[%s1120 + $0x54] sm:$0xf]
    %v1143 = vld [vmem:[%s1120 + $0x58] sm:$0xf]
    %v1144 = vld [vmem:[%s1120 + $0x5c] sm:$0xf]
    %v1145 = vld [vmem:[%s1120 + $0x60] sm:$0xf]
    %v1146 = vld [vmem:[%s1120 + $0x64] sm:$0xf]
    %v1147 = vld [vmem:[%s1120 + $0x68] sm:$0xf]
    %v1148 = vld [vmem:[%s1120 + $0x6c] sm:$0xf]
    %v1149 = vld [vmem:[%s1120 + $0x70] sm:$0xf]
    %v1150 = vld [vmem:[%s1120 + $0x74] sm:$0xf]
    %v1151 = vld [vmem:[%s1120 + $0x78] sm:$0xf]
    %v1152 = vld [vmem:[%s1120 + $0x7c] sm:$0xf]
    %v1153 = vld [vmem:[%s4 + $0x1] sm:$0x1]
    %v1155 = vlaneseq
    %v1156 = vshrl.u32 %v1155, 7
    %v1157 = vsub.s32 0, %v1156
    %v1158 = vrot.slane %v1153, %v1157
    %v1192 = vunpack.c.l.b16 %v1121
    %v1193 = vunpack.c.l.b16 %v1122
    %v1194 = vunpack.c.l.b16 %v1123
    %v1195 = vunpack.c.l.b16 %v1124
    %v1196 = vunpack.c.l.b16 %v1125
    %v1197 = vunpack.c.l.b16 %v1126
    %v1198 = vunpack.c.l.b16 %v1127
    %v1199 = vunpack.c.l.b16 %v1128
    %v1200 = vunpack.c.l.b16 %v1129
    %v1201 = vunpack.c.l.b16 %v1130
    %v1202 = vunpack.c.l.b16 %v1131
    %v1203 = vunpack.c.l.b16 %v1132
    %v1204 = vunpack.c.l.b16 %v1133
    %v1205 = vunpack.c.l.b16 %v1134
    %v1206 = vunpack.c.l.b16 %v1135
    %v1207 = vunpack.c.l.b16 %v1136
    %v1208 = vunpack.c.l.b16 %v1137
    %v1209 = vunpack.c.l.b16 %v1138
    %v1210 = vunpack.c.l.b16 %v1139
    %v1211 = vunpack.c.l.b16 %v1140
    %v1212 = vunpack.c.l.b16 %v1141
    %v1213 = vunpack.c.l.b16 %v1142
    %v1214 = vunpack.c.l.b16 %v1143
    %v1215 = vunpack.c.l.b16 %v1144
    %v1216 = vunpack.c.l.b16 %v1145
    %v1217 = vunpack.c.l.b16 %v1146
    %v1218 = vunpack.c.l.b16 %v1147
    %v1219 = vunpack.c.l.b16 %v1148
    %v1220 = vunpack.c.l.b16 %v1149
    %v1221 = vunpack.c.l.b16 %v1150
    %v1222 = vunpack.c.l.b16 %v1151
    %v1223 = vunpack.c.l.b16 %v1152
    %v1224 = vpack.c.b16 %v1193, %v1192
    %v1225 = vpack.c.b16 %v1195, %v1194
    %v1226 = vpack.c.b16 %v1197, %v1196
    %v1227 = vpack.c.b16 %v1199, %v1198
    %v1228 = vpack.c.b16 %v1201, %v1200
    %v1229 = vpack.c.b16 %v1203, %v1202
    %v1230 = vpack.c.b16 %v1205, %v1204
    %v1231 = vpack.c.b16 %v1207, %v1206
    %v1232 = vpack.c.b16 %v1209, %v1208
    %v1233 = vpack.c.b16 %v1211, %v1210
    %v1234 = vpack.c.b16 %v1213, %v1212
    %v1235 = vpack.c.b16 %v1215, %v1214
    %v1236 = vpack.c.b16 %v1217, %v1216
    %v1237 = vpack.c.b16 %v1219, %v1218
    %v1238 = vpack.c.b16 %v1221, %v1220
    %v1239 = vpack.c.b16 %v1223, %v1222
    %1256 = vmatprep.subr.bf16.mxu0 0
    %1257 = vmatpush1.bf16.msra.mxu0 %v1224
    %1258 = vmatprep.subr.bf16.mxu0 0
    %1259 = vmatpush1.bf16.msra.mxu0 %v1225
    %1260 = vmatprep.subr.bf16.mxu0 0
    %1261 = vmatpush1.bf16.msra.mxu0 %v1226
    %1262 = vmatprep.subr.bf16.mxu0 0
    %1263 = vmatpush1.bf16.msra.mxu0 %v1227
    %1264 = vmatprep.subr.bf16.mxu0 0
    %1265 = vmatpush1.bf16.msra.mxu0 %v1228
    %1266 = vmatprep.subr.bf16.mxu0 0
    %1267 = vmatpush1.bf16.msra.mxu0 %v1229
    %1268 = vmatprep.subr.bf16.mxu0 0
    %1269 = vmatpush1.bf16.msra.mxu0 %v1230
    %1270 = vmatprep.subr.bf16.mxu0 0
    %1271 = vmatpush1.bf16.msra.mxu0 %v1231
    %1272 = vmatprep.subr.bf16.mxu0 0
    %1273 = vmatpush1.bf16.msra.mxu0 %v1232
    %1274 = vmatprep.subr.bf16.mxu0 0
    %1275 = vmatpush1.bf16.msra.mxu0 %v1233
    %1276 = vmatprep.subr.bf16.mxu0 0
    %1277 = vmatpush1.bf16.msra.mxu0 %v1234
    %1278 = vmatprep.subr.bf16.mxu0 0
    %1279 = vmatpush1.bf16.msra.mxu0 %v1235
    %1280 = vmatprep.subr.bf16.mxu0 0
    %1281 = vmatpush1.bf16.msra.mxu0 %v1236
    %1282 = vmatprep.subr.bf16.mxu0 0
    %1283 = vmatpush1.bf16.msra.mxu0 %v1237
    %1284 = vmatprep.subr.bf16.mxu0 0
    %1285 = vmatpush1.bf16.msra.mxu0 %v1238
    %1286 = vmatprep.subr.bf16.mxu0 0
    %1287 = vmatpush1.bf16.msra.mxu0 %v1239
    %1288 = vmatprep.mubr.bf16.mxu0 %v1119
    %1289 = vmatmul.mubr.bf16.gmra.mrb[0].mxu0 %v1118
    %v1290 = vpop.f32.mrb[0].mxu0
    %v1291 = vadd.f32 %v1158, %v1290
    %v1292 = vpop.f32.mrb[0].mxu0
    %v1293 = vpop.f32.mrb[0].mxu0
    %v1294 = vadd.f32 %v1158, %v1293
    %v1295 = vpop.f32.mrb[0].mxu0
    %1296 = vdwg.mxu0
    %v1297 = vmin.f32 %v1291, 20.0
    %v1298 = vmin.f32 %v1294, 20.0
    %v1299 = vmul.f32 %v1297, 1.442695
    %v1300 = vpow.pop %v1299
    %v1301 = vmul.f32 %v1298, 1.442695
    %v1302 = vpow.pop %v1301
    %v1303 = vadd.f32 %v1300, 2.0
    %v1304 = vadd.f32 %v1302, 2.0
    %v1305 = vmul.f32 %v1300, %v1303
    %v1306 = vmul.f32 %v1302, %v1304
    %v1307 = vmul.f32 %v1291, %v1305
    %v1308 = vmul.f32 %v1294, %v1306
    %v1309 = vadd.f32 %v1305, 2.0
    %v1310 = vadd.f32 %v1306, 2.0
    %v1311 = vrcp.pop %v1309
    %v1312 = vrcp.pop %v1310
    %v1313 = vmul.f32 %v1307, %v1311
    %v1314 = vmul.f32 %v1308, %v1312
    %v1315 = vpack.c.bf16 %v1314, %v1313
    %s1316 = scalar_lea.vmem [#allocation6], 128
    %v1317 = vld [vmem:[%s1316] sm:$0xff]
    %v1318 = vld [vmem:[%s1316 + $0x8] sm:$0xff]
    %v1319 = vld [vmem:[%s1316 + $0x10] sm:$0xff]
    %v1320 = vld [vmem:[%s1316 + $0x18] sm:$0xff]
    %v1321 = vld [vmem:[%s1316 + $0x20] sm:$0xff]
    %v1322 = vld [vmem:[%s1316 + $0x28] sm:$0xff]
    %v1323 = vld [vmem:[%s1316 + $0x30] sm:$0xff]
    %v1324 = vld [vmem:[%s1316 + $0x38] sm:$0xff]
    %v1325 = vld [vmem:[%s1316 + $0x40] sm:$0xff]
    %v1326 = vld [vmem:[%s1316 + $0x48] sm:$0xff]
    %v1327 = vld [vmem:[%s1316 + $0x50] sm:$0xff]
    %v1328 = vld [vmem:[%s1316 + $0x58] sm:$0xff]
    %v1329 = vld [vmem:[%s1316 + $0x60] sm:$0xff]
    %v1330 = vld [vmem:[%s1316 + $0x68] sm:$0xff]
    %v1331 = vld [vmem:[%s1316 + $0x70] sm:$0xff]
    %v1332 = vld [vmem:[%s1316 + $0x78] sm:$0xff]
    %v1349 = vunpack.c.l.b16 %v1317
    %v1350 = vunpack.c.h.b16 %v1317
    %v1351 = vunpack.c.l.b16 %v1318
    %v1352 = vunpack.c.h.b16 %v1318
    %v1353 = vunpack.c.l.b16 %v1319
    %v1354 = vunpack.c.h.b16 %v1319
    %v1355 = vunpack.c.l.b16 %v1320
    %v1356 = vunpack.c.h.b16 %v1320
    %v1357 = vunpack.c.l.b16 %v1321
    %v1358 = vunpack.c.h.b16 %v1321
    %v1359 = vunpack.c.l.b16 %v1322
    %v1360 = vunpack.c.h.b16 %v1322
    %v1361 = vunpack.c.l.b16 %v1323
    %v1362 = vunpack.c.h.b16 %v1323
    %v1363 = vunpack.c.l.b16 %v1324
    %v1364 = vunpack.c.h.b16 %v1324
    %v1365 = vunpack.c.l.b16 %v1325
    %v1366 = vunpack.c.h.b16 %v1325
    %v1367 = vunpack.c.l.b16 %v1326
    %v1368 = vunpack.c.h.b16 %v1326
    %v1369 = vunpack.c.l.b16 %v1327
    %v1370 = vunpack.c.h.b16 %v1327
    %v1371 = vunpack.c.l.b16 %v1328
    %v1372 = vunpack.c.h.b16 %v1328
    %v1373 = vunpack.c.l.b16 %v1329
    %v1374 = vunpack.c.h.b16 %v1329
    %v1375 = vunpack.c.l.b16 %v1330
    %v1376 = vunpack.c.h.b16 %v1330
    %v1377 = vunpack.c.l.b16 %v1331
    %v1378 = vunpack.c.h.b16 %v1331
    %v1379 = vunpack.c.l.b16 %v1332
    %v1380 = vunpack.c.h.b16 %v1332
    %v1381 = vpack.c.b16 %v1351, %v1349
    %v1382 = vpack.c.b16 %v1352, %v1350
    %v1383 = vpack.c.b16 %v1355, %v1353
    %v1384 = vpack.c.b16 %v1356, %v1354
    %v1385 = vpack.c.b16 %v1359, %v1357
    %v1386 = vpack.c.b16 %v1360, %v1358
    %v1387 = vpack.c.b16 %v1363, %v1361
    %v1388 = vpack.c.b16 %v1364, %v1362
    %v1389 = vpack.c.b16 %v1367, %v1365
    %v1390 = vpack.c.b16 %v1368, %v1366
    %v1391 = vpack.c.b16 %v1371, %v1369
    %v1392 = vpack.c.b16 %v1372, %v1370
    %v1393 = vpack.c.b16 %v1375, %v1373
    %v1394 = vpack.c.b16 %v1376, %v1374
    %v1395 = vpack.c.b16 %v1379, %v1377
    %v1396 = vpack.c.b16 %v1380, %v1378
    %1413 = vmatprep.subr.bf16.mxu0 %v1382
    %1414 = vmatpush1.bf16.msra.mxu0 %v1381
    %1415 = vmatprep.subr.bf16.mxu0 %v1384
    %1416 = vmatpush1.bf16.msra.mxu0 %v1383
    %1417 = vmatprep.subr.bf16.mxu0 %v1386
    %1418 = vmatpush1.bf16.msra.mxu0 %v1385
    %1419 = vmatprep.subr.bf16.mxu0 %v1388
    %1420 = vmatpush1.bf16.msra.mxu0 %v1387
    %1421 = vmatprep.subr.bf16.mxu0 %v1390
    %1422 = vmatpush1.bf16.msra.mxu0 %v1389
    %1423 = vmatprep.subr.bf16.mxu0 %v1392
    %1424 = vmatpush1.bf16.msra.mxu0 %v1391
    %1425 = vmatprep.subr.bf16.mxu0 %v1394
    %1426 = vmatpush1.bf16.msra.mxu0 %v1393
    %1427 = vmatprep.subr.bf16.mxu0 %v1396
    %1428 = vmatpush1.bf16.msra.mxu0 %v1395
    %1429 = vmatprep.subr.bf16.mxu0 0
    %1430 = vmatpush1.bf16.msra.mxu0 0
    %1431 = vmatprep.subr.bf16.mxu0 0
    %1432 = vmatpush1.bf16.msra.mxu0 0
    %1433 = vmatprep.subr.bf16.mxu0 0
    %1434 = vmatpush1.bf16.msra.mxu0 0
    %1435 = vmatprep.subr.bf16.mxu0 0
    %1436 = vmatpush1.bf16.msra.mxu0 0
    %1437 = vmatprep.subr.bf16.mxu0 0
    %1438 = vmatpush1.bf16.msra.mxu0 0
    %1439 = vmatprep.subr.bf16.mxu0 0
    %1440 = vmatpush1.bf16.msra.mxu0 0
    %1441 = vmatprep.subr.bf16.mxu0 0
    %1442 = vmatpush1.bf16.msra.mxu0 0
    %1443 = vmatprep.subr.bf16.mxu0 0
    %1444 = vmatpush1.bf16.msra.mxu0 0
    %1445 = vmatprep.mubr.bf16.mxu0 0
    %1446 = vmatmul.mubr.bf16.gmra.mrb[0].mxu0 %v1315
    %v1447 = vpop.f32.mrb[0].mxu0
    %v1448 = vadd.f32 0.0, %v1447
    %v1449 = vpop.f32.mrb[0].mxu0
    %v1450 = vadd.f32 0.0, %v1449
    %v1451 = vpop.f32.mrb[0].mxu0
    %v1452 = vadd.f32 0.0, %v1451
    %v1453 = vpop.f32.mrb[0].mxu0
    %v1454 = vadd.f32 0.0, %v1453
    %1455 = vdwg.mxu0
    %v1472 = vunpack.c.l.b16 %v560
    %v1473 = vunpack.c.h.b16 %v560
    %v1474 = vunpack.c.l.b16 %v561
    %v1475 = vunpack.c.h.b16 %v561
    %v1476 = vunpack.c.l.b16 %v562
    %v1477 = vunpack.c.h.b16 %v562
    %v1478 = vunpack.c.l.b16 %v563
    %v1479 = vunpack.c.h.b16 %v563
    %v1480 = vunpack.c.l.b16 %v564
    %v1481 = vunpack.c.h.b16 %v564
    %v1482 = vunpack.c.l.b16 %v565
    %v1483 = vunpack.c.h.b16 %v565
    %v1484 = vunpack.c.l.b16 %v566
    %v1485 = vunpack.c.h.b16 %v566
    %v1486 = vunpack.c.l.b16 %v567
    %v1487 = vunpack.c.h.b16 %v567
    %v1488 = vunpack.c.l.b16 %v568
    %v1489 = vunpack.c.h.b16 %v568
    %v1490 = vunpack.c.l.b16 %v569
    %v1491 = vunpack.c.h.b16 %v569
    %v1492 = vunpack.c.l.b16 %v570
    %v1493 = vunpack.c.h.b16 %v570
    %v1494 = vunpack.c.l.b16 %v571
    %v1495 = vunpack.c.h.b16 %v571
    %v1496 = vunpack.c.l.b16 %v572
    %v1497 = vunpack.c.h.b16 %v572
    %v1498 = vunpack.c.l.b16 %v573
    %v1499 = vunpack.c.h.b16 %v573
    %v1500 = vunpack.c.l.b16 %v574
    %v1501 = vunpack.c.h.b16 %v574
    %v1502 = vunpack.c.l.b16 %v575
    %v1503 = vunpack.c.h.b16 %v575
    %v1504 = vpack.c.b16 %v1474, %v1472
    %v1505 = vpack.c.b16 %v1475, %v1473
    %v1506 = vpack.c.b16 %v1478, %v1476
    %v1507 = vpack.c.b16 %v1479, %v1477
    %v1508 = vpack.c.b16 %v1482, %v1480
    %v1509 = vpack.c.b16 %v1483, %v1481
    %v1510 = vpack.c.b16 %v1486, %v1484
    %v1511 = vpack.c.b16 %v1487, %v1485
    %v1512 = vpack.c.b16 %v1490, %v1488
    %v1513 = vpack.c.b16 %v1491, %v1489
    %v1514 = vpack.c.b16 %v1494, %v1492
    %v1515 = vpack.c.b16 %v1495, %v1493
    %v1516 = vpack.c.b16 %v1498, %v1496
    %v1517 = vpack.c.b16 %v1499, %v1497
    %v1518 = vpack.c.b16 %v1502, %v1500
    %v1519 = vpack.c.b16 %v1503, %v1501
    %1536 = vmatprep.subr.bf16.mxu0 %v1505
    %1537 = vmatpush1.bf16.msra.mxu0 %v1504
    %1538 = vmatprep.subr.bf16.mxu0 %v1507
    %1539 = vmatpush1.bf16.msra.mxu0 %v1506
    %1540 = vmatprep.subr.bf16.mxu0 %v1509
    %1541 = vmatpush1.bf16.msra.mxu0 %v1508
    %1542 = vmatprep.subr.bf16.mxu0 %v1511
    %1543 = vmatpush1.bf16.msra.mxu0 %v1510
    %1544 = vmatprep.subr.bf16.mxu0 %v1513
    %1545 = vmatpush1.bf16.msra.mxu0 %v1512
    %1546 = vmatprep.subr.bf16.mxu0 %v1515
    %1547 = vmatpush1.bf16.msra.mxu0 %v1514
    %1548 = vmatprep.subr.bf16.mxu0 %v1517
    %1549 = vmatpush1.bf16.msra.mxu0 %v1516
    %1550 = vmatprep.subr.bf16.mxu0 %v1519
    %1551 = vmatpush1.bf16.msra.mxu0 %v1518
    %1552 = vmatprep.subr.bf16.mxu0 0
    %1553 = vmatpush1.bf16.msra.mxu0 0
    %1554 = vmatprep.subr.bf16.mxu0 0
    %1555 = vmatpush1.bf16.msra.mxu0 0
    %1556 = vmatprep.subr.bf16.mxu0 0
    %1557 = vmatpush1.bf16.msra.mxu0 0
    %1558 = vmatprep.subr.bf16.mxu0 0
    %1559 = vmatpush1.bf16.msra.mxu0 0
    %1560 = vmatprep.subr.bf16.mxu0 0
    %1561 = vmatpush1.bf16.msra.mxu0 0
    %1562 = vmatprep.subr.bf16.mxu0 0
    %1563 = vmatpush1.bf16.msra.mxu0 0
    %1564 = vmatprep.subr.bf16.mxu0 0
    %1565 = vmatpush1.bf16.msra.mxu0 0
    %1566 = vmatprep.subr.bf16.mxu0 0
    %1567 = vmatpush1.bf16.msra.mxu0 0
    %1568 = vmatprep.mubr.bf16.mxu0 0
    %1569 = vmatmul.mubr.bf16.gmra.mrb[0].mxu0 %v559
    %v1570 = vpop.f32.mrb[0].mxu0
    %v1571 = vadd.f32 %v1448, %v1570
    %v1572 = vpop.f32.mrb[0].mxu0
    %v1573 = vadd.f32 %v1450, %v1572
    %v1574 = vpop.f32.mrb[0].mxu0
    %v1575 = vadd.f32 %v1452, %v1574
    %v1576 = vpop.f32.mrb[0].mxu0
    %v1577 = vadd.f32 %v1454, %v1576
    %1578 = vdwg.mxu0
    %v1579 = vld [vmem:[%s0 + $0x18] sm:$0xff]
    %v1580 = vld [vmem:[%s0 + $0x20] sm:$0xff]
    %v1581 = vld [vmem:[%s0 + $0x28] sm:$0xff]
    %v1582 = vld [vmem:[%s0 + $0x30] sm:$0xf]
    %v1583 = vld [vmem:[%s0 + $0x58] sm:$0xff]
    %v1584 = vld [vmem:[%s0 + $0x60] sm:$0xff]
    %v1585 = vld [vmem:[%s0 + $0x68] sm:$0xff]
    %v1586 = vld [vmem:[%s0 + $0x70] sm:$0xf]
    %v1587 = vld [vmem:[#allocation2 + $0x300] sm:$0xff]
    %v1588 = vld [vmem:[#allocation2 + $0x308] sm:$0xff]
    %v1589 = vld [vmem:[#allocation2 + $0x310] sm:$0xff]
    %v1590 = vld [vmem:[#allocation2 + $0x318] sm:$0xff]
    %v1591 = vld [vmem:[#allocation2 + $0x320] sm:$0xff]
    %v1592 = vld [vmem:[#allocation2 + $0x328] sm:$0xff]
    %v1593 = vld [vmem:[#allocation2 + $0x330] sm:$0xff]
    %v1594 = vld [vmem:[#allocation2 + $0x338] sm:$0xff]
    %v1595 = vld [vmem:[#allocation2 + $0x340] sm:$0xff]
    %v1596 = vld [vmem:[#allocation2 + $0x348] sm:$0xff]
    %v1597 = vld [vmem:[#allocation2 + $0x350] sm:$0xff]
    %v1598 = vld [vmem:[#allocation2 + $0x358] sm:$0xff]
    %v1599 = vld [vmem:[#allocation2 + $0x360] sm:$0xff]
    %v1600 = vld [vmem:[#allocation2 + $0x368] sm:$0xff]
    %v1601 = vld [vmem:[#allocation2 + $0x370] sm:$0xff]
    %v1602 = vld [vmem:[#allocation2 + $0x378] sm:$0xff]
    %v1603 = vld [vmem:[#allocation2 + $0x380] sm:$0xff]
    %v1604 = vld [vmem:[#allocation2 + $0x388] sm:$0xff]
    %v1605 = vld [vmem:[#allocation2 + $0x390] sm:$0xff]
    %v1606 = vld [vmem:[#allocation2 + $0x398] sm:$0xff]
    %v1607 = vld [vmem:[#allocation2 + $0x3a0] sm:$0xff]
    %v1608 = vld [vmem:[#allocation2 + $0x3a8] sm:$0xff]
    %v1609 = vld [vmem:[#allocation2 + $0x3b0] sm:$0xff]
    %v1610 = vld [vmem:[#allocation2 + $0x3b8] sm:$0xff]
    %v1611 = vld [vmem:[#allocation2 + $0x3c0] sm:$0xff]
    %v1612 = vld [vmem:[#allocation2 + $0x3c8] sm:$0xff]
    %v1613 = vld [vmem:[#allocation2 + $0x3d0] sm:$0xff]
    %v1614 = vld [vmem:[#allocation2 + $0x3d8] sm:$0xff]
    %v1615 = vld [vmem:[#allocation2 + $0x3e0] sm:$0xff]
    %v1616 = vld [vmem:[#allocation2 + $0x3e8] sm:$0xff]
    %v1617 = vld [vmem:[#allocation2 + $0x3f0] sm:$0xff]
    %v1618 = vld [vmem:[#allocation2 + $0x3f8] sm:$0xff]
    %v1619 = vld [vmem:[#allocation2 + $0x400] sm:$0xff]
    %v1620 = vld [vmem:[#allocation2 + $0x408] sm:$0xff]
    %v1621 = vld [vmem:[#allocation2 + $0x410] sm:$0xff]
    %v1622 = vld [vmem:[#allocation2 + $0x418] sm:$0xff]
    %v1623 = vld [vmem:[#allocation2 + $0x420] sm:$0xff]
    %v1624 = vld [vmem:[#allocation2 + $0x428] sm:$0xff]
    %v1625 = vld [vmem:[#allocation2 + $0x430] sm:$0xff]
    %v1626 = vld [vmem:[#allocation2 + $0x438] sm:$0xff]
    %v1627 = vld [vmem:[#allocation2 + $0x440] sm:$0xff]
    %v1628 = vld [vmem:[#allocation2 + $0x448] sm:$0xff]
    %v1629 = vld [vmem:[#allocation2 + $0x450] sm:$0xff]
    %v1630 = vld [vmem:[#allocation2 + $0x458] sm:$0xff]
    %v1631 = vld [vmem:[#allocation2 + $0x460] sm:$0xff]
    %v1632 = vld [vmem:[#allocation2 + $0x468] sm:$0xff]
    %v1633 = vld [vmem:[#allocation2 + $0x470] sm:$0xff]
    %v1634 = vld [vmem:[#allocation2 + $0x478] sm:$0xff]
    %v1635 = vld [vmem:[#allocation2 + $0x480] sm:$0xff]
    %v1636 = vld [vmem:[#allocation2 + $0x488] sm:$0xff]
    %v1637 = vld [vmem:[#allocation2 + $0x490] sm:$0xff]
    %v1638 = vld [vmem:[#allocation2 + $0x498] sm:$0xff]
    %v1639 = vld [vmem:[#allocation2 + $0x4a0] sm:$0xff]
    %v1640 = vld [vmem:[#allocation2 + $0x4a8] sm:$0xff]
    %v1641 = vld [vmem:[#allocation2 + $0x4b0] sm:$0xff]
    %v1642 = vld [vmem:[#allocation2 + $0x4b8] sm:$0xff]
    %v1643 = vld [vmem:[#allocation2 + $0x4c0] sm:$0xff]
    %v1644 = vld [vmem:[#allocation2 + $0x4c8] sm:$0xff]
    %v1645 = vld [vmem:[#allocation2 + $0x4d0] sm:$0xff]
    %v1646 = vld [vmem:[#allocation2 + $0x4d8] sm:$0xff]
    %v1647 = vld [vmem:[#allocation2 + $0x4e0] sm:$0xff]
    %v1648 = vld [vmem:[#allocation2 + $0x4e8] sm:$0xff]
    %v1649 = vld [vmem:[#allocation2 + $0x4f0] sm:$0xff]
    %v1650 = vld [vmem:[#allocation2 + $0x4f8] sm:$0xff]
    %v1651 = vld [vmem:[#allocation2 + $0x500] sm:$0xff]
    %v1652 = vld [vmem:[#allocation2 + $0x508] sm:$0xff]
    %v1653 = vld [vmem:[#allocation2 + $0x510] sm:$0xff]
    %v1654 = vld [vmem:[#allocation2 + $0x518] sm:$0xff]
    %v1655 = vld [vmem:[#allocation2 + $0x520] sm:$0xff]
    %v1656 = vld [vmem:[#allocation2 + $0x528] sm:$0xff]
    %v1657 = vld [vmem:[#allocation2 + $0x530] sm:$0xff]
    %v1658 = vld [vmem:[#allocation2 + $0x538] sm:$0xff]
    %v1659 = vld [vmem:[#allocation2 + $0x540] sm:$0xff]
    %v1660 = vld [vmem:[#allocation2 + $0x548] sm:$0xff]
    %v1661 = vld [vmem:[#allocation2 + $0x550] sm:$0xff]
    %v1662 = vld [vmem:[#allocation2 + $0x558] sm:$0xff]
    %v1663 = vld [vmem:[#allocation2 + $0x560] sm:$0xff]
    %v1664 = vld [vmem:[#allocation2 + $0x568] sm:$0xff]
    %v1665 = vld [vmem:[#allocation2 + $0x570] sm:$0xff]
    %v1666 = vld [vmem:[#allocation2 + $0x578] sm:$0xff]
    %v1667 = vld [vmem:[#allocation2 + $0x580] sm:$0xff]
    %v1668 = vld [vmem:[#allocation2 + $0x588] sm:$0xff]
    %v1669 = vld [vmem:[#allocation2 + $0x590] sm:$0xff]
    %v1670 = vld [vmem:[#allocation2 + $0x598] sm:$0xff]
    %v1671 = vld [vmem:[#allocation2 + $0x5a0] sm:$0xff]
    %v1672 = vld [vmem:[#allocation2 + $0x5a8] sm:$0xff]
    %v1673 = vld [vmem:[#allocation2 + $0x5b0] sm:$0xff]
    %v1674 = vld [vmem:[#allocation2 + $0x5b8] sm:$0xff]
    %v1675 = vld [vmem:[#allocation2 + $0x5c0] sm:$0xff]
    %v1676 = vld [vmem:[#allocation2 + $0x5c8] sm:$0xff]
    %v1677 = vld [vmem:[#allocation2 + $0x5d0] sm:$0xff]
    %v1678 = vld [vmem:[#allocation2 + $0x5d8] sm:$0xff]
    %v1679 = vld [vmem:[#allocation2 + $0x5e0] sm:$0xff]
    %v1680 = vld [vmem:[#allocation2 + $0x5e8] sm:$0xff]
    %v1681 = vld [vmem:[#allocation2 + $0x5f0] sm:$0xff]
    %v1682 = vld [vmem:[#allocation2 + $0x5f8] sm:$0xff]
    %v1683 = vld [vmem:[#allocation2 + $0x600] sm:$0xff]
    %v1684 = vld [vmem:[#allocation2 + $0x608] sm:$0xff]
    %v1685 = vld [vmem:[#allocation2 + $0x610] sm:$0xff]
    %v1686 = vld [vmem:[#allocation2 + $0x618] sm:$0xff]
    %v1687 = vld [vmem:[#allocation2 + $0x620] sm:$0xff]
    %v1688 = vld [vmem:[#allocation2 + $0x628] sm:$0xff]
    %v1689 = vld [vmem:[#allocation2 + $0x630] sm:$0xff]
    %v1690 = vld [vmem:[#allocation2 + $0x638] sm:$0xff]
    %v1691 = vld [vmem:[#allocation2 + $0x640] sm:$0xff]
    %v1692 = vld [vmem:[#allocation2 + $0x648] sm:$0xff]
    %v1693 = vld [vmem:[#allocation2 + $0x650] sm:$0xff]
    %v1694 = vld [vmem:[#allocation2 + $0x658] sm:$0xff]
    %v1695 = vld [vmem:[#allocation2 + $0x660] sm:$0xff]
    %v1696 = vld [vmem:[#allocation2 + $0x668] sm:$0xff]
    %v1697 = vld [vmem:[#allocation2 + $0x670] sm:$0xff]
    %v1698 = vld [vmem:[#allocation2 + $0x678] sm:$0xff]
    %v1699 = vld [vmem:[%s2 + $0x4] sm:$0x3]
    %v1701 = vlaneseq
    %v1702 = vshrl.u32 %v1701, 7
    %v1703 = vsub.s32 0, %v1702
    %v1704 = vrot.slane %v1699, %v1703
    %v1705 = vlaneseq
    %v1706 = vshrl.u32 %v1705, 7
    %v1707 = vsub.s32 1, %v1706
    %v1708 = vrot.slane %v1699, %v1707
    %v1719 = vunpack.c.l.b16 %v1579
    %v1720 = vunpack.c.h.b16 %v1579
    %v1721 = vunpack.c.l.b16 %v1580
    %v1722 = vunpack.c.h.b16 %v1580
    %v1723 = vunpack.c.l.b16 %v1581
    %v1724 = vunpack.c.h.b16 %v1581
    %v1725 = vunpack.c.l.b16 %v1582
    %v1726 = vunpack.c.l.b16 %v1583
    %v1727 = vunpack.c.h.b16 %v1583
    %v1728 = vunpack.c.l.b16 %v1584
    %v1729 = vunpack.c.h.b16 %v1584
    %v1730 = vunpack.c.l.b16 %v1585
    %v1731 = vunpack.c.h.b16 %v1585
    %v1732 = vunpack.c.l.b16 %v1586
    %v1733 = vpack.c.b16 %v1726, %v1719
    %v1734 = vpack.c.b16 %v1727, %v1720
    %v1735 = vpack.c.b16 %v1728, %v1721
    %v1736 = vpack.c.b16 %v1729, %v1722
    %v1737 = vpack.c.b16 %v1730, %v1723
    %v1738 = vpack.c.b16 %v1731, %v1724
    %v1739 = vpack.c.b16 %v1732, %v1725
    %v1859 = vunpack.c.l.b16 %v1587
    %v1860 = vunpack.c.h.b16 %v1587
    %v1861 = vunpack.c.l.b16 %v1588
    %v1862 = vunpack.c.h.b16 %v1588
    %v1863 = vunpack.c.l.b16 %v1589
    %v1864 = vunpack.c.h.b16 %v1589
    %v1865 = vunpack.c.l.b16 %v1590
    %v1866 = vunpack.c.h.b16 %v1590
    %v1867 = vunpack.c.l.b16 %v1591
    %v1868 = vunpack.c.h.b16 %v1591
    %v1869 = vunpack.c.l.b16 %v1592
    %v1870 = vunpack.c.h.b16 %v1592
    %v1871 = vunpack.c.l.b16 %v1593
    %v1872 = vunpack.c.h.b16 %v1593
    %v1873 = vunpack.c.l.b16 %v1594
    %v1874 = vunpack.c.h.b16 %v1594
    %v1875 = vunpack.c.l.b16 %v1595
    %v1876 = vunpack.c.h.b16 %v1595
    %v1877 = vunpack.c.l.b16 %v1596
    %v1878 = vunpack.c.h.b16 %v1596
    %v1879 = vunpack.c.l.b16 %v1597
    %v1880 = vunpack.c.h.b16 %v1597
    %v1881 = vunpack.c.l.b16 %v1598
    %v1882 = vunpack.c.h.b16 %v1598
    %v1883 = vunpack.c.l.b16 %v1599
    %v1884 = vunpack.c.h.b16 %v1599
    %v1885 = vunpack.c.l.b16 %v1600
    %v1886 = vunpack.c.h.b16 %v1600
    %v1887 = vunpack.c.l.b16 %v1601
    %v1888 = vunpack.c.h.b16 %v1601
    %v1889 = vunpack.c.l.b16 %v1602
    %v1890 = vunpack.c.h.b16 %v1602
    %v1891 = vunpack.c.l.b16 %v1603
    %v1892 = vunpack.c.h.b16 %v1603
    %v1893 = vunpack.c.l.b16 %v1604
    %v1894 = vunpack.c.h.b16 %v1604
    %v1895 = vunpack.c.l.b16 %v1605
    %v1896 = vunpack.c.h.b16 %v1605
    %v1897 = vunpack.c.l.b16 %v1606
    %v1898 = vunpack.c.h.b16 %v1606
    %v1899 = vunpack.c.l.b16 %v1607
    %v1900 = vunpack.c.h.b16 %v1607
    %v1901 = vunpack.c.l.b16 %v1608
    %v1902 = vunpack.c.h.b16 %v1608
    %v1903 = vunpack.c.l.b16 %v1609
    %v1904 = vunpack.c.h.b16 %v1609
    %v1905 = vunpack.c.l.b16 %v1610
    %v1906 = vunpack.c.h.b16 %v1610
    %v1907 = vunpack.c.l.b16 %v1611
    %v1908 = vunpack.c.h.b16 %v1611
    %v1909 = vunpack.c.l.b16 %v1612
    %v1910 = vunpack.c.h.b16 %v1612
    %v1911 = vunpack.c.l.b16 %v1613
    %v1912 = vunpack.c.h.b16 %v1613
    %v1913 = vunpack.c.l.b16 %v1614
    %v1914 = vunpack.c.h.b16 %v1614
    %v1915 = vunpack.c.l.b16 %v1615
    %v1916 = vunpack.c.h.b16 %v1615
    %v1917 = vunpack.c.l.b16 %v1616
    %v1918 = vunpack.c.h.b16 %v1616
    %v1919 = vunpack.c.l.b16 %v1617
    %v1920 = vunpack.c.h.b16 %v1617
    %v1921 = vunpack.c.l.b16 %v1618
    %v1922 = vunpack.c.h.b16 %v1618
    %v1923 = vunpack.c.l.b16 %v1619
    %v1924 = vunpack.c.h.b16 %v1619
    %v1925 = vunpack.c.l.b16 %v1620
    %v1926 = vunpack.c.h.b16 %v1620
    %v1927 = vunpack.c.l.b16 %v1621
    %v1928 = vunpack.c.h.b16 %v1621
    %v1929 = vunpack.c.l.b16 %v1622
    %v1930 = vunpack.c.h.b16 %v1622
    %v1931 = vunpack.c.l.b16 %v1623
    %v1932 = vunpack.c.h.b16 %v1623
    %v1933 = vunpack.c.l.b16 %v1624
    %v1934 = vunpack.c.h.b16 %v1624
    %v1935 = vunpack.c.l.b16 %v1625
    %v1936 = vunpack.c.h.b16 %v1625
    %v1937 = vunpack.c.l.b16 %v1626
    %v1938 = vunpack.c.h.b16 %v1626
    %v1939 = vunpack.c.l.b16 %v1627
    %v1940 = vunpack.c.h.b16 %v1627
    %v1941 = vunpack.c.l.b16 %v1628
    %v1942 = vunpack.c.h.b16 %v1628
    %v1943 = vunpack.c.l.b16 %v1629
    %v1944 = vunpack.c.h.b16 %v1629
    %v1945 = vunpack.c.l.b16 %v1630
    %v1946 = vunpack.c.h.b16 %v1630
    %v1947 = vunpack.c.l.b16 %v1631
    %v1948 = vunpack.c.h.b16 %v1631
    %v1949 = vunpack.c.l.b16 %v1632
    %v1950 = vunpack.c.h.b16 %v1632
    %v1951 = vunpack.c.l.b16 %v1633
    %v1952 = vunpack.c.h.b16 %v1633
    %v1953 = vunpack.c.l.b16 %v1634
    %v1954 = vunpack.c.h.b16 %v1634
    %v1955 = vunpack.c.l.b16 %v1635
    %v1956 = vunpack.c.h.b16 %v1635
    %v1957 = vunpack.c.l.b16 %v1636
    %v1958 = vunpack.c.h.b16 %v1636
    %v1959 = vunpack.c.l.b16 %v1637
    %v1960 = vunpack.c.h.b16 %v1637
    %v1961 = vunpack.c.l.b16 %v1638
    %v1962 = vunpack.c.h.b16 %v1638
    %v1963 = vunpack.c.l.b16 %v1639
    %v1964 = vunpack.c.h.b16 %v1639
    %v1965 = vunpack.c.l.b16 %v1640
    %v1966 = vunpack.c.h.b16 %v1640
    %v1967 = vunpack.c.l.b16 %v1641
    %v1968 = vunpack.c.h.b16 %v1641
    %v1969 = vunpack.c.l.b16 %v1642
    %v1970 = vunpack.c.h.b16 %v1642
    %v1971 = vunpack.c.l.b16 %v1643
    %v1972 = vunpack.c.h.b16 %v1643
    %v1973 = vunpack.c.l.b16 %v1644
    %v1974 = vunpack.c.h.b16 %v1644
    %v1975 = vunpack.c.l.b16 %v1645
    %v1976 = vunpack.c.h.b16 %v1645
    %v1977 = vunpack.c.l.b16 %v1646
    %v1978 = vunpack.c.h.b16 %v1646
    %v1979 = vunpack.c.l.b16 %v1647
    %v1980 = vunpack.c.h.b16 %v1647
    %v1981 = vunpack.c.l.b16 %v1648
    %v1982 = vunpack.c.h.b16 %v1648
    %v1983 = vunpack.c.l.b16 %v1649
    %v1984 = vunpack.c.h.b16 %v1649
    %v1985 = vunpack.c.l.b16 %v1650
    %v1986 = vunpack.c.h.b16 %v1650
    %v1987 = vunpack.c.l.b16 %v1651
    %v1988 = vunpack.c.h.b16 %v1651
    %v1989 = vunpack.c.l.b16 %v1652
    %v1990 = vunpack.c.h.b16 %v1652
    %v1991 = vunpack.c.l.b16 %v1653
    %v1992 = vunpack.c.h.b16 %v1653
    %v1993 = vunpack.c.l.b16 %v1654
    %v1994 = vunpack.c.h.b16 %v1654
    %v1995 = vunpack.c.l.b16 %v1655
    %v1996 = vunpack.c.h.b16 %v1655
    %v1997 = vunpack.c.l.b16 %v1656
    %v1998 = vunpack.c.h.b16 %v1656
    %v1999 = vunpack.c.l.b16 %v1657
    %v2000 = vunpack.c.h.b16 %v1657
    %v2001 = vunpack.c.l.b16 %v1658
    %v2002 = vunpack.c.h.b16 %v1658
    %v2003 = vunpack.c.l.b16 %v1659
    %v2004 = vunpack.c.h.b16 %v1659
    %v2005 = vunpack.c.l.b16 %v1660
    %v2006 = vunpack.c.h.b16 %v1660
    %v2007 = vunpack.c.l.b16 %v1661
    %v2008 = vunpack.c.h.b16 %v1661
    %v2009 = vunpack.c.l.b16 %v1662
    %v2010 = vunpack.c.h.b16 %v1662
    %v2011 = vunpack.c.l.b16 %v1663
    %v2012 = vunpack.c.h.b16 %v1663
    %v2013 = vunpack.c.l.b16 %v1664
    %v2014 = vunpack.c.h.b16 %v1664
    %v2015 = vunpack.c.l.b16 %v1665
    %v2016 = vunpack.c.h.b16 %v1665
    %v2017 = vunpack.c.l.b16 %v1666
    %v2018 = vunpack.c.h.b16 %v1666
    %v2019 = vunpack.c.l.b16 %v1667
    %v2020 = vunpack.c.h.b16 %v1667
    %v2021 = vunpack.c.l.b16 %v1668
    %v2022 = vunpack.c.h.b16 %v1668
    %v2023 = vunpack.c.l.b16 %v1669
    %v2024 = vunpack.c.h.b16 %v1669
    %v2025 = vunpack.c.l.b16 %v1670
    %v2026 = vunpack.c.h.b16 %v1670
    %v2027 = vunpack.c.l.b16 %v1671
    %v2028 = vunpack.c.h.b16 %v1671
    %v2029 = vunpack.c.l.b16 %v1672
    %v2030 = vunpack.c.h.b16 %v1672
    %v2031 = vunpack.c.l.b16 %v1673
    %v2032 = vunpack.c.h.b16 %v1673
    %v2033 = vunpack.c.l.b16 %v1674
    %v2034 = vunpack.c.h.b16 %v1674
    %v2035 = vunpack.c.l.b16 %v1675
    %v2036 = vunpack.c.h.b16 %v1675
    %v2037 = vunpack.c.l.b16 %v1676
    %v2038 = vunpack.c.h.b16 %v1676
    %v2039 = vunpack.c.l.b16 %v1677
    %v2040 = vunpack.c.h.b16 %v1677
    %v2041 = vunpack.c.l.b16 %v1678
    %v2042 = vunpack.c.h.b16 %v1678
    %v2043 = vunpack.c.l.b16 %v1679
    %v2044 = vunpack.c.h.b16 %v1679
    %v2045 = vunpack.c.l.b16 %v1680
    %v2046 = vunpack.c.h.b16 %v1680
    %v2047 = vunpack.c.l.b16 %v1681
    %v2048 = vunpack.c.h.b16 %v1681
    %v2049 = vunpack.c.l.b16 %v1682
    %v2050 = vunpack.c.h.b16 %v1682
    %v2051 = vunpack.c.l.b16 %v1683
    %v2052 = vunpack.c.h.b16 %v1683
    %v2053 = vunpack.c.l.b16 %v1684
    %v2054 = vunpack.c.h.b16 %v1684
    %v2055 = vunpack.c.l.b16 %v1685
    %v2056 = vunpack.c.h.b16 %v1685
    %v2057 = vunpack.c.l.b16 %v1686
    %v2058 = vunpack.c.h.b16 %v1686
    %v2059 = vunpack.c.l.b16 %v1687
    %v2060 = vunpack.c.h.b16 %v1687
    %v2061 = vunpack.c.l.b16 %v1688
    %v2062 = vunpack.c.h.b16 %v1688
    %v2063 = vunpack.c.l.b16 %v1689
    %v2064 = vunpack.c.h.b16 %v1689
    %v2065 = vunpack.c.l.b16 %v1690
    %v2066 = vunpack.c.h.b16 %v1690
    %v2067 = vunpack.c.l.b16 %v1691
    %v2068 = vunpack.c.h.b16 %v1691
    %v2069 = vunpack.c.l.b16 %v1692
    %v2070 = vunpack.c.h.b16 %v1692
    %v2071 = vunpack.c.l.b16 %v1693
    %v2072 = vunpack.c.h.b16 %v1693
    %v2073 = vunpack.c.l.b16 %v1694
    %v2074 = vunpack.c.h.b16 %v1694
    %v2075 = vunpack.c.l.b16 %v1695
    %v2076 = vunpack.c.h.b16 %v1695
    %v2077 = vunpack.c.l.b16 %v1696
    %v2078 = vunpack.c.h.b16 %v1696
    %v2079 = vunpack.c.l.b16 %v1697
    %v2080 = vunpack.c.h.b16 %v1697
    %v2081 = vunpack.c.l.b16 %v1698
    %v2082 = vunpack.c.h.b16 %v1698
    %v2083 = vpack.c.b16 %v1861, %v1859
    %v2084 = vpack.c.b16 %v1862, %v1860
    %v2085 = vpack.c.b16 %v1865, %v1863
    %v2086 = vpack.c.b16 %v1866, %v1864
    %v2087 = vpack.c.b16 %v1869, %v1867
    %v2088 = vpack.c.b16 %v1870, %v1868
    %v2089 = vpack.c.b16 %v1873, %v1871
    %v2090 = vpack.c.b16 %v1874, %v1872
    %v2091 = vpack.c.b16 %v1877, %v1875
    %v2092 = vpack.c.b16 %v1878, %v1876
    %v2093 = vpack.c.b16 %v1881, %v1879
    %v2094 = vpack.c.b16 %v1882, %v1880
    %v2095 = vpack.c.b16 %v1885, %v1883
    %v2096 = vpack.c.b16 %v1886, %v1884
    %v2097 = vpack.c.b16 %v1889, %v1887
    %v2098 = vpack.c.b16 %v1890, %v1888
    %v2099 = vpack.c.b16 %v1893, %v1891
    %v2100 = vpack.c.b16 %v1894, %v1892
    %v2101 = vpack.c.b16 %v1897, %v1895
    %v2102 = vpack.c.b16 %v1898, %v1896
    %v2103 = vpack.c.b16 %v1901, %v1899
    %v2104 = vpack.c.b16 %v1902, %v1900
    %v2105 = vpack.c.b16 %v1905, %v1903
    %v2106 = vpack.c.b16 %v1906, %v1904
    %v2107 = vpack.c.b16 %v1909, %v1907
    %v2108 = vpack.c.b16 %v1910, %v1908
    %v2109 = vpack.c.b16 %v1913, %v1911
    %v2110 = vpack.c.b16 %v1914, %v1912
    %v2111 = vpack.c.b16 %v1917, %v1915
    %v2112 = vpack.c.b16 %v1918, %v1916
    %v2113 = vpack.c.b16 %v1921, %v1919
    %v2114 = vpack.c.b16 %v1922, %v1920
    %v2115 = vpack.c.b16 %v1925, %v1923
    %v2116 = vpack.c.b16 %v1926, %v1924
    %v2117 = vpack.c.b16 %v1929, %v1927
    %v2118 = vpack.c.b16 %v1930, %v1928
    %v2119 = vpack.c.b16 %v1933, %v1931
    %v2120 = vpack.c.b16 %v1934, %v1932
    %v2121 = vpack.c.b16 %v1937, %v1935
    %v2122 = vpack.c.b16 %v1938, %v1936
    %v2123 = vpack.c.b16 %v1941, %v1939
    %v2124 = vpack.c.b16 %v1942, %v1940
    %v2125 = vpack.c.b16 %v1945, %v1943
    %v2126 = vpack.c.b16 %v1946, %v1944
    %v2127 = vpack.c.b16 %v1949, %v1947
    %v2128 = vpack.c.b16 %v1950, %v1948
    %v2129 = vpack.c.b16 %v1953, %v1951
    %v2130 = vpack.c.b16 %v1954, %v1952
    %v2131 = vpack.c.b16 %v1957, %v1955
    %v2132 = vpack.c.b16 %v1958, %v1956
    %v2133 = vpack.c.b16 %v1961, %v1959
    %v2134 = vpack.c.b16 %v1962, %v1960
    %v2135 = vpack.c.b16 %v1965, %v1963
    %v2136 = vpack.c.b16 %v1966, %v1964
    %v2137 = vpack.c.b16 %v1969, %v1967
    %v2138 = vpack.c.b16 %v1970, %v1968
    %v2139 = vpack.c.b16 %v1973, %v1971
    %v2140 = vpack.c.b16 %v1974, %v1972
    %v2141 = vpack.c.b16 %v1977, %v1975
    %v2142 = vpack.c.b16 %v1978, %v1976
    %v2143 = vpack.c.b16 %v1981, %v1979
    %v2144 = vpack.c.b16 %v1982, %v1980
    %v2145 = vpack.c.b16 %v1985, %v1983
    %v2146 = vpack.c.b16 %v1986, %v1984
    %v2147 = vpack.c.b16 %v1989, %v1987
    %v2148 = vpack.c.b16 %v1990, %v1988
    %v2149 = vpack.c.b16 %v1993, %v1991
    %v2150 = vpack.c.b16 %v1994, %v1992
    %v2151 = vpack.c.b16 %v1997, %v1995
    %v2152 = vpack.c.b16 %v1998, %v1996
    %v2153 = vpack.c.b16 %v2001, %v1999
    %v2154 = vpack.c.b16 %v2002, %v2000
    %v2155 = vpack.c.b16 %v2005, %v2003
    %v2156 = vpack.c.b16 %v2006, %v2004
    %v2157 = vpack.c.b16 %v2009, %v2007
    %v2158 = vpack.c.b16 %v2010, %v2008
    %v2159 = vpack.c.b16 %v2013, %v2011
    %v2160 = vpack.c.b16 %v2014, %v2012
    %v2161 = vpack.c.b16 %v2017, %v2015
    %v2162 = vpack.c.b16 %v2018, %v2016
    %v2163 = vpack.c.b16 %v2021, %v2019
    %v2164 = vpack.c.b16 %v2022, %v2020
    %v2165 = vpack.c.b16 %v2025, %v2023
    %v2166 = vpack.c.b16 %v2026, %v2024
    %v2167 = vpack.c.b16 %v2029, %v2027
    %v2168 = vpack.c.b16 %v2030, %v2028
    %v2169 = vpack.c.b16 %v2033, %v2031
    %v2170 = vpack.c.b16 %v2034, %v2032
    %v2171 = vpack.c.b16 %v2037, %v2035
    %v2172 = vpack.c.b16 %v2038, %v2036
    %v2173 = vpack.c.b16 %v2041, %v2039
    %v2174 = vpack.c.b16 %v2042, %v2040
    %v2175 = vpack.c.b16 %v2045, %v2043
    %v2176 = vpack.c.b16 %v2046, %v2044
    %v2177 = vpack.c.b16 %v2049, %v2047
    %v2178 = vpack.c.b16 %v2050, %v2048
    %v2179 = vpack.c.b16 %v2053, %v2051
    %v2180 = vpack.c.b16 %v2054, %v2052
    %v2181 = vpack.c.b16 %v2057, %v2055
    %v2182 = vpack.c.b16 %v2058, %v2056
    %v2183 = vpack.c.b16 %v2061, %v2059
    %v2184 = vpack.c.b16 %v2062, %v2060
    %v2185 = vpack.c.b16 %v2065, %v2063
    %v2186 = vpack.c.b16 %v2066, %v2064
    %v2187 = vpack.c.b16 %v2069, %v2067
    %v2188 = vpack.c.b16 %v2070, %v2068
    %v2189 = vpack.c.b16 %v2073, %v2071
    %v2190 = vpack.c.b16 %v2074, %v2072
    %v2191 = vpack.c.b16 %v2077, %v2075
    %v2192 = vpack.c.b16 %v2078, %v2076
    %v2193 = vpack.c.b16 %v2081, %v2079
    %v2194 = vpack.c.b16 %v2082, %v2080
    %2307 = vmatprep.subr.bf16.mxu0 %v2084
    %2308 = vmatpush1.bf16.msra.mxu0 %v2083
    %2309 = vmatprep.subr.bf16.mxu0 %v2086
    %2310 = vmatpush1.bf16.msra.mxu0 %v2085
    %2311 = vmatprep.subr.bf16.mxu0 %v2088
    %2312 = vmatpush1.bf16.msra.mxu0 %v2087
    %2313 = vmatprep.subr.bf16.mxu0 %v2090
    %2314 = vmatpush1.bf16.msra.mxu0 %v2089
    %2315 = vmatprep.subr.bf16.mxu0 %v2092
    %2316 = vmatpush1.bf16.msra.mxu0 %v2091
    %2317 = vmatprep.subr.bf16.mxu0 %v2094
    %2318 = vmatpush1.bf16.msra.mxu0 %v2093
    %2319 = vmatprep.subr.bf16.mxu0 %v2096
    %2320 = vmatpush1.bf16.msra.mxu0 %v2095
    %2321 = vmatprep.subr.bf16.mxu0 %v2098
    %2322 = vmatpush1.bf16.msra.mxu0 %v2097
    %2323 = vmatprep.subr.bf16.mxu0 %v2100
    %2324 = vmatpush1.bf16.msra.mxu0 %v2099
    %2325 = vmatprep.subr.bf16.mxu0 %v2102
    %2326 = vmatpush1.bf16.msra.mxu0 %v2101
    %2327 = vmatprep.subr.bf16.mxu0 %v2104
    %2328 = vmatpush1.bf16.msra.mxu0 %v2103
    %2329 = vmatprep.subr.bf16.mxu0 %v2106
    %2330 = vmatpush1.bf16.msra.mxu0 %v2105
    %2331 = vmatprep.subr.bf16.mxu0 %v2108
    %2332 = vmatpush1.bf16.msra.mxu0 %v2107
    %2333 = vmatprep.subr.bf16.mxu0 %v2110
    %2334 = vmatpush1.bf16.msra.mxu0 %v2109
    %2335 = vmatprep.subr.bf16.mxu0 %v2112
    %2336 = vmatpush1.bf16.msra.mxu0 %v2111
    %2337 = vmatprep.subr.bf16.mxu0 %v2114
    %2338 = vmatpush1.bf16.msra.mxu0 %v2113
    %2339 = vmatprep.mubr.bf16.mxu0 %v1734
    %2340 = vmatmul.mubr.bf16.gmra.mrb[0].mxu0 %v1733
    %v2341 = vpop.f32.mrb[0].mxu0
    %v2342 = vadd.f32 %v1704, %v2341
    %v2343 = vpop.f32.mrb[0].mxu0
    %v2344 = vadd.f32 %v1708, %v2343
    %v2345 = vpop.f32.mrb[0].mxu0
    %v2346 = vadd.f32 %v1704, %v2345
    %v2347 = vpop.f32.mrb[0].mxu0
    %v2348 = vadd.f32 %v1708, %v2347
    %2349 = vdwg.mxu0
    %2350 = vmatprep.subr.bf16.mxu0 %v2116
    %2351 = vmatpush1.bf16.msra.mxu0 %v2115
    %2352 = vmatprep.subr.bf16.mxu0 %v2118
    %2353 = vmatpush1.bf16.msra.mxu0 %v2117
    %2354 = vmatprep.subr.bf16.mxu0 %v2120
    %2355 = vmatpush1.bf16.msra.mxu0 %v2119
    %2356 = vmatprep.subr.bf16.mxu0 %v2122
    %2357 = vmatpush1.bf16.msra.mxu0 %v2121
    %2358 = vmatprep.subr.bf16.mxu0 %v2124
    %2359 = vmatpush1.bf16.msra.mxu0 %v2123
    %2360 = vmatprep.subr.bf16.mxu0 %v2126
    %2361 = vmatpush1.bf16.msra.mxu0 %v2125
    %2362 = vmatprep.subr.bf16.mxu0 %v2128
    %2363 = vmatpush1.bf16.msra.mxu0 %v2127
    %2364 = vmatprep.subr.bf16.mxu0 %v2130
    %2365 = vmatpush1.bf16.msra.mxu0 %v2129
    %2366 = vmatprep.subr.bf16.mxu0 %v2132
    %2367 = vmatpush1.bf16.msra.mxu0 %v2131
    %2368 = vmatprep.subr.bf16.mxu0 %v2134
    %2369 = vmatpush1.bf16.msra.mxu0 %v2133
    %2370 = vmatprep.subr.bf16.mxu0 %v2136
    %2371 = vmatpush1.bf16.msra.mxu0 %v2135
    %2372 = vmatprep.subr.bf16.mxu0 %v2138
    %2373 = vmatpush1.bf16.msra.mxu0 %v2137
    %2374 = vmatprep.subr.bf16.mxu0 %v2140
    %2375 = vmatpush1.bf16.msra.mxu0 %v2139
    %2376 = vmatprep.subr.bf16.mxu0 %v2142
    %2377 = vmatpush1.bf16.msra.mxu0 %v2141
    %2378 = vmatprep.subr.bf16.mxu0 %v2144
    %2379 = vmatpush1.bf16.msra.mxu0 %v2143
    %2380 = vmatprep.subr.bf16.mxu0 %v2146
    %2381 = vmatpush1.bf16.msra.mxu0 %v2145
    %2382 = vmatprep.mubr.bf16.mxu0 %v1736
    %2383 = vmatmul.mubr.bf16.gmra.mrb[0].mxu0 %v1735
    %v2384 = vpop.f32.mrb[0].mxu0
    %v2385 = vadd.f32 %v2342, %v2384
    %v2386 = vpop.f32.mrb[0].mxu0
    %v2387 = vadd.f32 %v2344, %v2386
    %v2388 = vpop.f32.mrb[0].mxu0
    %v2389 = vadd.f32 %v2346, %v2388
    %v2390 = vpop.f32.mrb[0].mxu0
    %v2391 = vadd.f32 %v2348, %v2390
    %2392 = vdwg.mxu0
    %2393 = vmatprep.subr.bf16.mxu0 %v2148
    %2394 = vmatpush1.bf16.msra.mxu0 %v2147
    %2395 = vmatprep.subr.bf16.mxu0 %v2150
    %2396 = vmatpush1.bf16.msra.mxu0 %v2149
    %2397 = vmatprep.subr.bf16.mxu0 %v2152
    %2398 = vmatpush1.bf16.msra.mxu0 %v2151
    %2399 = vmatprep.subr.bf16.mxu0 %v2154
    %2400 = vmatpush1.bf16.msra.mxu0 %v2153
    %2401 = vmatprep.subr.bf16.mxu0 %v2156
    %2402 = vmatpush1.bf16.msra.mxu0 %v2155
    %2403 = vmatprep.subr.bf16.mxu0 %v2158
    %2404 = vmatpush1.bf16.msra.mxu0 %v2157
    %2405 = vmatprep.subr.bf16.mxu0 %v2160
    %2406 = vmatpush1.bf16.msra.mxu0 %v2159
    %2407 = vmatprep.subr.bf16.mxu0 %v2162
    %2408 = vmatpush1.bf16.msra.mxu0 %v2161
    %2409 = vmatprep.subr.bf16.mxu0 %v2164
    %2410 = vmatpush1.bf16.msra.mxu0 %v2163
    %2411 = vmatprep.subr.bf16.mxu0 %v2166
    %2412 = vmatpush1.bf16.msra.mxu0 %v2165
    %2413 = vmatprep.subr.bf16.mxu0 %v2168
    %2414 = vmatpush1.bf16.msra.mxu0 %v2167
    %2415 = vmatprep.subr.bf16.mxu0 %v2170
    %2416 = vmatpush1.bf16.msra.mxu0 %v2169
    %2417 = vmatprep.subr.bf16.mxu0 %v2172
    %2418 = vmatpush1.bf16.msra.mxu0 %v2171
    %2419 = vmatprep.subr.bf16.mxu0 %v2174
    %2420 = vmatpush1.bf16.msra.mxu0 %v2173
    %2421 = vmatprep.subr.bf16.mxu0 %v2176
    %2422 = vmatpush1.bf16.msra.mxu0 %v2175
    %2423 = vmatprep.subr.bf16.mxu0 %v2178
    %2424 = vmatpush1.bf16.msra.mxu0 %v2177
    %2425 = vmatprep.mubr.bf16.mxu0 %v1738
    %2426 = vmatmul.mubr.bf16.gmra.mrb[0].mxu0 %v1737
    %v2427 = vpop.f32.mrb[0].mxu0
    %v2428 = vadd.f32 %v2385, %v2427
    %v2429 = vpop.f32.mrb[0].mxu0
    %v2430 = vadd.f32 %v2387, %v2429
    %v2431 = vpop.f32.mrb[0].mxu0
    %v2432 = vadd.f32 %v2389, %v2431
    %v2433 = vpop.f32.mrb[0].mxu0
    %v2434 = vadd.f32 %v2391, %v2433
    %2435 = vdwg.mxu0
    %2436 = vmatprep.subr.bf16.mxu0 %v2180
    %2437 = vmatpush1.bf16.msra.mxu0 %v2179
    %2438 = vmatprep.subr.bf16.mxu0 %v2182
    %2439 = vmatpush1.bf16.msra.mxu0 %v2181
    %2440 = vmatprep.subr.bf16.mxu0 %v2184
    %2441 = vmatpush1.bf16.msra.mxu0 %v2183
    %2442 = vmatprep.subr.bf16.mxu0 %v2186
    %2443 = vmatpush1.bf16.msra.mxu0 %v2185
    %2444 = vmatprep.subr.bf16.mxu0 %v2188
    %2445 = vmatpush1.bf16.msra.mxu0 %v2187
    %2446 = vmatprep.subr.bf16.mxu0 %v2190
    %2447 = vmatpush1.bf16.msra.mxu0 %v2189
    %2448 = vmatprep.subr.bf16.mxu0 %v2192
    %2449 = vmatpush1.bf16.msra.mxu0 %v2191
    %2450 = vmatprep.subr.bf16.mxu0 %v2194
    %2451 = vmatpush1.bf16.msra.mxu0 %v2193
    %2452 = vmatprep.subr.bf16.mxu0 0
    %2453 = vmatpush1.bf16.msra.mxu0 0
    %2454 = vmatprep.subr.bf16.mxu0 0
    %2455 = vmatpush1.bf16.msra.mxu0 0
    %2456 = vmatprep.subr.bf16.mxu0 0
    %2457 = vmatpush1.bf16.msra.mxu0 0
    %2458 = vmatprep.subr.bf16.mxu0 0
    %2459 = vmatpush1.bf16.msra.mxu0 0
    %2460 = vmatprep.subr.bf16.mxu0 0
    %2461 = vmatpush1.bf16.msra.mxu0 0
    %2462 = vmatprep.subr.bf16.mxu0 0
    %2463 = vmatpush1.bf16.msra.mxu0 0
    %2464 = vmatprep.subr.bf16.mxu0 0
    %2465 = vmatpush1.bf16.msra.mxu0 0
    %2466 = vmatprep.subr.bf16.mxu0 0
    %2467 = vmatpush1.bf16.msra.mxu0 0
    %2468 = vmatprep.mubr.bf16.mxu0 0
    %2469 = vmatmul.mubr.bf16.gmra.mrb[0].mxu0 %v1739
    %v2470 = vpop.f32.mrb[0].mxu0
    %v2471 = vadd.f32 %v2428, %v2470
    %v2472 = vpop.f32.mrb[0].mxu0
    %v2473 = vadd.f32 %v2430, %v2472
    %v2474 = vpop.f32.mrb[0].mxu0
    %v2475 = vadd.f32 %v2432, %v2474
    %v2476 = vpop.f32.mrb[0].mxu0
    %v2477 = vadd.f32 %v2434, %v2476
    %2478 = vdwg.mxu0
    %v2479 = vmin.f32 %v2471, 20.0
    %v2480 = vmin.f32 %v2473, 20.0
    %v2481 = vmin.f32 %v2475, 20.0
    %v2482 = vmin.f32 %v2477, 20.0
    %v2483 = vmul.f32 %v2479, 1.442695
    %v2484 = vpow.pop %v2483
    %v2485 = vmul.f32 %v2480, 1.442695
    %v2486 = vpow.pop %v2485
    %v2487 = vmul.f32 %v2481, 1.442695
    %v2488 = vpow.pop %v2487
    %v2489 = vmul.f32 %v2482, 1.442695
    %v2490 = vpow.pop %v2489
    %v2491 = vadd.f32 %v2484, 2.0
    %v2492 = vadd.f32 %v2486, 2.0
    %v2493 = vadd.f32 %v2488, 2.0
    %v2494 = vadd.f32 %v2490, 2.0
    %v2495 = vmul.f32 %v2484, %v2491
    %v2496 = vmul.f32 %v2486, %v2492
    %v2497 = vmul.f32 %v2488, %v2493
    %v2498 = vmul.f32 %v2490, %v2494
    %v2499 = vmul.f32 %v2471, %v2495
    %v2500 = vmul.f32 %v2473, %v2496
    %v2501 = vmul.f32 %v2475, %v2497
    %v2502 = vmul.f32 %v2477, %v2498
    %v2503 = vadd.f32 %v2495, 2.0
    %v2504 = vadd.f32 %v2496, 2.0
    %v2505 = vadd.f32 %v2497, 2.0
    %v2506 = vadd.f32 %v2498, 2.0
    %v2507 = vrcp.pop %v2503
    %v2508 = vrcp.pop %v2504
    %v2509 = vrcp.pop %v2505
    %v2510 = vrcp.pop %v2506
    %v2511 = vmul.f32 %v2499, %v2507
    %v2512 = vmul.f32 %v2500, %v2508
    %v2513 = vmul.f32 %v2501, %v2509
    %v2514 = vmul.f32 %v2502, %v2510
    %v2515 = vpack.c.bf16 %v2513, %v2511
    %v2516 = vpack.c.bf16 %v2514, %v2512
    %s2517 = scalar_lea.vmem [#allocation4], 256
    %v2518 = vld [vmem:[%s2517] sm:$0xf]
    %v2519 = vld [vmem:[%s2517 + $0x4] sm:$0xf]
    %v2520 = vld [vmem:[%s2517 + $0x8] sm:$0xf]
    %v2521 = vld [vmem:[%s2517 + $0xc] sm:$0xf]
    %v2522 = vld [vmem:[%s2517 + $0x10] sm:$0xf]
    %v2523 = vld [vmem:[%s2517 + $0x14] sm:$0xf]
    %v2524 = vld [vmem:[%s2517 + $0x18] sm:$0xf]
    %v2525 = vld [vmem:[%s2517 + $0x1c] sm:$0xf]
    %v2526 = vld [vmem:[%s2517 + $0x20] sm:$0xf]
    %v2527 = vld [vmem:[%s2517 + $0x24] sm:$0xf]
    %v2528 = vld [vmem:[%s2517 + $0x28] sm:$0xf]
    %v2529 = vld [vmem:[%s2517 + $0x2c] sm:$0xf]
    %v2530 = vld [vmem:[%s2517 + $0x30] sm:$0xf]
    %v2531 = vld [vmem:[%s2517 + $0x34] sm:$0xf]
    %v2532 = vld [vmem:[%s2517 + $0x38] sm:$0xf]
    %v2533 = vld [vmem:[%s2517 + $0x3c] sm:$0xf]
    %v2534 = vld [vmem:[%s2517 + $0x40] sm:$0xf]
    %v2535 = vld [vmem:[%s2517 + $0x44] sm:$0xf]
    %v2536 = vld [vmem:[%s2517 + $0x48] sm:$0xf]
    %v2537 = vld [vmem:[%s2517 + $0x4c] sm:$0xf]
    %v2538 = vld [vmem:[%s2517 + $0x50] sm:$0xf]
    %v2539 = vld [vmem:[%s2517 + $0x54] sm:$0xf]
    %v2540 = vld [vmem:[%s2517 + $0x58] sm:$0xf]
    %v2541 = vld [vmem:[%s2517 + $0x5c] sm:$0xf]
    %v2542 = vld [vmem:[%s2517 + $0x60] sm:$0xf]
    %v2543 = vld [vmem:[%s2517 + $0x64] sm:$0xf]
    %v2544 = vld [vmem:[%s2517 + $0x68] sm:$0xf]
    %v2545 = vld [vmem:[%s2517 + $0x6c] sm:$0xf]
    %v2546 = vld [vmem:[%s2517 + $0x70] sm:$0xf]
    %v2547 = vld [vmem:[%s2517 + $0x74] sm:$0xf]
    %v2548 = vld [vmem:[%s2517 + $0x78] sm:$0xf]
    %v2549 = vld [vmem:[%s2517 + $0x7c] sm:$0xf]
    %v2550 = vld [vmem:[%s4 + $0x2] sm:$0x1]
    %v2552 = vlaneseq
    %v2553 = vshrl.u32 %v2552, 7
    %v2554 = vsub.s32 0, %v2553
    %v2555 = vrot.slane %v2550, %v2554
    %v2589 = vunpack.c.l.b16 %v2518
    %v2590 = vunpack.c.l.b16 %v2519
    %v2591 = vunpack.c.l.b16 %v2520
    %v2592 = vunpack.c.l.b16 %v2521
    %v2593 = vunpack.c.l.b16 %v2522
    %v2594 = vunpack.c.l.b16 %v2523
    %v2595 = vunpack.c.l.b16 %v2524
    %v2596 = vunpack.c.l.b16 %v2525
    %v2597 = vunpack.c.l.b16 %v2526
    %v2598 = vunpack.c.l.b16 %v2527
    %v2599 = vunpack.c.l.b16 %v2528
    %v2600 = vunpack.c.l.b16 %v2529
    %v2601 = vunpack.c.l.b16 %v2530
    %v2602 = vunpack.c.l.b16 %v2531
    %v2603 = vunpack.c.l.b16 %v2532
    %v2604 = vunpack.c.l.b16 %v2533
    %v2605 = vunpack.c.l.b16 %v2534
    %v2606 = vunpack.c.l.b16 %v2535
    %v2607 = vunpack.c.l.b16 %v2536
    %v2608 = vunpack.c.l.b16 %v2537
    %v2609 = vunpack.c.l.b16 %v2538
    %v2610 = vunpack.c.l.b16 %v2539
    %v2611 = vunpack.c.l.b16 %v2540
    %v2612 = vunpack.c.l.b16 %v2541
    %v2613 = vunpack.c.l.b16 %v2542
    %v2614 = vunpack.c.l.b16 %v2543
    %v2615 = vunpack.c.l.b16 %v2544
    %v2616 = vunpack.c.l.b16 %v2545
    %v2617 = vunpack.c.l.b16 %v2546
    %v2618 = vunpack.c.l.b16 %v2547
    %v2619 = vunpack.c.l.b16 %v2548
    %v2620 = vunpack.c.l.b16 %v2549
    %v2621 = vpack.c.b16 %v2590, %v2589
    %v2622 = vpack.c.b16 %v2592, %v2591
    %v2623 = vpack.c.b16 %v2594, %v2593
    %v2624 = vpack.c.b16 %v2596, %v2595
    %v2625 = vpack.c.b16 %v2598, %v2597
    %v2626 = vpack.c.b16 %v2600, %v2599
    %v2627 = vpack.c.b16 %v2602, %v2601
    %v2628 = vpack.c.b16 %v2604, %v2603
    %v2629 = vpack.c.b16 %v2606, %v2605
    %v2630 = vpack.c.b16 %v2608, %v2607
    %v2631 = vpack.c.b16 %v2610, %v2609
    %v2632 = vpack.c.b16 %v2612, %v2611
    %v2633 = vpack.c.b16 %v2614, %v2613
    %v2634 = vpack.c.b16 %v2616, %v2615
    %v2635 = vpack.c.b16 %v2618, %v2617
    %v2636 = vpack.c.b16 %v2620, %v2619
    %2653 = vmatprep.subr.bf16.mxu0 0
    %2654 = vmatpush1.bf16.msra.mxu0 %v2621
    %2655 = vmatprep.subr.bf16.mxu0 0
    %2656 = vmatpush1.bf16.msra.mxu0 %v2622
    %2657 = vmatprep.subr.bf16.mxu0 0
    %2658 = vmatpush1.bf16.msra.mxu0 %v2623
    %2659 = vmatprep.subr.bf16.mxu0 0
    %2660 = vmatpush1.bf16.msra.mxu0 %v2624
    %2661 = vmatprep.subr.bf16.mxu0 0
    %2662 = vmatpush1.bf16.msra.mxu0 %v2625
    %2663 = vmatprep.subr.bf16.mxu0 0
    %2664 = vmatpush1.bf16.msra.mxu0 %v2626
    %2665 = vmatprep.subr.bf16.mxu0 0
    %2666 = vmatpush1.bf16.msra.mxu0 %v2627
    %2667 = vmatprep.subr.bf16.mxu0 0
    %2668 = vmatpush1.bf16.msra.mxu0 %v2628
    %2669 = vmatprep.subr.bf16.mxu0 0
    %2670 = vmatpush1.bf16.msra.mxu0 %v2629
    %2671 = vmatprep.subr.bf16.mxu0 0
    %2672 = vmatpush1.bf16.msra.mxu0 %v2630
    %2673 = vmatprep.subr.bf16.mxu0 0
    %2674 = vmatpush1.bf16.msra.mxu0 %v2631
    %2675 = vmatprep.subr.bf16.mxu0 0
    %2676 = vmatpush1.bf16.msra.mxu0 %v2632
    %2677 = vmatprep.subr.bf16.mxu0 0
    %2678 = vmatpush1.bf16.msra.mxu0 %v2633
    %2679 = vmatprep.subr.bf16.mxu0 0
    %2680 = vmatpush1.bf16.msra.mxu0 %v2634
    %2681 = vmatprep.subr.bf16.mxu0 0
    %2682 = vmatpush1.bf16.msra.mxu0 %v2635
    %2683 = vmatprep.subr.bf16.mxu0 0
    %2684 = vmatpush1.bf16.msra.mxu0 %v2636
    %2685 = vmatprep.mubr.bf16.mxu0 %v2516
    %2686 = vmatmul.mubr.bf16.gmra.mrb[0].mxu0 %v2515
    %v2687 = vpop.f32.mrb[0].mxu0
    %v2688 = vadd.f32 %v2555, %v2687
    %v2689 = vpop.f32.mrb[0].mxu0
    %v2690 = vpop.f32.mrb[0].mxu0
    %v2691 = vadd.f32 %v2555, %v2690
    %v2692 = vpop.f32.mrb[0].mxu0
    %2693 = vdwg.mxu0
    %v2694 = vmin.f32 %v2688, 20.0
    %v2695 = vmin.f32 %v2691, 20.0
    %v2696 = vmul.f32 %v2694, 1.442695
    %v2697 = vpow.pop %v2696
    %v2698 = vmul.f32 %v2695, 1.442695
    %v2699 = vpow.pop %v2698
    %v2700 = vadd.f32 %v2697, 2.0
    %v2701 = vadd.f32 %v2699, 2.0
    %v2702 = vmul.f32 %v2697, %v2700
    %v2703 = vmul.f32 %v2699, %v2701
    %v2704 = vmul.f32 %v2688, %v2702
    %v2705 = vmul.f32 %v2691, %v2703
    %v2706 = vadd.f32 %v2702, 2.0
    %v2707 = vadd.f32 %v2703, 2.0
    %v2708 = vrcp.pop %v2706
    %v2709 = vrcp.pop %v2707
    %v2710 = vmul.f32 %v2704, %v2708
    %v2711 = vmul.f32 %v2705, %v2709
    %v2712 = vpack.c.bf16 %v2711, %v2710
    %s2713 = scalar_lea.vmem [#allocation6], 256
    %v2714 = vld [vmem:[%s2713] sm:$0xff]
    %v2715 = vld [vmem:[%s2713 + $0x8] sm:$0xff]
    %v2716 = vld [vmem:[%s2713 + $0x10] sm:$0xff]
    %v2717 = vld [vmem:[%s2713 + $0x18] sm:$0xff]
    %v2718 = vld [vmem:[%s2713 + $0x20] sm:$0xff]
    %v2719 = vld [vmem:[%s2713 + $0x28] sm:$0xff]
    %v2720 = vld [vmem:[%s2713 + $0x30] sm:$0xff]
    %v2721 = vld [vmem:[%s2713 + $0x38] sm:$0xff]
    %v2722 = vld [vmem:[%s2713 + $0x40] sm:$0xff]
    %v2723 = vld [vmem:[%s2713 + $0x48] sm:$0xff]
    %v2724 = vld [vmem:[%s2713 + $0x50] sm:$0xff]
    %v2725 = vld [vmem:[%s2713 + $0x58] sm:$0xff]
    %v2726 = vld [vmem:[%s2713 + $0x60] sm:$0xff]
    %v2727 = vld [vmem:[%s2713 + $0x68] sm:$0xff]
    %v2728 = vld [vmem:[%s2713 + $0x70] sm:$0xff]
    %v2729 = vld [vmem:[%s2713 + $0x78] sm:$0xff]
    %v2746 = vunpack.c.l.b16 %v2714
    %v2747 = vunpack.c.h.b16 %v2714
    %v2748 = vunpack.c.l.b16 %v2715
    %v2749 = vunpack.c.h.b16 %v2715
    %v2750 = vunpack.c.l.b16 %v2716
    %v2751 = vunpack.c.h.b16 %v2716
    %v2752 = vunpack.c.l.b16 %v2717
    %v2753 = vunpack.c.h.b16 %v2717
    %v2754 = vunpack.c.l.b16 %v2718
    %v2755 = vunpack.c.h.b16 %v2718
    %v2756 = vunpack.c.l.b16 %v2719
    %v2757 = vunpack.c.h.b16 %v2719
    %v2758 = vunpack.c.l.b16 %v2720
    %v2759 = vunpack.c.h.b16 %v2720
    %v2760 = vunpack.c.l.b16 %v2721
    %v2761 = vunpack.c.h.b16 %v2721
    %v2762 = vunpack.c.l.b16 %v2722
    %v2763 = vunpack.c.h.b16 %v2722
    %v2764 = vunpack.c.l.b16 %v2723
    %v2765 = vunpack.c.h.b16 %v2723
    %v2766 = vunpack.c.l.b16 %v2724
    %v2767 = vunpack.c.h.b16 %v2724
    %v2768 = vunpack.c.l.b16 %v2725
    %v2769 = vunpack.c.h.b16 %v2725
    %v2770 = vunpack.c.l.b16 %v2726
    %v2771 = vunpack.c.h.b16 %v2726
    %v2772 = vunpack.c.l.b16 %v2727
    %v2773 = vunpack.c.h.b16 %v2727
    %v2774 = vunpack.c.l.b16 %v2728
    %v2775 = vunpack.c.h.b16 %v2728
    %v2776 = vunpack.c.l.b16 %v2729
    %v2777 = vunpack.c.h.b16 %v2729
    %v2778 = vpack.c.b16 %v2748, %v2746
    %v2779 = vpack.c.b16 %v2749, %v2747
    %v2780 = vpack.c.b16 %v2752, %v2750
    %v2781 = vpack.c.b16 %v2753, %v2751
    %v2782 = vpack.c.b16 %v2756, %v2754
    %v2783 = vpack.c.b16 %v2757, %v2755
    %v2784 = vpack.c.b16 %v2760, %v2758
    %v2785 = vpack.c.b16 %v2761, %v2759
    %v2786 = vpack.c.b16 %v2764, %v2762
    %v2787 = vpack.c.b16 %v2765, %v2763
    %v2788 = vpack.c.b16 %v2768, %v2766
    %v2789 = vpack.c.b16 %v2769, %v2767
    %v2790 = vpack.c.b16 %v2772, %v2770
    %v2791 = vpack.c.b16 %v2773, %v2771
    %v2792 = vpack.c.b16 %v2776, %v2774
    %v2793 = vpack.c.b16 %v2777, %v2775
    %2810 = vmatprep.subr.bf16.mxu0 %v2779
    %2811 = vmatpush1.bf16.msra.mxu0 %v2778
    %2812 = vmatprep.subr.bf16.mxu0 %v2781
    %2813 = vmatpush1.bf16.msra.mxu0 %v2780
    %2814 = vmatprep.subr.bf16.mxu0 %v2783
    %2815 = vmatpush1.bf16.msra.mxu0 %v2782
    %2816 = vmatprep.subr.bf16.mxu0 %v2785
    %2817 = vmatpush1.bf16.msra.mxu0 %v2784
    %2818 = vmatprep.subr.bf16.mxu0 %v2787
    %2819 = vmatpush1.bf16.msra.mxu0 %v2786
    %2820 = vmatprep.subr.bf16.mxu0 %v2789
    %2821 = vmatpush1.bf16.msra.mxu0 %v2788
    %2822 = vmatprep.subr.bf16.mxu0 %v2791
    %2823 = vmatpush1.bf16.msra.mxu0 %v2790
    %2824 = vmatprep.subr.bf16.mxu0 %v2793
    %2825 = vmatpush1.bf16.msra.mxu0 %v2792
    %2826 = vmatprep.subr.bf16.mxu0 0
    %2827 = vmatpush1.bf16.msra.mxu0 0
    %2828 = vmatprep.subr.bf16.mxu0 0
    %2829 = vmatpush1.bf16.msra.mxu0 0
    %2830 = vmatprep.subr.bf16.mxu0 0
    %2831 = vmatpush1.bf16.msra.mxu0 0
    %2832 = vmatprep.subr.bf16.mxu0 0
    %2833 = vmatpush1.bf16.msra.mxu0 0
    %2834 = vmatprep.subr.bf16.mxu0 0
    %2835 = vmatpush1.bf16.msra.mxu0 0
    %2836 = vmatprep.subr.bf16.mxu0 0
    %2837 = vmatpush1.bf16.msra.mxu0 0
    %2838 = vmatprep.subr.bf16.mxu0 0
    %2839 = vmatpush1.bf16.msra.mxu0 0
    %2840 = vmatprep.subr.bf16.mxu0 0
    %2841 = vmatpush1.bf16.msra.mxu0 0
    %2842 = vmatprep.mubr.bf16.mxu0 0
    %2843 = vmatmul.mubr.bf16.gmra.mrb[0].mxu0 %v2712
    %v2844 = vpop.f32.mrb[0].mxu0
    %v2845 = vadd.f32 0.0, %v2844
    %v2846 = vpop.f32.mrb[0].mxu0
    %v2847 = vadd.f32 0.0, %v2846
    %v2848 = vpop.f32.mrb[0].mxu0
    %v2849 = vadd.f32 0.0, %v2848
    %v2850 = vpop.f32.mrb[0].mxu0
    %v2851 = vadd.f32 0.0, %v2850
    %2852 = vdwg.mxu0
    %v2853 = vadd.f32 %v1571, %v2845
    %v2854 = vadd.f32 %v1573, %v2847
    %v2855 = vadd.f32 %v1575, %v2849
    %v2856 = vadd.f32 %v1577, %v2851
    %v2857 = vld [vmem:[%s0 + $0x34] sm:$0xff]
    %v2858 = vld [vmem:[%s0 + $0x3c] sm:$0xf]
    %v2859 = vld [vmem:[%s0 + $0x74] sm:$0xff]
    %v2860 = vld [vmem:[%s0 + $0x7c] sm:$0xf]
    %v2861 = vld [vmem:[#allocation2 + $0x680] sm:$0xff]
    %v2862 = vld [vmem:[#allocation2 + $0x688] sm:$0xff]
    %v2863 = vld [vmem:[#allocation2 + $0x690] sm:$0xff]
    %v2864 = vld [vmem:[#allocation2 + $0x698] sm:$0xff]
    %v2865 = vld [vmem:[#allocation2 + $0x6a0] sm:$0xff]
    %v2866 = vld [vmem:[#allocation2 + $0x6a8] sm:$0xff]
    %v2867 = vld [vmem:[#allocation2 + $0x6b0] sm:$0xff]
    %v2868 = vld [vmem:[#allocation2 + $0x6b8] sm:$0xff]
    %v2869 = vld [vmem:[#allocation2 + $0x6c0] sm:$0xff]
    %v2870 = vld [vmem:[#allocation2 + $0x6c8] sm:$0xff]
    %v2871 = vld [vmem:[#allocation2 + $0x6d0] sm:$0xff]
    %v2872 = vld [vmem:[#allocation2 + $0x6d8] sm:$0xff]
    %v2873 = vld [vmem:[#allocation2 + $0x6e0] sm:$0xff]
    %v2874 = vld [vmem:[#allocation2 + $0x6e8] sm:$0xff]
    %v2875 = vld [vmem:[#allocation2 + $0x6f0] sm:$0xff]
    %v2876 = vld [vmem:[#allocation2 + $0x6f8] sm:$0xff]
    %v2877 = vld [vmem:[#allocation2 + $0x700] sm:$0xff]
    %v2878 = vld [vmem:[#allocation2 + $0x708] sm:$0xff]
    %v2879 = vld [vmem:[#allocation2 + $0x710] sm:$0xff]
    %v2880 = vld [vmem:[#allocation2 + $0x718] sm:$0xff]
    %v2881 = vld [vmem:[#allocation2 + $0x720] sm:$0xff]
    %v2882 = vld [vmem:[#allocation2 + $0x728] sm:$0xff]
    %v2883 = vld [vmem:[#allocation2 + $0x730] sm:$0xff]
    %v2884 = vld [vmem:[#allocation2 + $0x738] sm:$0xff]
    %v2885 = vld [vmem:[#allocation2 + $0x740] sm:$0xff]
    %v2886 = vld [vmem:[#allocation2 + $0x748] sm:$0xff]
    %v2887 = vld [vmem:[#allocation2 + $0x750] sm:$0xff]
    %v2888 = vld [vmem:[#allocation2 + $0x758] sm:$0xff]
    %v2889 = vld [vmem:[#allocation2 + $0x760] sm:$0xff]
    %v2890 = vld [vmem:[#allocation2 + $0x768] sm:$0xff]
    %v2891 = vld [vmem:[#allocation2 + $0x770] sm:$0xff]
    %v2892 = vld [vmem:[#allocation2 + $0x778] sm:$0xff]
    %v2893 = vld [vmem:[#allocation2 + $0x780] sm:$0xff]
    %v2894 = vld [vmem:[#allocation2 + $0x788] sm:$0xff]
    %v2895 = vld [vmem:[#allocation2 + $0x790] sm:$0xff]
    %v2896 = vld [vmem:[#allocation2 + $0x798] sm:$0xff]
    %v2897 = vld [vmem:[#allocation2 + $0x7a0] sm:$0xff]
    %v2898 = vld [vmem:[#allocation2 + $0x7a8] sm:$0xff]
    %v2899 = vld [vmem:[#allocation2 + $0x7b0] sm:$0xff]
    %v2900 = vld [vmem:[#allocation2 + $0x7b8] sm:$0xff]
    %v2901 = vld [vmem:[#allocation2 + $0x7c0] sm:$0xff]
    %v2902 = vld [vmem:[#allocation2 + $0x7c8] sm:$0xff]
    %v2903 = vld [vmem:[#allocation2 + $0x7d0] sm:$0xff]
    %v2904 = vld [vmem:[#allocation2 + $0x7d8] sm:$0xff]
    %v2905 = vld [vmem:[#allocation2 + $0x7e0] sm:$0xff]
    %v2906 = vld [vmem:[#allocation2 + $0x7e8] sm:$0xff]
    %v2907 = vld [vmem:[#allocation2 + $0x7f0] sm:$0xff]
    %v2908 = vld [vmem:[#allocation2 + $0x7f8] sm:$0xff]
    %v2909 = vld [vmem:[%s2 + $0x6] sm:$0x3]
    %v2911 = vlaneseq
    %v2912 = vshrl.u32 %v2911, 7
    %v2913 = vsub.s32 0, %v2912
    %v2914 = vrot.slane %v2909, %v2913
    %v2915 = vlaneseq
    %v2916 = vshrl.u32 %v2915, 7
    %v2917 = vsub.s32 1, %v2916
    %v2918 = vrot.slane %v2909, %v2917
    %v2925 = vunpack.c.l.b16 %v2857
    %v2926 = vunpack.c.h.b16 %v2857
    %v2927 = vunpack.c.l.b16 %v2858
    %v2928 = vunpack.c.l.b16 %v2859
    %v2929 = vunpack.c.h.b16 %v2859
    %v2930 = vunpack.c.l.b16 %v2860
    %v2931 = vpack.c.b16 %v2928, %v2925
    %v2932 = vpack.c.b16 %v2929, %v2926
    %v2933 = vpack.c.b16 %v2930, %v2927
    %v2985 = vunpack.c.l.b16 %v2861
    %v2986 = vunpack.c.h.b16 %v2861
    %v2987 = vunpack.c.l.b16 %v2862
    %v2988 = vunpack.c.h.b16 %v2862
    %v2989 = vunpack.c.l.b16 %v2863
    %v2990 = vunpack.c.h.b16 %v2863
    %v2991 = vunpack.c.l.b16 %v2864
    %v2992 = vunpack.c.h.b16 %v2864
    %v2993 = vunpack.c.l.b16 %v2865
    %v2994 = vunpack.c.h.b16 %v2865
    %v2995 = vunpack.c.l.b16 %v2866
    %v2996 = vunpack.c.h.b16 %v2866
    %v2997 = vunpack.c.l.b16 %v2867
    %v2998 = vunpack.c.h.b16 %v2867
    %v2999 = vunpack.c.l.b16 %v2868
    %v3000 = vunpack.c.h.b16 %v2868
    %v3001 = vunpack.c.l.b16 %v2869
    %v3002 = vunpack.c.h.b16 %v2869
    %v3003 = vunpack.c.l.b16 %v2870
    %v3004 = vunpack.c.h.b16 %v2870
    %v3005 = vunpack.c.l.b16 %v2871
    %v3006 = vunpack.c.h.b16 %v2871
    %v3007 = vunpack.c.l.b16 %v2872
    %v3008 = vunpack.c.h.b16 %v2872
    %v3009 = vunpack.c.l.b16 %v2873
    %v3010 = vunpack.c.h.b16 %v2873
    %v3011 = vunpack.c.l.b16 %v2874
    %v3012 = vunpack.c.h.b16 %v2874
    %v3013 = vunpack.c.l.b16 %v2875
    %v3014 = vunpack.c.h.b16 %v2875
    %v3015 = vunpack.c.l.b16 %v2876
    %v3016 = vunpack.c.h.b16 %v2876
    %v3017 = vunpack.c.l.b16 %v2877
    %v3018 = vunpack.c.h.b16 %v2877
    %v3019 = vunpack.c.l.b16 %v2878
    %v3020 = vunpack.c.h.b16 %v2878
    %v3021 = vunpack.c.l.b16 %v2879
    %v3022 = vunpack.c.h.b16 %v2879
    %v3023 = vunpack.c.l.b16 %v2880
    %v3024 = vunpack.c.h.b16 %v2880
    %v3025 = vunpack.c.l.b16 %v2881
    %v3026 = vunpack.c.h.b16 %v2881
    %v3027 = vunpack.c.l.b16 %v2882
    %v3028 = vunpack.c.h.b16 %v2882
    %v3029 = vunpack.c.l.b16 %v2883
    %v3030 = vunpack.c.h.b16 %v2883
    %v3031 = vunpack.c.l.b16 %v2884
    %v3032 = vunpack.c.h.b16 %v2884
    %v3033 = vunpack.c.l.b16 %v2885
    %v3034 = vunpack.c.h.b16 %v2885
    %v3035 = vunpack.c.l.b16 %v2886
    %v3036 = vunpack.c.h.b16 %v2886
    %v3037 = vunpack.c.l.b16 %v2887
    %v3038 = vunpack.c.h.b16 %v2887
    %v3039 = vunpack.c.l.b16 %v2888
    %v3040 = vunpack.c.h.b16 %v2888
    %v3041 = vunpack.c.l.b16 %v2889
    %v3042 = vunpack.c.h.b16 %v2889
    %v3043 = vunpack.c.l.b16 %v2890
    %v3044 = vunpack.c.h.b16 %v2890
    %v3045 = vunpack.c.l.b16 %v2891
    %v3046 = vunpack.c.h.b16 %v2891
    %v3047 = vunpack.c.l.b16 %v2892
    %v3048 = vunpack.c.h.b16 %v2892
    %v3049 = vunpack.c.l.b16 %v2893
    %v3050 = vunpack.c.h.b16 %v2893
    %v3051 = vunpack.c.l.b16 %v2894
    %v3052 = vunpack.c.h.b16 %v2894
    %v3053 = vunpack.c.l.b16 %v2895
    %v3054 = vunpack.c.h.b16 %v2895
    %v3055 = vunpack.c.l.b16 %v2896
    %v3056 = vunpack.c.h.b16 %v2896
    %v3057 = vunpack.c.l.b16 %v2897
    %v3058 = vunpack.c.h.b16 %v2897
    %v3059 = vunpack.c.l.b16 %v2898
    %v3060 = vunpack.c.h.b16 %v2898
    %v3061 = vunpack.c.l.b16 %v2899
    %v3062 = vunpack.c.h.b16 %v2899
    %v3063 = vunpack.c.l.b16 %v2900
    %v3064 = vunpack.c.h.b16 %v2900
    %v3065 = vunpack.c.l.b16 %v2901
    %v3066 = vunpack.c.h.b16 %v2901
    %v3067 = vunpack.c.l.b16 %v2902
    %v3068 = vunpack.c.h.b16 %v2902
    %v3069 = vunpack.c.l.b16 %v2903
    %v3070 = vunpack.c.h.b16 %v2903
    %v3071 = vunpack.c.l.b16 %v2904
    %v3072 = vunpack.c.h.b16 %v2904
    %v3073 = vunpack.c.l.b16 %v2905
    %v3074 = vunpack.c.h.b16 %v2905
    %v3075 = vunpack.c.l.b16 %v2906
    %v3076 = vunpack.c.h.b16 %v2906
    %v3077 = vunpack.c.l.b16 %v2907
    %v3078 = vunpack.c.h.b16 %v2907
    %v3079 = vunpack.c.l.b16 %v2908
    %v3080 = vunpack.c.h.b16 %v2908
    %v3081 = vpack.c.b16 %v2987, %v2985
    %v3082 = vpack.c.b16 %v2988, %v2986
    %v3083 = vpack.c.b16 %v2991, %v2989
    %v3084 = vpack.c.b16 %v2992, %v2990
    %v3085 = vpack.c.b16 %v2995, %v2993
    %v3086 = vpack.c.b16 %v2996, %v2994
    %v3087 = vpack.c.b16 %v2999, %v2997
    %v3088 = vpack.c.b16 %v3000, %v2998
    %v3089 = vpack.c.b16 %v3003, %v3001
    %v3090 = vpack.c.b16 %v3004, %v3002
    %v3091 = vpack.c.b16 %v3007, %v3005
    %v3092 = vpack.c.b16 %v3008, %v3006
    %v3093 = vpack.c.b16 %v3011, %v3009
    %v3094 = vpack.c.b16 %v3012, %v3010
    %v3095 = vpack.c.b16 %v3015, %v3013
    %v3096 = vpack.c.b16 %v3016, %v3014
    %v3097 = vpack.c.b16 %v3019, %v3017
    %v3098 = vpack.c.b16 %v3020, %v3018
    %v3099 = vpack.c.b16 %v3023, %v3021
    %v3100 = vpack.c.b16 %v3024, %v3022
    %v3101 = vpack.c.b16 %v3027, %v3025
    %v3102 = vpack.c.b16 %v3028, %v3026
    %v3103 = vpack.c.b16 %v3031, %v3029
    %v3104 = vpack.c.b16 %v3032, %v3030
    %v3105 = vpack.c.b16 %v3035, %v3033
    %v3106 = vpack.c.b16 %v3036, %v3034
    %v3107 = vpack.c.b16 %v3039, %v3037
    %v3108 = vpack.c.b16 %v3040, %v3038
    %v3109 = vpack.c.b16 %v3043, %v3041
    %v3110 = vpack.c.b16 %v3044, %v3042
    %v3111 = vpack.c.b16 %v3047, %v3045
    %v3112 = vpack.c.b16 %v3048, %v3046
    %v3113 = vpack.c.b16 %v3051, %v3049
    %v3114 = vpack.c.b16 %v3052, %v3050
    %v3115 = vpack.c.b16 %v3055, %v3053
    %v3116 = vpack.c.b16 %v3056, %v3054
    %v3117 = vpack.c.b16 %v3059, %v3057
    %v3118 = vpack.c.b16 %v3060, %v3058
    %v3119 = vpack.c.b16 %v3063, %v3061
    %v3120 = vpack.c.b16 %v3064, %v3062
    %v3121 = vpack.c.b16 %v3067, %v3065
    %v3122 = vpack.c.b16 %v3068, %v3066
    %v3123 = vpack.c.b16 %v3071, %v3069
    %v3124 = vpack.c.b16 %v3072, %v3070
    %v3125 = vpack.c.b16 %v3075, %v3073
    %v3126 = vpack.c.b16 %v3076, %v3074
    %v3127 = vpack.c.b16 %v3079, %v3077
    %v3128 = vpack.c.b16 %v3080, %v3078
    %3177 = vmatprep.subr.bf16.mxu0 %v3082
    %3178 = vmatpush1.bf16.msra.mxu0 %v3081
    %3179 = vmatprep.subr.bf16.mxu0 %v3084
    %3180 = vmatpush1.bf16.msra.mxu0 %v3083
    %3181 = vmatprep.subr.bf16.mxu0 %v3086
    %3182 = vmatpush1.bf16.msra.mxu0 %v3085
    %3183 = vmatprep.subr.bf16.mxu0 %v3088
    %3184 = vmatpush1.bf16.msra.mxu0 %v3087
    %3185 = vmatprep.subr.bf16.mxu0 %v3090
    %3186 = vmatpush1.bf16.msra.mxu0 %v3089
    %3187 = vmatprep.subr.bf16.mxu0 %v3092
    %3188 = vmatpush1.bf16.msra.mxu0 %v3091
    %3189 = vmatprep.subr.bf16.mxu0 %v3094
    %3190 = vmatpush1.bf16.msra.mxu0 %v3093
    %3191 = vmatprep.subr.bf16.mxu0 %v3096
    %3192 = vmatpush1.bf16.msra.mxu0 %v3095
    %3193 = vmatprep.subr.bf16.mxu0 %v3098
    %3194 = vmatpush1.bf16.msra.mxu0 %v3097
    %3195 = vmatprep.subr.bf16.mxu0 %v3100
    %3196 = vmatpush1.bf16.msra.mxu0 %v3099
    %3197 = vmatprep.subr.bf16.mxu0 %v3102
    %3198 = vmatpush1.bf16.msra.mxu0 %v3101
    %3199 = vmatprep.subr.bf16.mxu0 %v3104
    %3200 = vmatpush1.bf16.msra.mxu0 %v3103
    %3201 = vmatprep.subr.bf16.mxu0 %v3106
    %3202 = vmatpush1.bf16.msra.mxu0 %v3105
    %3203 = vmatprep.subr.bf16.mxu0 %v3108
    %3204 = vmatpush1.bf16.msra.mxu0 %v3107
    %3205 = vmatprep.subr.bf16.mxu0 %v3110
    %3206 = vmatpush1.bf16.msra.mxu0 %v3109
    %3207 = vmatprep.subr.bf16.mxu0 %v3112
    %3208 = vmatpush1.bf16.msra.mxu0 %v3111
    %3209 = vmatprep.mubr.bf16.mxu0 %v2932
    %3210 = vmatmul.mubr.bf16.gmra.mrb[0].mxu0 %v2931
    %v3211 = vpop.f32.mrb[0].mxu0
    %v3212 = vadd.f32 %v2914, %v3211
    %v3213 = vpop.f32.mrb[0].mxu0
    %v3214 = vadd.f32 %v2918, %v3213
    %v3215 = vpop.f32.mrb[0].mxu0
    %v3216 = vadd.f32 %v2914, %v3215
    %v3217 = vpop.f32.mrb[0].mxu0
    %v3218 = vadd.f32 %v2918, %v3217
    %3219 = vdwg.mxu0
    %3220 = vmatprep.subr.bf16.mxu0 %v3114
    %3221 = vmatpush1.bf16.msra.mxu0 %v3113
    %3222 = vmatprep.subr.bf16.mxu0 %v3116
    %3223 = vmatpush1.bf16.msra.mxu0 %v3115
    %3224 = vmatprep.subr.bf16.mxu0 %v3118
    %3225 = vmatpush1.bf16.msra.mxu0 %v3117
    %3226 = vmatprep.subr.bf16.mxu0 %v3120
    %3227 = vmatpush1.bf16.msra.mxu0 %v3119
    %3228 = vmatprep.subr.bf16.mxu0 %v3122
    %3229 = vmatpush1.bf16.msra.mxu0 %v3121
    %3230 = vmatprep.subr.bf16.mxu0 %v3124
    %3231 = vmatpush1.bf16.msra.mxu0 %v3123
    %3232 = vmatprep.subr.bf16.mxu0 %v3126
    %3233 = vmatpush1.bf16.msra.mxu0 %v3125
    %3234 = vmatprep.subr.bf16.mxu0 %v3128
    %3235 = vmatpush1.bf16.msra.mxu0 %v3127
    %3236 = vmatprep.subr.bf16.mxu0 0
    %3237 = vmatpush1.bf16.msra.mxu0 0
    %3238 = vmatprep.subr.bf16.mxu0 0
    %3239 = vmatpush1.bf16.msra.mxu0 0
    %3240 = vmatprep.subr.bf16.mxu0 0
    %3241 = vmatpush1.bf16.msra.mxu0 0
    %3242 = vmatprep.subr.bf16.mxu0 0
    %3243 = vmatpush1.bf16.msra.mxu0 0
    %3244 = vmatprep.subr.bf16.mxu0 0
    %3245 = vmatpush1.bf16.msra.mxu0 0
    %3246 = vmatprep.subr.bf16.mxu0 0
    %3247 = vmatpush1.bf16.msra.mxu0 0
    %3248 = vmatprep.subr.bf16.mxu0 0
    %3249 = vmatpush1.bf16.msra.mxu0 0
    %3250 = vmatprep.subr.bf16.mxu0 0
    %3251 = vmatpush1.bf16.msra.mxu0 0
    %3252 = vmatprep.mubr.bf16.mxu0 0
    %3253 = vmatmul.mubr.bf16.gmra.mrb[0].mxu0 %v2933
    %v3254 = vpop.f32.mrb[0].mxu0
    %v3255 = vadd.f32 %v3212, %v3254
    %v3256 = vpop.f32.mrb[0].mxu0
    %v3257 = vadd.f32 %v3214, %v3256
    %v3258 = vpop.f32.mrb[0].mxu0
    %v3259 = vadd.f32 %v3216, %v3258
    %v3260 = vpop.f32.mrb[0].mxu0
    %v3261 = vadd.f32 %v3218, %v3260
    %3262 = vdwg.mxu0
    %v3263 = vmin.f32 %v3255, 20.0
    %v3264 = vmin.f32 %v3257, 20.0
    %v3265 = vmin.f32 %v3259, 20.0
    %v3266 = vmin.f32 %v3261, 20.0
    %v3267 = vmul.f32 %v3263, 1.442695
    %v3268 = vpow.pop %v3267
    %v3269 = vmul.f32 %v3264, 1.442695
    %v3270 = vpow.pop %v3269
    %v3271 = vmul.f32 %v3265, 1.442695
    %v3272 = vpow.pop %v3271
    %v3273 = vmul.f32 %v3266, 1.442695
    %v3274 = vpow.pop %v3273
    %v3275 = vadd.f32 %v3268, 2.0
    %v3276 = vadd.f32 %v3270, 2.0
    %v3277 = vadd.f32 %v3272, 2.0
    %v3278 = vadd.f32 %v3274, 2.0
    %v3279 = vmul.f32 %v3268, %v3275
    %v3280 = vmul.f32 %v3270, %v3276
    %v3281 = vmul.f32 %v3272, %v3277
    %v3282 = vmul.f32 %v3274, %v3278
    %v3283 = vmul.f32 %v3255, %v3279
    %v3284 = vmul.f32 %v3257, %v3280
    %v3285 = vmul.f32 %v3259, %v3281
    %v3286 = vmul.f32 %v3261, %v3282
    %v3287 = vadd.f32 %v3279, 2.0
    %v3288 = vadd.f32 %v3280, 2.0
    %v3289 = vadd.f32 %v3281, 2.0
    %v3290 = vadd.f32 %v3282, 2.0
    %v3291 = vrcp.pop %v3287
    %v3292 = vrcp.pop %v3288
    %v3293 = vrcp.pop %v3289
    %v3294 = vrcp.pop %v3290
    %v3295 = vmul.f32 %v3283, %v3291
    %v3296 = vmul.f32 %v3284, %v3292
    %v3297 = vmul.f32 %v3285, %v3293
    %v3298 = vmul.f32 %v3286, %v3294
    %v3299 = vpack.c.bf16 %v3297, %v3295
    %v3300 = vpack.c.bf16 %v3298, %v3296
    %s3301 = scalar_lea.vmem [#allocation4], 384
    %v3302 = vld [vmem:[%s3301] sm:$0xf]
    %v3303 = vld [vmem:[%s3301 + $0x4] sm:$0xf]
    %v3304 = vld [vmem:[%s3301 + $0x8] sm:$0xf]
    %v3305 = vld [vmem:[%s3301 + $0xc] sm:$0xf]
    %v3306 = vld [vmem:[%s3301 + $0x10] sm:$0xf]
    %v3307 = vld [vmem:[%s3301 + $0x14] sm:$0xf]
    %v3308 = vld [vmem:[%s3301 + $0x18] sm:$0xf]
    %v3309 = vld [vmem:[%s3301 + $0x1c] sm:$0xf]
    %v3310 = vld [vmem:[%s3301 + $0x20] sm:$0xf]
    %v3311 = vld [vmem:[%s3301 + $0x24] sm:$0xf]
    %v3312 = vld [vmem:[%s3301 + $0x28] sm:$0xf]
    %v3313 = vld [vmem:[%s3301 + $0x2c] sm:$0xf]
    %v3314 = vld [vmem:[%s3301 + $0x30] sm:$0xf]
    %v3315 = vld [vmem:[%s3301 + $0x34] sm:$0xf]
    %v3316 = vld [vmem:[%s3301 + $0x38] sm:$0xf]
    %v3317 = vld [vmem:[%s3301 + $0x3c] sm:$0xf]
    %v3318 = vld [vmem:[%s3301 + $0x40] sm:$0xf]
    %v3319 = vld [vmem:[%s3301 + $0x44] sm:$0xf]
    %v3320 = vld [vmem:[%s3301 + $0x48] sm:$0xf]
    %v3321 = vld [vmem:[%s3301 + $0x4c] sm:$0xf]
    %v3322 = vld [vmem:[%s3301 + $0x50] sm:$0xf]
    %v3323 = vld [vmem:[%s3301 + $0x54] sm:$0xf]
    %v3324 = vld [vmem:[%s3301 + $0x58] sm:$0xf]
    %v3325 = vld [vmem:[%s3301 + $0x5c] sm:$0xf]
    %v3326 = vld [vmem:[%s3301 + $0x60] sm:$0xf]
    %v3327 = vld [vmem:[%s3301 + $0x64] sm:$0xf]
    %v3328 = vld [vmem:[%s3301 + $0x68] sm:$0xf]
    %v3329 = vld [vmem:[%s3301 + $0x6c] sm:$0xf]
    %v3330 = vld [vmem:[%s3301 + $0x70] sm:$0xf]
    %v3331 = vld [vmem:[%s3301 + $0x74] sm:$0xf]
    %v3332 = vld [vmem:[%s3301 + $0x78] sm:$0xf]
    %v3333 = vld [vmem:[%s3301 + $0x7c] sm:$0xf]
    %v3334 = vld [vmem:[%s4 + $0x3] sm:$0x1]
    %v3336 = vlaneseq
    %v3337 = vshrl.u32 %v3336, 7
    %v3338 = vsub.s32 0, %v3337
    %v3339 = vrot.slane %v3334, %v3338
    %v3373 = vunpack.c.l.b16 %v3302
    %v3374 = vunpack.c.l.b16 %v3303
    %v3375 = vunpack.c.l.b16 %v3304
    %v3376 = vunpack.c.l.b16 %v3305
    %v3377 = vunpack.c.l.b16 %v3306
    %v3378 = vunpack.c.l.b16 %v3307
    %v3379 = vunpack.c.l.b16 %v3308
    %v3380 = vunpack.c.l.b16 %v3309
    %v3381 = vunpack.c.l.b16 %v3310
    %v3382 = vunpack.c.l.b16 %v3311
    %v3383 = vunpack.c.l.b16 %v3312
    %v3384 = vunpack.c.l.b16 %v3313
    %v3385 = vunpack.c.l.b16 %v3314
    %v3386 = vunpack.c.l.b16 %v3315
    %v3387 = vunpack.c.l.b16 %v3316
    %v3388 = vunpack.c.l.b16 %v3317
    %v3389 = vunpack.c.l.b16 %v3318
    %v3390 = vunpack.c.l.b16 %v3319
    %v3391 = vunpack.c.l.b16 %v3320
    %v3392 = vunpack.c.l.b16 %v3321
    %v3393 = vunpack.c.l.b16 %v3322
    %v3394 = vunpack.c.l.b16 %v3323
    %v3395 = vunpack.c.l.b16 %v3324
    %v3396 = vunpack.c.l.b16 %v3325
    %v3397 = vunpack.c.l.b16 %v3326
    %v3398 = vunpack.c.l.b16 %v3327
    %v3399 = vunpack.c.l.b16 %v3328
    %v3400 = vunpack.c.l.b16 %v3329
    %v3401 = vunpack.c.l.b16 %v3330
    %v3402 = vunpack.c.l.b16 %v3331
    %v3403 = vunpack.c.l.b16 %v3332
    %v3404 = vunpack.c.l.b16 %v3333
    %v3405 = vpack.c.b16 %v3374, %v3373
    %v3406 = vpack.c.b16 %v3376, %v3375
    %v3407 = vpack.c.b16 %v3378, %v3377
    %v3408 = vpack.c.b16 %v3380, %v3379
    %v3409 = vpack.c.b16 %v3382, %v3381
    %v3410 = vpack.c.b16 %v3384, %v3383
    %v3411 = vpack.c.b16 %v3386, %v3385
    %v3412 = vpack.c.b16 %v3388, %v3387
    %v3413 = vpack.c.b16 %v3390, %v3389
    %v3414 = vpack.c.b16 %v3392, %v3391
    %v3415 = vpack.c.b16 %v3394, %v3393
    %v3416 = vpack.c.b16 %v3396, %v3395
    %v3417 = vpack.c.b16 %v3398, %v3397
    %v3418 = vpack.c.b16 %v3400, %v3399
    %v3419 = vpack.c.b16 %v3402, %v3401
    %v3420 = vpack.c.b16 %v3404, %v3403
    %3437 = vmatprep.subr.bf16.mxu0 0
    %3438 = vmatpush1.bf16.msra.mxu0 %v3405
    %3439 = vmatprep.subr.bf16.mxu0 0
    %3440 = vmatpush1.bf16.msra.mxu0 %v3406
    %3441 = vmatprep.subr.bf16.mxu0 0
    %3442 = vmatpush1.bf16.msra.mxu0 %v3407
    %3443 = vmatprep.subr.bf16.mxu0 0
    %3444 = vmatpush1.bf16.msra.mxu0 %v3408
    %3445 = vmatprep.subr.bf16.mxu0 0
    %3446 = vmatpush1.bf16.msra.mxu0 %v3409
    %3447 = vmatprep.subr.bf16.mxu0 0
    %3448 = vmatpush1.bf16.msra.mxu0 %v3410
    %3449 = vmatprep.subr.bf16.mxu0 0
    %3450 = vmatpush1.bf16.msra.mxu0 %v3411
    %3451 = vmatprep.subr.bf16.mxu0 0
    %3452 = vmatpush1.bf16.msra.mxu0 %v3412
    %3453 = vmatprep.subr.bf16.mxu0 0
    %3454 = vmatpush1.bf16.msra.mxu0 %v3413
    %3455 = vmatprep.subr.bf16.mxu0 0
    %3456 = vmatpush1.bf16.msra.mxu0 %v3414
    %3457 = vmatprep.subr.bf16.mxu0 0
    %3458 = vmatpush1.bf16.msra.mxu0 %v3415
    %3459 = vmatprep.subr.bf16.mxu0 0
    %3460 = vmatpush1.bf16.msra.mxu0 %v3416
    %3461 = vmatprep.subr.bf16.mxu0 0
    %3462 = vmatpush1.bf16.msra.mxu0 %v3417
    %3463 = vmatprep.subr.bf16.mxu0 0
    %3464 = vmatpush1.bf16.msra.mxu0 %v3418
    %3465 = vmatprep.subr.bf16.mxu0 0
    %3466 = vmatpush1.bf16.msra.mxu0 %v3419
    %3467 = vmatprep.subr.bf16.mxu0 0
    %3468 = vmatpush1.bf16.msra.mxu0 %v3420
    %3469 = vmatprep.mubr.bf16.mxu0 %v3300
    %3470 = vmatmul.mubr.bf16.gmra.mrb[0].mxu0 %v3299
    %v3471 = vpop.f32.mrb[0].mxu0
    %v3472 = vadd.f32 %v3339, %v3471
    %v3473 = vpop.f32.mrb[0].mxu0
    %v3474 = vpop.f32.mrb[0].mxu0
    %v3475 = vadd.f32 %v3339, %v3474
    %v3476 = vpop.f32.mrb[0].mxu0
    %3477 = vdwg.mxu0
    %v3478 = vmin.f32 %v3472, 20.0
    %v3479 = vmin.f32 %v3475, 20.0
    %v3480 = vmul.f32 %v3478, 1.442695
    %v3481 = vpow.pop %v3480
    %v3482 = vmul.f32 %v3479, 1.442695
    %v3483 = vpow.pop %v3482
    %v3484 = vadd.f32 %v3481, 2.0
    %v3485 = vadd.f32 %v3483, 2.0
    %v3486 = vmul.f32 %v3481, %v3484
    %v3487 = vmul.f32 %v3483, %v3485
    %v3488 = vmul.f32 %v3472, %v3486
    %v3489 = vmul.f32 %v3475, %v3487
    %v3490 = vadd.f32 %v3486, 2.0
    %v3491 = vadd.f32 %v3487, 2.0
    %v3492 = vrcp.pop %v3490
    %v3493 = vrcp.pop %v3491
    %v3494 = vmul.f32 %v3488, %v3492
    %v3495 = vmul.f32 %v3489, %v3493
    %v3496 = vpack.c.bf16 %v3495, %v3494
    %s3497 = scalar_lea.vmem [#allocation6], 384
    %v3498 = vld [vmem:[%s3497] sm:$0xff]
    %v3499 = vld [vmem:[%s3497 + $0x8] sm:$0xff]
    %v3500 = vld [vmem:[%s3497 + $0x10] sm:$0xff]
    %v3501 = vld [vmem:[%s3497 + $0x18] sm:$0xff]
    %v3502 = vld [vmem:[%s3497 + $0x20] sm:$0xff]
    %v3503 = vld [vmem:[%s3497 + $0x28] sm:$0xff]
    %v3504 = vld [vmem:[%s3497 + $0x30] sm:$0xff]
    %v3505 = vld [vmem:[%s3497 + $0x38] sm:$0xff]
    %v3506 = vld [vmem:[%s3497 + $0x40] sm:$0xff]
    %v3507 = vld [vmem:[%s3497 + $0x48] sm:$0xff]
    %v3508 = vld [vmem:[%s3497 + $0x50] sm:$0xff]
    %v3509 = vld [vmem:[%s3497 + $0x58] sm:$0xff]
    %v3510 = vld [vmem:[%s3497 + $0x60] sm:$0xff]
    %v3511 = vld [vmem:[%s3497 + $0x68] sm:$0xff]
    %v3512 = vld [vmem:[%s3497 + $0x70] sm:$0xff]
    %v3513 = vld [vmem:[%s3497 + $0x78] sm:$0xff]
    %v3530 = vunpack.c.l.b16 %v3498
    %v3531 = vunpack.c.h.b16 %v3498
    %v3532 = vunpack.c.l.b16 %v3499
    %v3533 = vunpack.c.h.b16 %v3499
    %v3534 = vunpack.c.l.b16 %v3500
    %v3535 = vunpack.c.h.b16 %v3500
    %v3536 = vunpack.c.l.b16 %v3501
    %v3537 = vunpack.c.h.b16 %v3501
    %v3538 = vunpack.c.l.b16 %v3502
    %v3539 = vunpack.c.h.b16 %v3502
    %v3540 = vunpack.c.l.b16 %v3503
    %v3541 = vunpack.c.h.b16 %v3503
    %v3542 = vunpack.c.l.b16 %v3504
    %v3543 = vunpack.c.h.b16 %v3504
    %v3544 = vunpack.c.l.b16 %v3505
    %v3545 = vunpack.c.h.b16 %v3505
    %v3546 = vunpack.c.l.b16 %v3506
    %v3547 = vunpack.c.h.b16 %v3506
    %v3548 = vunpack.c.l.b16 %v3507
    %v3549 = vunpack.c.h.b16 %v3507
    %v3550 = vunpack.c.l.b16 %v3508
    %v3551 = vunpack.c.h.b16 %v3508
    %v3552 = vunpack.c.l.b16 %v3509
    %v3553 = vunpack.c.h.b16 %v3509
    %v3554 = vunpack.c.l.b16 %v3510
    %v3555 = vunpack.c.h.b16 %v3510
    %v3556 = vunpack.c.l.b16 %v3511
    %v3557 = vunpack.c.h.b16 %v3511
    %v3558 = vunpack.c.l.b16 %v3512
    %v3559 = vunpack.c.h.b16 %v3512
    %v3560 = vunpack.c.l.b16 %v3513
    %v3561 = vunpack.c.h.b16 %v3513
    %v3562 = vpack.c.b16 %v3532, %v3530
    %v3563 = vpack.c.b16 %v3533, %v3531
    %v3564 = vpack.c.b16 %v3536, %v3534
    %v3565 = vpack.c.b16 %v3537, %v3535
    %v3566 = vpack.c.b16 %v3540, %v3538
    %v3567 = vpack.c.b16 %v3541, %v3539
    %v3568 = vpack.c.b16 %v3544, %v3542
    %v3569 = vpack.c.b16 %v3545, %v3543
    %v3570 = vpack.c.b16 %v3548, %v3546
    %v3571 = vpack.c.b16 %v3549, %v3547
    %v3572 = vpack.c.b16 %v3552, %v3550
    %v3573 = vpack.c.b16 %v3553, %v3551
    %v3574 = vpack.c.b16 %v3556, %v3554
    %v3575 = vpack.c.b16 %v3557, %v3555
    %v3576 = vpack.c.b16 %v3560, %v3558
    %v3577 = vpack.c.b16 %v3561, %v3559
    %3594 = vmatprep.subr.bf16.mxu0 %v3563
    %3595 = vmatpush1.bf16.msra.mxu0 %v3562
    %3596 = vmatprep.subr.bf16.mxu0 %v3565
    %3597 = vmatpush1.bf16.msra.mxu0 %v3564
    %3598 = vmatprep.subr.bf16.mxu0 %v3567
    %3599 = vmatpush1.bf16.msra.mxu0 %v3566
    %3600 = vmatprep.subr.bf16.mxu0 %v3569
    %3601 = vmatpush1.bf16.msra.mxu0 %v3568
    %3602 = vmatprep.subr.bf16.mxu0 %v3571
    %3603 = vmatpush1.bf16.msra.mxu0 %v3570
    %3604 = vmatprep.subr.bf16.mxu0 %v3573
    %3605 = vmatpush1.bf16.msra.mxu0 %v3572
    %3606 = vmatprep.subr.bf16.mxu0 %v3575
    %3607 = vmatpush1.bf16.msra.mxu0 %v3574
    %3608 = vmatprep.subr.bf16.mxu0 %v3577
    %3609 = vmatpush1.bf16.msra.mxu0 %v3576
    %3610 = vmatprep.subr.bf16.mxu0 0
    %3611 = vmatpush1.bf16.msra.mxu0 0
    %3612 = vmatprep.subr.bf16.mxu0 0
    %3613 = vmatpush1.bf16.msra.mxu0 0
    %3614 = vmatprep.subr.bf16.mxu0 0
    %3615 = vmatpush1.bf16.msra.mxu0 0
    %3616 = vmatprep.subr.bf16.mxu0 0
    %3617 = vmatpush1.bf16.msra.mxu0 0
    %3618 = vmatprep.subr.bf16.mxu0 0
    %3619 = vmatpush1.bf16.msra.mxu0 0
    %3620 = vmatprep.subr.bf16.mxu0 0
    %3621 = vmatpush1.bf16.msra.mxu0 0
    %3622 = vmatprep.subr.bf16.mxu0 0
    %3623 = vmatpush1.bf16.msra.mxu0 0
    %3624 = vmatprep.subr.bf16.mxu0 0
    %3625 = vmatpush1.bf16.msra.mxu0 0
    %3626 = vmatprep.mubr.bf16.mxu0 0
    %3627 = vmatmul.mubr.bf16.gmra.mrb[0].mxu0 %v3496
    %v3628 = vpop.f32.mrb[0].mxu0
    %v3629 = vadd.f32 0.0, %v3628
    %v3630 = vpop.f32.mrb[0].mxu0
    %v3631 = vadd.f32 0.0, %v3630
    %v3632 = vpop.f32.mrb[0].mxu0
    %v3633 = vadd.f32 0.0, %v3632
    %v3634 = vpop.f32.mrb[0].mxu0
    %v3635 = vadd.f32 0.0, %v3634
    %3636 = vdwg.mxu0
    %v3637 = vadd.f32 %v2853, %v3629
    %v3638 = vadd.f32 %v2854, %v3631
    %v3639 = vadd.f32 %v2855, %v3633
    %v3640 = vadd.f32 %v2856, %v3635
    %v3641 = vld [vmem:[%s6] sm:$0x3]
    %v3643 = vlaneseq
    %v3644 = vshrl.u32 %v3643, 7
    %v3645 = vsub.s32 0, %v3644
    %v3646 = vrot.slane %v3641, %v3645
    %v3647 = vlaneseq
    %v3648 = vshrl.u32 %v3647, 7
    %v3649 = vsub.s32 1, %v3648
    %v3650 = vrot.slane %v3641, %v3649
    %v3653 = vadd.f32 %v3637, %v3646
    %v3654 = vadd.f32 %v3638, %v3650
    %v3655 = vadd.f32 %v3639, %v3646
    %v3656 = vadd.f32 %v3640, %v3650
    %v3657 = vmin.f32 %v3653, 20.0
    %v3658 = vmin.f32 %v3654, 20.0
    %v3659 = vmin.f32 %v3655, 20.0
    %v3660 = vmin.f32 %v3656, 20.0
    %v3661 = vmul.f32 %v3657, 1.442695
    %v3662 = vpow.pop %v3661
    %v3663 = vmul.f32 %v3658, 1.442695
    %v3664 = vpow.pop %v3663
    %v3665 = vmul.f32 %v3659, 1.442695
    %v3666 = vpow.pop %v3665
    %v3667 = vmul.f32 %v3660, 1.442695
    %v3668 = vpow.pop %v3667
    %v3669 = vadd.f32 %v3662, 2.0
    %v3670 = vadd.f32 %v3664, 2.0
    %v3671 = vadd.f32 %v3666, 2.0
    %v3672 = vadd.f32 %v3668, 2.0
    %v3673 = vmul.f32 %v3662, %v3669
    %v3674 = vmul.f32 %v3664, %v3670
    %v3675 = vmul.f32 %v3666, %v3671
    %v3676 = vmul.f32 %v3668, %v3672
    %v3677 = vmul.f32 %v3653, %v3673
    %v3678 = vmul.f32 %v3654, %v3674
    %v3679 = vmul.f32 %v3655, %v3675
    %v3680 = vmul.f32 %v3656, %v3676
    %v3681 = vadd.f32 %v3673, 2.0
    %v3682 = vadd.f32 %v3674, 2.0
    %v3683 = vadd.f32 %v3675, 2.0
    %v3684 = vadd.f32 %v3676, 2.0
    %v3685 = vrcp.pop %v3681
    %v3686 = vrcp.pop %v3682
    %v3687 = vrcp.pop %v3683
    %v3688 = vrcp.pop %v3684
    %v3689 = vmul.f32 %v3677, %v3685
    %v3690 = vmul.f32 %v3678, %v3686
    %v3691 = vmul.f32 %v3679, %v3687
    %v3692 = vmul.f32 %v3680, %v3688
    %3693 = vst [vmem:[%s7] sm:$0xff] %v3689
    %3694 = vst [vmem:[%s7 + $0x8] sm:$0xff] %v3690
    %3695 = vst [vmem:[%s7 + $0x10] sm:$0xff] %v3691
    %3696 = vst [vmem:[%s7 + $0x18] sm:$0xff] %v3692
    // Predicated region
    $region42: #{finger_encoder_forward.1} parent=1 // pred_check
      _
    $region43: #{finger_encoder_forward.1} parent=1 // pred_check_branch
      %3698 = sbr.rel (0) target = $region45
    $region44: #{finger_encoder_forward.1} parent=1 // pred_region
      _
    $region45: #{finger_encoder_forward.1} parent=1 // pred_fallthru
      _
    // Predicated region
    $region46: #{finger_encoder_forward.1} parent=1 // pred_check
      _
    $region47: #{finger_encoder_forward.1} parent=1 // pred_check_branch
      %3700 = sbr.rel (0) target = $region49
    $region48: #{finger_encoder_forward.1} parent=1 // pred_region
      _
    $region49: #{finger_encoder_forward.1} parent=1 // pred_fallthru
      _
    %3701 = vsyncpa [#allocation3], 1
    %3702 = vsyncpa [#allocation5], 1

</llo_original>
